<compile_context>
chip_gen: v7x
topology: tpu7x:2x2x1
jax: 0.10.0
libtpu: 0.0.40
codegen_flags: <defaults>
</compile_context>

<pallas_src>
import functools

import jax
import jax.numpy as jnp
from jax.experimental import pallas as pl
from jax.experimental.pallas import tpu as pltpu


def _round_up(x, m):
    return ((x + m - 1) // m) * m


# ----------------------------------------------------------------------------
# Fused GCN layer kernel:  out = relu?( adj @ (x @ W) + b )
#   adj: (tm, tk) bf16   x: (tk, Fin) bf16   W: (Fin, Nout) bf16   b: (1, Nout) f32
# ----------------------------------------------------------------------------
def _gcn_layer_kernel(adj_ref, x_ref, w_ref, b_ref, o_ref, acc_ref, *, relu):
    @pl.when(pl.program_id(1) == 0)
    def _():
        acc_ref[...] = jnp.zeros_like(acc_ref)

    # Prologue: k-tile of support = x @ W computed on the fly.  Fin is tiny
    # (<=96), so recomputing it per M-block is far cheaper than a separate
    # kernel + an HBM pass of the (nodes, Nout) intermediate.
    support = jnp.dot(x_ref[...], w_ref[...], preferred_element_type=jnp.float32)
    acc_ref[...] += jnp.dot(
        adj_ref[...], support.astype(adj_ref.dtype),
        preferred_element_type=jnp.float32,
    )

    @pl.when(pl.program_id(1) == pl.num_programs(1) - 1)
    def _():
        r = acc_ref[...] + b_ref[...]
        if relu:
            r = jnp.maximum(r, 0.0)
        o_ref[...] = r.astype(o_ref.dtype)


def gcn_layer(adj, x, w, b, *, relu, out_dtype=jnp.float32, tm=512, tk=1024):
    """out = relu?(adj @ (x @ w) + b).

    adj: (M, K) bf16, x: (K, Fin) bf16, w: (Fin, Nout) bf16, b: (Nout,) f32.
    Only the node dims M/K are tiled; Fin/Nout stay full-extent.
    """
    M, K = adj.shape
    K2, Fin = x.shape
    assert K == K2
    Fin2, Nout = w.shape
    assert Fin == Fin2

    if M <= tm:
        tm_eff, Mp = M, M
    else:
        tm_eff, Mp = tm, _round_up(M, tm)
    if K <= tk:
        tk_eff, Kp = K, K
    else:
        tk_eff, Kp = tk, _round_up(K, tk)

    adj_p = adj if (Mp == M and Kp == K) else jnp.pad(
        adj, ((0, Mp - M), (0, Kp - K)))
    x_p = x if Kp == K else jnp.pad(x, ((0, Kp - K), (0, 0)))
    b2d = b.astype(jnp.float32).reshape(1, Nout)

    kernel = functools.partial(_gcn_layer_kernel, relu=relu)
    out = pl.pallas_call(
        kernel,
        out_shape=jax.ShapeDtypeStruct((Mp, Nout), out_dtype),
        grid_spec=pltpu.PrefetchScalarGridSpec(
            num_scalar_prefetch=0,
            grid=(Mp // tm_eff, Kp // tk_eff),
            in_specs=[
                pl.BlockSpec((tm_eff, tk_eff), lambda i, k: (i, k)),
                pl.BlockSpec((tk_eff, Fin), lambda i, k: (k, 0)),
                pl.BlockSpec((Fin, Nout), lambda i, k: (0, 0)),
                pl.BlockSpec((1, Nout), lambda i, k: (0, 0)),
            ],
            out_specs=pl.BlockSpec((tm_eff, Nout), lambda i, k: (i, 0)),
            scratch_shapes=[pltpu.VMEM((tm_eff, Nout), jnp.float32)],
        ),
        compiler_params=pltpu.CompilerParams(
            dimension_semantics=("parallel", "arbitrary"),
        ),
    )(adj_p, x_p, w, b2d)
    return out if Mp == M else out[:M]


# ----------------------------------------------------------------------------
# Fused 4-layer MLP head kernel (single launch on the stacked batch).
# ----------------------------------------------------------------------------
def _mlp_head_kernel(x_ref, w1_ref, b1_ref, w2_ref, b2_ref, w3_ref, b3_ref,
                     w4t_ref, b4_ref, o_ref):
    h = jnp.dot(x_ref[...], w1_ref[...],
                preferred_element_type=jnp.float32) + b1_ref[...]
    h = jnp.maximum(h, 0.0)
    h = jnp.dot(h, w2_ref[...],
                preferred_element_type=jnp.float32) + b2_ref[...]
    h = jnp.maximum(h, 0.0)
    h = jnp.dot(h, w3_ref[...],
                preferred_element_type=jnp.float32) + b3_ref[...]
    h = jnp.maximum(h, 0.0)
    # fc4 has a single output feature -> do it as a VPU row-wise dot.
    out = jnp.sum(h * w4t_ref[...], axis=-1, keepdims=True) + b4_ref[...]
    o_ref[...] = out.astype(o_ref.dtype)


def mlp_head(x, params):
    """x: (M, 101) f32 -> (M, 1) f32 via the shared fc1..fc4 head."""
    M = x.shape[0]
    x = x.astype(jnp.float32)
    w1, b1 = params["fc1_w"], params["fc1_b"].reshape(1, -1)
    w2, b2 = params["fc2_w"], params["fc2_b"].reshape(1, -1)
    w3, b3 = params["fc3_w"], params["fc3_b"].reshape(1, -1)
    w4t = params["fc4_w"].reshape(1, -1)      # (1, 8)
    b4 = params["fc4_b"].reshape(1, 1)

    def full_spec(a):
        nd = a.ndim
        return pl.BlockSpec(a.shape, lambda i, _nd=nd: (0,) * _nd)

    args = (x, w1, b1, w2, b2, w3, b3, w4t, b4)
    return pl.pallas_call(
        _mlp_head_kernel,
        out_shape=jax.ShapeDtypeStruct((M, 1), jnp.float32),
        grid_spec=pltpu.PrefetchScalarGridSpec(
            num_scalar_prefetch=0,
            grid=(1,),
            in_specs=[full_spec(a) for a in args],
            out_specs=pl.BlockSpec((M, 1), lambda i: (0, 0)),
        ),
        compiler_params=pltpu.CompilerParams(
            dimension_semantics=("arbitrary",),
        ),
    )(*args)


# ----------------------------------------------------------------------------
# Model glue (plain JAX only for tiny reshapes / concats / segment sums).
# ----------------------------------------------------------------------------
ACE_ANOTHER = jnp.array(
    [[-1.3711368, -0.813852, -7.31e-05, 65.1321, 84.32505]] * 4, jnp.float32)
NMF_ANOTHER = jnp.array(
    [[-1.6522485, -0.2748812, -7.81e-05, 83.89315, 101.94061]] * 4, jnp.float32)
WAT_ANOTHER = jnp.array(
    [[0.4208888, 0.5955439, 0.0, 28.78463, 45.70048]] * 4, jnp.float32)


def _block_diag3(w):
    z = jnp.zeros_like(w)
    return jnp.concatenate([
        jnp.concatenate([w, z, z], axis=1),
        jnp.concatenate([z, w, z], axis=1),
        jnp.concatenate([z, z, w], axis=1),
    ], axis=0)


def my_new_gcn_forward(
    params,
    solute_ACE, solvent_ACE, solute_adj, solvent_adj_ACE,
    solute_NMF, solvent_NMF, solvent_adj_NMF,
    solute_wat, solvent_wat, solvent_adj_wat,
    solute_env, ACE_env, NMF_env, wat_env,
):
    bf16 = jnp.bfloat16
    f32 = jnp.float32

    # Weights are jit constants (closed over) -> these casts / block-diags are
    # folded at compile time, not re-done per call.
    w1 = params["gc1_w"].astype(bf16)
    b1 = params["gc1_b"].astype(f32)
    w2 = params["gc2_w"].astype(bf16)
    b2 = params["gc2_b"].astype(f32)
    w1_bd, b1_t = _block_diag3(w1), jnp.tile(b1, 3)     # shared-adj batching
    w2_bd, b2_t = _block_diag3(w2), jnp.tile(b2, 3)

    # adj / activations in bf16 for the memory-bound adj @ support matmuls
    # (f32 accumulation inside the kernel).
    solute_adj_b = solute_adj.astype(bf16)
    adj_ACE = solvent_adj_ACE.astype(bf16)
    adj_NMF = solvent_adj_NMF.astype(bf16)
    adj_wat = solvent_adj_wat.astype(bf16)

    # --- solute path: the three GCN stacks share adj AND weights, so batch
    #     them as one wide matmul (feature concat + block-diagonal W).
    x_solute = jnp.concatenate(
        [solute_ACE, solute_NMF, solute_wat], axis=1).astype(bf16)       # (4n, 96)
    h_solute = gcn_layer(solute_adj_b, x_solute, w1_bd, b1_t,
                         relu=True, out_dtype=bf16)                      # (4n, 96)
    y_solute = gcn_layer(solute_adj_b, h_solute, w2_bd, b2_t,
                         relu=False, out_dtype=f32)                      # (4n, 48)

    def gcn_two_layer(adj_b, x):
        h = gcn_layer(adj_b, x.astype(bf16), w1, b1, relu=True, out_dtype=bf16)
        return gcn_layer(adj_b, h, w2, b2, relu=False, out_dtype=f32)

    y_sv_ACE = gcn_two_layer(adj_ACE, solvent_ACE)
    y_sv_NMF = gcn_two_layer(adj_NMF, solvent_NMF)
    y_sv_wat = gcn_two_layer(adj_wat, solvent_wat)

    # --- graph pooling: the module's (4, 4n) 0/1 pool matrices select the 4
    #     contiguous node blocks, i.e. torch.mm(pool, x) == block segment sum.
    n_solute = solute_adj.shape[0] // 4
    pooled_solute = y_solute.reshape(4, n_solute, 3, 16).sum(axis=1)     # (4, 3, 16)
    su_ACE = pooled_solute[:, 0, :]
    su_NMF = pooled_solute[:, 1, :]
    su_wat = pooled_solute[:, 2, :]

    def pool_solvent(y):
        n = y.shape[0] // 4
        return y.reshape(4, n, 16).sum(axis=1)                           # (4, 16)

    sv_ACE = pool_solvent(y_sv_ACE)
    sv_NMF = pool_solvent(y_sv_NMF)
    sv_wat = pool_solvent(y_sv_wat)

    def env_info(solvent_env):
        info = jnp.concatenate([solute_env, solvent_env], axis=1)        # (1, 64)
        info = jnp.concatenate([info, info], axis=0)                     # (2, 64)
        info = jnp.concatenate([info, info], axis=0)                     # (4, 64)
        return info

    ACE_feat = jnp.concatenate([env_info(ACE_env), ACE_ANOTHER], axis=1)  # (4, 69)
    NMF_feat = jnp.concatenate([env_info(NMF_env), NMF_ANOTHER], axis=1)
    wat_feat = jnp.concatenate([env_info(wat_env), WAT_ANOTHER], axis=1)

    data1 = jnp.concatenate([su_ACE, sv_ACE, ACE_feat], axis=1)           # (4, 101)
    data2 = jnp.concatenate([su_NMF, sv_NMF, NMF_feat], axis=1)
    data3 = jnp.concatenate([su_wat, sv_wat, wat_feat], axis=1)

    # The shared fc1..fc4 head is row-wise -> run once on the stacked batch;
    # row order matches torch.cat((data1, data2, data3), 0).
    stacked = jnp.concatenate([data1, data2, data3], axis=0)              # (12, 101)
    return mlp_head(stacked, params)                                      # (12, 1)


# ----------------------------------------------------------------------------
# Deterministic parameter init (shapes implied by the module's __init__)
# ----------------------------------------------------------------------------
def init_params(key, nfeat, nhid, nclass):
    ks = jax.random.split(key, 6)

    def lin(k, fan_in, fan_out):
        s = 1.0 / jnp.sqrt(jnp.float32(fan_in))
        kw, kb = jax.random.split(k)
        w = jax.random.uniform(kw, (fan_in, fan_out), jnp.float32, -s, s)
        b = jax.random.uniform(kb, (fan_out,), jnp.float32, -s, s)
        return w, b

    p = {}
    p["gc1_w"], p["gc1_b"] = lin(ks[0], nfeat, nhid)
    p["gc2_w"], p["gc2_b"] = lin(ks[1], nhid, nclass)
    p["fc1_w"], p["fc1_b"] = lin(ks[2], 32 + 69, 32)
    p["fc2_w"], p["fc2_b"] = lin(ks[3], 32, 16)
    p["fc3_w"], p["fc3_b"] = lin(ks[4], 16, 8)
    p["fc4_w"], p["fc4_b"] = lin(ks[5], 8, 1)
    # TODO(synk): self.embedding = DataEmbedding() and self.dropout are never
    # used in forward(); omitted.
    return p


# ----------------------------------------------------------------------------
# Main
# ----------------------------------------------------------------------------
if __name__ == "__main__":
    key = jax.random.PRNGKey(0)

    # Small analogs of the original per-graph node counts (2076/8940/12150/14784).
    N_SOLUTE, N_ACE, N_NMF, N_WAT = 8, 16, 24, 32
    NFEAT, NHID, NCLASS = 32, 32, 16   # nclass must be 16 (reshape(-1, 16))
    ENV_SOLUTE, ENV_SOLVENT = 32, 32   # 32 + 32 + 5 = 69 extra features

    kp, kd = jax.random.split(key)
    params = init_params(kp, NFEAT, NHID, NCLASS)

    keys = jax.random.split(kd, 14)
    f32 = jnp.float32
    solute_ACE = jax.random.normal(keys[0], (4 * N_SOLUTE, NFEAT), f32)
    solute_NMF = jax.random.normal(keys[1], (4 * N_SOLUTE, NFEAT), f32)
    solute_wat = jax.random.normal(keys[2], (4 * N_SOLUTE, NFEAT), f32)
    solvent_ACE = jax.random.normal(keys[3], (4 * N_ACE, NFEAT), f32)
    solvent_NMF = jax.random.normal(keys[4], (4 * N_NMF, NFEAT), f32)
    solvent_wat = jax.random.normal(keys[5], (4 * N_WAT, NFEAT), f32)
    solute_adj = jax.random.uniform(keys[6], (4 * N_SOLUTE, 4 * N_SOLUTE), f32)
    solvent_adj_ACE = jax.random.uniform(keys[7], (4 * N_ACE, 4 * N_ACE), f32)
    solvent_adj_NMF = jax.random.uniform(keys[8], (4 * N_NMF, 4 * N_NMF), f32)
    solvent_adj_wat = jax.random.uniform(keys[9], (4 * N_WAT, 4 * N_WAT), f32)
    solute_env = jax.random.normal(keys[10], (1, ENV_SOLUTE), f32)
    ACE_env = jax.random.normal(keys[11], (1, ENV_SOLVENT), f32)
    NMF_env = jax.random.normal(keys[12], (1, ENV_SOLVENT), f32)
    wat_env = jax.random.normal(keys[13], (1, ENV_SOLVENT), f32)

    fwd = jax.jit(functools.partial(my_new_gcn_forward, params))
    out = fwd(
        solute_ACE, solvent_ACE, solute_adj, solvent_adj_ACE,
        solute_NMF, solvent_NMF, solvent_adj_NMF,
        solute_wat, solvent_wat, solvent_adj_wat,
        solute_env, ACE_env, NMF_env, wat_env,
    )
    out = jax.block_until_ready(out)
    assert out.shape == (12, 1), out.shape
    print("KERNEL_OK")
</pallas_src>

<mosaic_0001>
module attributes {stable_mosaic.version = 11 : i64} {
  func.func @_gcn_layer_kernel(%arg0: i32, %arg1: i32, %arg2: memref<128x128xbf16, #tpu.memory_space<vmem>>, %arg3: memref<128x32xbf16, #tpu.memory_space<vmem>>, %arg4: memref<32x16xbf16, #tpu.memory_space<vmem>>, %arg5: memref<1x16xf32, #tpu.memory_space<vmem>>, %arg6: memref<128x16xf32, #tpu.memory_space<vmem>>, %arg7: memref<128x16xf32, #tpu.memory_space<vmem>>) attributes {dimension_semantics = [#tpu.dimension_semantics<parallel>, #tpu.dimension_semantics<arbitrary>], iteration_bounds = array<i64: 1, 1>, scalar_prefetch = 0 : i64, scratch_operands = 1 : i64, tpu.core_type = #tpu.core_type<tc>, window_params = [{transform_indices = @transform_0, window_bounds = array<i64: 128, 128>}, {transform_indices = @transform_1, window_bounds = array<i64: 128, 32>}, {pipeline_mode = #tpu.pipeline_mode<synchronous>, transform_indices = @transform_2, window_bounds = array<i64: 32, 16>}, {pipeline_mode = #tpu.pipeline_mode<synchronous>, transform_indices = @transform_3, window_bounds = array<i64: 1, 16>}, {transform_indices = @transform_4, window_bounds = array<i64: 128, 16>}]} {
    %c0_i32 = arith.constant 0 : i32
    %0 = arith.cmpi eq, %arg1, %c0_i32 : i32
    %1 = arith.extui %0 : i1 to i32
    %c0_i32_0 = arith.constant 0 : i32
    %2 = arith.cmpi ne, %1, %c0_i32_0 : i32
    scf.if %2 {
      %cst_13 = arith.constant 0.000000e+00 : f32
      %15 = vector.broadcast %cst_13 : f32 to vector<128x16xf32>
      %c0_14 = arith.constant 0 : index
      %c0_15 = arith.constant 0 : index
      %16 = vector.load %arg7[%c0_14, %c0_15] : memref<128x16xf32, #tpu.memory_space<vmem>>, vector<128x16xf32>
      tpu.vector_store %arg7[%c0_14, %c0_15], %15 {strides = array<i32>} : memref<128x16xf32, #tpu.memory_space<vmem>>, vector<128x16xf32>,
    } else {
    }
    %c0 = arith.constant 0 : index
    %c0_1 = arith.constant 0 : index
    %3 = vector.load %arg3[%c0, %c0_1] : memref<128x32xbf16, #tpu.memory_space<vmem>>, vector<128x32xbf16>
    %c0_2 = arith.constant 0 : index
    %c0_3 = arith.constant 0 : index
    %4 = vector.load %arg4[%c0_2, %c0_3] : memref<32x16xbf16, #tpu.memory_space<vmem>>, vector<32x16xbf16>
    %cst = arith.constant dense<0.000000e+00> : vector<128x16xf32>
    %5 = tpu.matmul %3, %4, %cst {dimension_numbers = #tpu.dot_dimension_numbers<[1], [0], [0], [1], [0, 0, 1, 1], [], []>} : vector<128x32xbf16>, vector<32x16xbf16>, vector<128x16xf32> -> vector<128x16xf32>
    %c0_4 = arith.constant 0 : index
    %c0_5 = arith.constant 0 : index
    %6 = vector.load %arg7[%c0_4, %c0_5] : memref<128x16xf32, #tpu.memory_space<vmem>>, vector<128x16xf32>
    %c0_6 = arith.constant 0 : index
    %c0_7 = arith.constant 0 : index
    %7 = vector.load %arg2[%c0_6, %c0_7] : memref<128x128xbf16, #tpu.memory_space<vmem>>, vector<128x128xbf16>
    %8 = arith.truncf %5 : vector<128x16xf32> to vector<128x16xbf16>
    %cst_8 = arith.constant dense<0.000000e+00> : vector<128x16xf32>
    %9 = tpu.matmul %7, %8, %cst_8 {dimension_numbers = #tpu.dot_dimension_numbers<[1], [0], [0], [1], [0, 0, 1, 1], [], []>} : vector<128x128xbf16>, vector<128x16xbf16>, vector<128x16xf32> -> vector<128x16xf32>
    %10 = arith.addf %6, %9 : vector<128x16xf32>
    %c0_9 = arith.constant 0 : index
    %c0_10 = arith.constant 0 : index
    %11 = vector.load %arg7[%c0_9, %c0_10] : memref<128x16xf32, #tpu.memory_space<vmem>>, vector<128x16xf32>
    tpu.vector_store %arg7[%c0_9, %c0_10], %10 {strides = array<i32>} : memref<128x16xf32, #tpu.memory_space<vmem>>, vector<128x16xf32>,
    %c0_i32_11 = arith.constant 0 : i32
    %12 = arith.cmpi eq, %arg1, %c0_i32_11 : i32
    %13 = arith.extui %12 : i1 to i32
    %c0_i32_12 = arith.constant 0 : i32
    %14 = arith.cmpi ne, %13, %c0_i32_12 : i32
    scf.if %14 {
      %c0_13 = arith.constant 0 : index
      %c0_14 = arith.constant 0 : index
      %15 = vector.load %arg7[%c0_13, %c0_14] : memref<128x16xf32, #tpu.memory_space<vmem>>, vector<128x16xf32>
      %c0_15 = arith.constant 0 : index
      %c0_16 = arith.constant 0 : index
      %16 = vector.load %arg5[%c0_15, %c0_16] : memref<1x16xf32, #tpu.memory_space<vmem>>, vector<1x16xf32>
      %17 = vector.broadcast %16 : vector<1x16xf32> to vector<128x16xf32>
      %18 = arith.addf %15, %17 : vector<128x16xf32>
      %c0_17 = arith.constant 0 : index
      %c0_18 = arith.constant 0 : index
      %19 = vector.load %arg6[%c0_17, %c0_18] : memref<128x16xf32, #tpu.memory_space<vmem>>, vector<128x16xf32>
      tpu.vector_store %arg6[%c0_17, %c0_18], %18 {strides = array<i32>} : memref<128x16xf32, #tpu.memory_space<vmem>>, vector<128x16xf32>,
    } else {
    }
    return
  }
  func.func @transform_0(%arg0: i32, %arg1: i32) -> (i32, i32) {
    %c0_i32 = arith.constant 0 : i32
    return %arg0, %arg1 : i32, i32
  }
  func.func @transform_1(%arg0: i32, %arg1: i32) -> (i32, i32) {
    %c0_i32 = arith.constant 0 : i32
    %c0_i32_0 = arith.constant 0 : i32
    return %arg1, %c0_i32 : i32, i32
  }
  func.func @transform_2(%arg0: i32, %arg1: i32) -> (i32, i32) {
    %c0_i32 = arith.constant 0 : i32
    %c0_i32_0 = arith.constant 0 : i32
    %c0_i32_1 = arith.constant 0 : i32
    return %c0_i32, %c0_i32_0 : i32, i32
  }
  func.func @transform_3(%arg0: i32, %arg1: i32) -> (i32, i32) {
    %c0_i32 = arith.constant 0 : i32
    %c0_i32_0 = arith.constant 0 : i32
    %c0_i32_1 = arith.constant 0 : i32
    return %c0_i32, %c0_i32_0 : i32, i32
  }
  func.func @transform_4(%arg0: i32, %arg1: i32) -> (i32, i32) {
    %c0_i32 = arith.constant 0 : i32
    %c0_i32_0 = arith.constant 0 : i32
    return %arg0, %c0_i32 : i32, i32
  }
}

module attributes {stable_mosaic.version = 11 : i64} {
  func.func @_gcn_layer_kernel(%arg0: i32, %arg1: i32, %arg2: memref<128x128xbf16, #tpu.memory_space<vmem>>, %arg3: memref<128x32xbf16, #tpu.memory_space<vmem>>, %arg4: memref<32x32xbf16, #tpu.memory_space<vmem>>, %arg5: memref<1x32xf32, #tpu.memory_space<vmem>>, %arg6: memref<128x32xbf16, #tpu.memory_space<vmem>>, %arg7: memref<128x32xf32, #tpu.memory_space<vmem>>) attributes {dimension_semantics = [#tpu.dimension_semantics<parallel>, #tpu.dimension_semantics<arbitrary>], iteration_bounds = array<i64: 1, 1>, scalar_prefetch = 0 : i64, scratch_operands = 1 : i64, tpu.core_type = #tpu.core_type<tc>, window_params = [{transform_indices = @transform_0, window_bounds = array<i64: 128, 128>}, {transform_indices = @transform_1, window_bounds = array<i64: 128, 32>}, {pipeline_mode = #tpu.pipeline_mode<synchronous>, transform_indices = @transform_2, window_bounds = array<i64: 32, 32>}, {pipeline_mode = #tpu.pipeline_mode<synchronous>, transform_indices = @transform_3, window_bounds = array<i64: 1, 32>}, {transform_indices = @transform_4, window_bounds = array<i64: 128, 32>}]} {
    %c0_i32 = arith.constant 0 : i32
    %0 = arith.cmpi eq, %arg1, %c0_i32 : i32
    %1 = arith.extui %0 : i1 to i32
    %c0_i32_0 = arith.constant 0 : i32
    %2 = arith.cmpi ne, %1, %c0_i32_0 : i32
    scf.if %2 {
      %cst_13 = arith.constant 0.000000e+00 : f32
      %15 = vector.broadcast %cst_13 : f32 to vector<128x32xf32>
      %c0_14 = arith.constant 0 : index
      %c0_15 = arith.constant 0 : index
      %16 = vector.load %arg7[%c0_14, %c0_15] : memref<128x32xf32, #tpu.memory_space<vmem>>, vector<128x32xf32>
      tpu.vector_store %arg7[%c0_14, %c0_15], %15 {strides = array<i32>} : memref<128x32xf32, #tpu.memory_space<vmem>>, vector<128x32xf32>,
    } else {
    }
    %c0 = arith.constant 0 : index
    %c0_1 = arith.constant 0 : index
    %3 = vector.load %arg3[%c0, %c0_1] : memref<128x32xbf16, #tpu.memory_space<vmem>>, vector<128x32xbf16>
    %c0_2 = arith.constant 0 : index
    %c0_3 = arith.constant 0 : index
    %4 = vector.load %arg4[%c0_2, %c0_3] : memref<32x32xbf16, #tpu.memory_space<vmem>>, vector<32x32xbf16>
    %cst = arith.constant dense<0.000000e+00> : vector<128x32xf32>
    %5 = tpu.matmul %3, %4, %cst {dimension_numbers = #tpu.dot_dimension_numbers<[1], [0], [0], [1], [0, 0, 1, 1], [], []>} : vector<128x32xbf16>, vector<32x32xbf16>, vector<128x32xf32> -> vector<128x32xf32>
    %c0_4 = arith.constant 0 : index
    %c0_5 = arith.constant 0 : index
    %6 = vector.load %arg7[%c0_4, %c0_5] : memref<128x32xf32, #tpu.memory_space<vmem>>, vector<128x32xf32>
    %c0_6 = arith.constant 0 : index
    %c0_7 = arith.constant 0 : index
    %7 = vector.load %arg2[%c0_6, %c0_7] : memref<128x128xbf16, #tpu.memory_space<vmem>>, vector<128x128xbf16>
    %8 = arith.truncf %5 : vector<128x32xf32> to vector<128x32xbf16>
    %cst_8 = arith.constant dense<0.000000e+00> : vector<128x32xf32>
    %9 = tpu.matmul %7, %8, %cst_8 {dimension_numbers = #tpu.dot_dimension_numbers<[1], [0], [0], [1], [0, 0, 1, 1], [], []>} : vector<128x128xbf16>, vector<128x32xbf16>, vector<128x32xf32> -> vector<128x32xf32>
    %10 = arith.addf %6, %9 : vector<128x32xf32>
    %c0_9 = arith.constant 0 : index
    %c0_10 = arith.constant 0 : index
    %11 = vector.load %arg7[%c0_9, %c0_10] : memref<128x32xf32, #tpu.memory_space<vmem>>, vector<128x32xf32>
    tpu.vector_store %arg7[%c0_9, %c0_10], %10 {strides = array<i32>} : memref<128x32xf32, #tpu.memory_space<vmem>>, vector<128x32xf32>,
    %c0_i32_11 = arith.constant 0 : i32
    %12 = arith.cmpi eq, %arg1, %c0_i32_11 : i32
    %13 = arith.extui %12 : i1 to i32
    %c0_i32_12 = arith.constant 0 : i32
    %14 = arith.cmpi ne, %13, %c0_i32_12 : i32
    scf.if %14 {
      %c0_13 = arith.constant 0 : index
      %c0_14 = arith.constant 0 : index
      %15 = vector.load %arg7[%c0_13, %c0_14] : memref<128x32xf32, #tpu.memory_space<vmem>>, vector<128x32xf32>
      %c0_15 = arith.constant 0 : index
      %c0_16 = arith.constant 0 : index
      %16 = vector.load %arg5[%c0_15, %c0_16] : memref<1x32xf32, #tpu.memory_space<vmem>>, vector<1x32xf32>
      %17 = vector.broadcast %16 : vector<1x32xf32> to vector<128x32xf32>
      %18 = arith.addf %15, %17 : vector<128x32xf32>
      %cst_17 = arith.constant 0.000000e+00 : f32
      %19 = vector.broadcast %cst_17 : f32 to vector<128x32xf32>
      %20 = arith.maximumf %18, %19 : vector<128x32xf32>
      %21 = arith.truncf %20 : vector<128x32xf32> to vector<128x32xbf16>
      %c0_18 = arith.constant 0 : index
      %c0_19 = arith.constant 0 : index
      %22 = vector.load %arg6[%c0_18, %c0_19] : memref<128x32xbf16, #tpu.memory_space<vmem>>, vector<128x32xbf16>
      tpu.vector_store %arg6[%c0_18, %c0_19], %21 {strides = array<i32>} : memref<128x32xbf16, #tpu.memory_space<vmem>>, vector<128x32xbf16>,
    } else {
    }
    return
  }
  func.func @transform_0(%arg0: i32, %arg1: i32) -> (i32, i32) {
    %c0_i32 = arith.constant 0 : i32
    return %arg0, %arg1 : i32, i32
  }
  func.func @transform_1(%arg0: i32, %arg1: i32) -> (i32, i32) {
    %c0_i32 = arith.constant 0 : i32
    %c0_i32_0 = arith.constant 0 : i32
    return %arg1, %c0_i32 : i32, i32
  }
  func.func @transform_2(%arg0: i32, %arg1: i32) -> (i32, i32) {
    %c0_i32 = arith.constant 0 : i32
    %c0_i32_0 = arith.constant 0 : i32
    %c0_i32_1 = arith.constant 0 : i32
    return %c0_i32, %c0_i32_0 : i32, i32
  }
  func.func @transform_3(%arg0: i32, %arg1: i32) -> (i32, i32) {
    %c0_i32 = arith.constant 0 : i32
    %c0_i32_0 = arith.constant 0 : i32
    %c0_i32_1 = arith.constant 0 : i32
    return %c0_i32, %c0_i32_0 : i32, i32
  }
  func.func @transform_4(%arg0: i32, %arg1: i32) -> (i32, i32) {
    %c0_i32 = arith.constant 0 : i32
    %c0_i32_0 = arith.constant 0 : i32
    return %arg0, %c0_i32 : i32, i32
  }
}

module attributes {stable_mosaic.version = 11 : i64} {
  func.func @_gcn_layer_kernel(%arg0: i32, %arg1: i32, %arg2: memref<32x32xbf16, #tpu.memory_space<vmem>>, %arg3: memref<32x96xbf16, #tpu.memory_space<vmem>>, %arg4: memref<96x96xbf16, #tpu.memory_space<vmem>>, %arg5: memref<1x96xf32, #tpu.memory_space<vmem>>, %arg6: memref<32x96xbf16, #tpu.memory_space<vmem>>, %arg7: memref<32x96xf32, #tpu.memory_space<vmem>>) attributes {dimension_semantics = [#tpu.dimension_semantics<parallel>, #tpu.dimension_semantics<arbitrary>], iteration_bounds = array<i64: 1, 1>, scalar_prefetch = 0 : i64, scratch_operands = 1 : i64, tpu.core_type = #tpu.core_type<tc>, window_params = [{transform_indices = @transform_0, window_bounds = array<i64: 32, 32>}, {transform_indices = @transform_1, window_bounds = array<i64: 32, 96>}, {pipeline_mode = #tpu.pipeline_mode<synchronous>, transform_indices = @transform_2, window_bounds = array<i64: 96, 96>}, {pipeline_mode = #tpu.pipeline_mode<synchronous>, transform_indices = @transform_3, window_bounds = array<i64: 1, 96>}, {transform_indices = @transform_4, window_bounds = array<i64: 32, 96>}]} {
    %c0_i32 = arith.constant 0 : i32
    %0 = arith.cmpi eq, %arg1, %c0_i32 : i32
    %1 = arith.extui %0 : i1 to i32
    %c0_i32_0 = arith.constant 0 : i32
    %2 = arith.cmpi ne, %1, %c0_i32_0 : i32
    scf.if %2 {
      %cst_13 = arith.constant 0.000000e+00 : f32
      %15 = vector.broadcast %cst_13 : f32 to vector<32x96xf32>
      %c0_14 = arith.constant 0 : index
      %c0_15 = arith.constant 0 : index
      %16 = vector.load %arg7[%c0_14, %c0_15] : memref<32x96xf32, #tpu.memory_space<vmem>>, vector<32x96xf32>
      tpu.vector_store %arg7[%c0_14, %c0_15], %15 {strides = array<i32>} : memref<32x96xf32, #tpu.memory_space<vmem>>, vector<32x96xf32>,
    } else {
    }
    %c0 = arith.constant 0 : index
    %c0_1 = arith.constant 0 : index
    %3 = vector.load %arg3[%c0, %c0_1] : memref<32x96xbf16, #tpu.memory_space<vmem>>, vector<32x96xbf16>
    %c0_2 = arith.constant 0 : index
    %c0_3 = arith.constant 0 : index
    %4 = vector.load %arg4[%c0_2, %c0_3] : memref<96x96xbf16, #tpu.memory_space<vmem>>, vector<96x96xbf16>
    %cst = arith.constant dense<0.000000e+00> : vector<32x96xf32>
    %5 = tpu.matmul %3, %4, %cst {dimension_numbers = #tpu.dot_dimension_numbers<[1], [0], [0], [1], [0, 0, 1, 1], [], []>} : vector<32x96xbf16>, vector<96x96xbf16>, vector<32x96xf32> -> vector<32x96xf32>
    %c0_4 = arith.constant 0 : index
    %c0_5 = arith.constant 0 : index
    %6 = vector.load %arg7[%c0_4, %c0_5] : memref<32x96xf32, #tpu.memory_space<vmem>>, vector<32x96xf32>
    %c0_6 = arith.constant 0 : index
    %c0_7 = arith.constant 0 : index
    %7 = vector.load %arg2[%c0_6, %c0_7] : memref<32x32xbf16, #tpu.memory_space<vmem>>, vector<32x32xbf16>
    %8 = arith.truncf %5 : vector<32x96xf32> to vector<32x96xbf16>
    %cst_8 = arith.constant dense<0.000000e+00> : vector<32x96xf32>
    %9 = tpu.matmul %7, %8, %cst_8 {dimension_numbers = #tpu.dot_dimension_numbers<[1], [0], [0], [1], [0, 0, 1, 1], [], []>} : vector<32x32xbf16>, vector<32x96xbf16>, vector<32x96xf32> -> vector<32x96xf32>
    %10 = arith.addf %6, %9 : vector<32x96xf32>
    %c0_9 = arith.constant 0 : index
    %c0_10 = arith.constant 0 : index
    %11 = vector.load %arg7[%c0_9, %c0_10] : memref<32x96xf32, #tpu.memory_space<vmem>>, vector<32x96xf32>
    tpu.vector_store %arg7[%c0_9, %c0_10], %10 {strides = array<i32>} : memref<32x96xf32, #tpu.memory_space<vmem>>, vector<32x96xf32>,
    %c0_i32_11 = arith.constant 0 : i32
    %12 = arith.cmpi eq, %arg1, %c0_i32_11 : i32
    %13 = arith.extui %12 : i1 to i32
    %c0_i32_12 = arith.constant 0 : i32
    %14 = arith.cmpi ne, %13, %c0_i32_12 : i32
    scf.if %14 {
      %c0_13 = arith.constant 0 : index
      %c0_14 = arith.constant 0 : index
      %15 = vector.load %arg7[%c0_13, %c0_14] : memref<32x96xf32, #tpu.memory_space<vmem>>, vector<32x96xf32>
      %c0_15 = arith.constant 0 : index
      %c0_16 = arith.constant 0 : index
      %16 = vector.load %arg5[%c0_15, %c0_16] : memref<1x96xf32, #tpu.memory_space<vmem>>, vector<1x96xf32>
      %17 = vector.broadcast %16 : vector<1x96xf32> to vector<32x96xf32>
      %18 = arith.addf %15, %17 : vector<32x96xf32>
      %cst_17 = arith.constant 0.000000e+00 : f32
      %19 = vector.broadcast %cst_17 : f32 to vector<32x96xf32>
      %20 = arith.maximumf %18, %19 : vector<32x96xf32>
      %21 = arith.truncf %20 : vector<32x96xf32> to vector<32x96xbf16>
      %c0_18 = arith.constant 0 : index
      %c0_19 = arith.constant 0 : index
      %22 = vector.load %arg6[%c0_18, %c0_19] : memref<32x96xbf16, #tpu.memory_space<vmem>>, vector<32x96xbf16>
      tpu.vector_store %arg6[%c0_18, %c0_19], %21 {strides = array<i32>} : memref<32x96xbf16, #tpu.memory_space<vmem>>, vector<32x96xbf16>,
    } else {
    }
    return
  }
  func.func @transform_0(%arg0: i32, %arg1: i32) -> (i32, i32) {
    %c0_i32 = arith.constant 0 : i32
    return %arg0, %arg1 : i32, i32
  }
  func.func @transform_1(%arg0: i32, %arg1: i32) -> (i32, i32) {
    %c0_i32 = arith.constant 0 : i32
    %c0_i32_0 = arith.constant 0 : i32
    return %arg1, %c0_i32 : i32, i32
  }
  func.func @transform_2(%arg0: i32, %arg1: i32) -> (i32, i32) {
    %c0_i32 = arith.constant 0 : i32
    %c0_i32_0 = arith.constant 0 : i32
    %c0_i32_1 = arith.constant 0 : i32
    return %c0_i32, %c0_i32_0 : i32, i32
  }
  func.func @transform_3(%arg0: i32, %arg1: i32) -> (i32, i32) {
    %c0_i32 = arith.constant 0 : i32
    %c0_i32_0 = arith.constant 0 : i32
    %c0_i32_1 = arith.constant 0 : i32
    return %c0_i32, %c0_i32_0 : i32, i32
  }
  func.func @transform_4(%arg0: i32, %arg1: i32) -> (i32, i32) {
    %c0_i32 = arith.constant 0 : i32
    %c0_i32_0 = arith.constant 0 : i32
    return %arg0, %c0_i32 : i32, i32
  }
}

module attributes {stable_mosaic.version = 11 : i64} {
  func.func @_gcn_layer_kernel(%arg0: i32, %arg1: i32, %arg2: memref<32x32xbf16, #tpu.memory_space<vmem>>, %arg3: memref<32x96xbf16, #tpu.memory_space<vmem>>, %arg4: memref<96x48xbf16, #tpu.memory_space<vmem>>, %arg5: memref<1x48xf32, #tpu.memory_space<vmem>>, %arg6: memref<32x48xf32, #tpu.memory_space<vmem>>, %arg7: memref<32x48xf32, #tpu.memory_space<vmem>>) attributes {dimension_semantics = [#tpu.dimension_semantics<parallel>, #tpu.dimension_semantics<arbitrary>], iteration_bounds = array<i64: 1, 1>, scalar_prefetch = 0 : i64, scratch_operands = 1 : i64, tpu.core_type = #tpu.core_type<tc>, window_params = [{transform_indices = @transform_0, window_bounds = array<i64: 32, 32>}, {transform_indices = @transform_1, window_bounds = array<i64: 32, 96>}, {pipeline_mode = #tpu.pipeline_mode<synchronous>, transform_indices = @transform_2, window_bounds = array<i64: 96, 48>}, {pipeline_mode = #tpu.pipeline_mode<synchronous>, transform_indices = @transform_3, window_bounds = array<i64: 1, 48>}, {transform_indices = @transform_4, window_bounds = array<i64: 32, 48>}]} {
    %c0_i32 = arith.constant 0 : i32
    %0 = arith.cmpi eq, %arg1, %c0_i32 : i32
    %1 = arith.extui %0 : i1 to i32
    %c0_i32_0 = arith.constant 0 : i32
    %2 = arith.cmpi ne, %1, %c0_i32_0 : i32
    scf.if %2 {
      %cst_13 = arith.constant 0.000000e+00 : f32
      %15 = vector.broadcast %cst_13 : f32 to vector<32x48xf32>
      %c0_14 = arith.constant 0 : index
      %c0_15 = arith.constant 0 : index
      %16 = vector.load %arg7[%c0_14, %c0_15] : memref<32x48xf32, #tpu.memory_space<vmem>>, vector<32x48xf32>
      tpu.vector_store %arg7[%c0_14, %c0_15], %15 {strides = array<i32>} : memref<32x48xf32, #tpu.memory_space<vmem>>, vector<32x48xf32>,
    } else {
    }
    %c0 = arith.constant 0 : index
    %c0_1 = arith.constant 0 : index
    %3 = vector.load %arg3[%c0, %c0_1] : memref<32x96xbf16, #tpu.memory_space<vmem>>, vector<32x96xbf16>
    %c0_2 = arith.constant 0 : index
    %c0_3 = arith.constant 0 : index
    %4 = vector.load %arg4[%c0_2, %c0_3] : memref<96x48xbf16, #tpu.memory_space<vmem>>, vector<96x48xbf16>
    %cst = arith.constant dense<0.000000e+00> : vector<32x48xf32>
    %5 = tpu.matmul %3, %4, %cst {dimension_numbers = #tpu.dot_dimension_numbers<[1], [0], [0], [1], [0, 0, 1, 1], [], []>} : vector<32x96xbf16>, vector<96x48xbf16>, vector<32x48xf32> -> vector<32x48xf32>
    %c0_4 = arith.constant 0 : index
    %c0_5 = arith.constant 0 : index
    %6 = vector.load %arg7[%c0_4, %c0_5] : memref<32x48xf32, #tpu.memory_space<vmem>>, vector<32x48xf32>
    %c0_6 = arith.constant 0 : index
    %c0_7 = arith.constant 0 : index
    %7 = vector.load %arg2[%c0_6, %c0_7] : memref<32x32xbf16, #tpu.memory_space<vmem>>, vector<32x32xbf16>
    %8 = arith.truncf %5 : vector<32x48xf32> to vector<32x48xbf16>
    %cst_8 = arith.constant dense<0.000000e+00> : vector<32x48xf32>
    %9 = tpu.matmul %7, %8, %cst_8 {dimension_numbers = #tpu.dot_dimension_numbers<[1], [0], [0], [1], [0, 0, 1, 1], [], []>} : vector<32x32xbf16>, vector<32x48xbf16>, vector<32x48xf32> -> vector<32x48xf32>
    %10 = arith.addf %6, %9 : vector<32x48xf32>
    %c0_9 = arith.constant 0 : index
    %c0_10 = arith.constant 0 : index
    %11 = vector.load %arg7[%c0_9, %c0_10] : memref<32x48xf32, #tpu.memory_space<vmem>>, vector<32x48xf32>
    tpu.vector_store %arg7[%c0_9, %c0_10], %10 {strides = array<i32>} : memref<32x48xf32, #tpu.memory_space<vmem>>, vector<32x48xf32>,
    %c0_i32_11 = arith.constant 0 : i32
    %12 = arith.cmpi eq, %arg1, %c0_i32_11 : i32
    %13 = arith.extui %12 : i1 to i32
    %c0_i32_12 = arith.constant 0 : i32
    %14 = arith.cmpi ne, %13, %c0_i32_12 : i32
    scf.if %14 {
      %c0_13 = arith.constant 0 : index
      %c0_14 = arith.constant 0 : index
      %15 = vector.load %arg7[%c0_13, %c0_14] : memref<32x48xf32, #tpu.memory_space<vmem>>, vector<32x48xf32>
      %c0_15 = arith.constant 0 : index
      %c0_16 = arith.constant 0 : index
      %16 = vector.load %arg5[%c0_15, %c0_16] : memref<1x48xf32, #tpu.memory_space<vmem>>, vector<1x48xf32>
      %17 = vector.broadcast %16 : vector<1x48xf32> to vector<32x48xf32>
      %18 = arith.addf %15, %17 : vector<32x48xf32>
      %c0_17 = arith.constant 0 : index
      %c0_18 = arith.constant 0 : index
      %19 = vector.load %arg6[%c0_17, %c0_18] : memref<32x48xf32, #tpu.memory_space<vmem>>, vector<32x48xf32>
      tpu.vector_store %arg6[%c0_17, %c0_18], %18 {strides = array<i32>} : memref<32x48xf32, #tpu.memory_space<vmem>>, vector<32x48xf32>,
    } else {
    }
    return
  }
  func.func @transform_0(%arg0: i32, %arg1: i32) -> (i32, i32) {
    %c0_i32 = arith.constant 0 : i32
    return %arg0, %arg1 : i32, i32
  }
  func.func @transform_1(%arg0: i32, %arg1: i32) -> (i32, i32) {
    %c0_i32 = arith.constant 0 : i32
    %c0_i32_0 = arith.constant 0 : i32
    return %arg1, %c0_i32 : i32, i32
  }
  func.func @transform_2(%arg0: i32, %arg1: i32) -> (i32, i32) {
    %c0_i32 = arith.constant 0 : i32
    %c0_i32_0 = arith.constant 0 : i32
    %c0_i32_1 = arith.constant 0 : i32
    return %c0_i32, %c0_i32_0 : i32, i32
  }
  func.func @transform_3(%arg0: i32, %arg1: i32) -> (i32, i32) {
    %c0_i32 = arith.constant 0 : i32
    %c0_i32_0 = arith.constant 0 : i32
    %c0_i32_1 = arith.constant 0 : i32
    return %c0_i32, %c0_i32_0 : i32, i32
  }
  func.func @transform_4(%arg0: i32, %arg1: i32) -> (i32, i32) {
    %c0_i32 = arith.constant 0 : i32
    %c0_i32_0 = arith.constant 0 : i32
    return %arg0, %c0_i32 : i32, i32
  }
}

module attributes {stable_mosaic.version = 11 : i64} {
  func.func @_gcn_layer_kernel(%arg0: i32, %arg1: i32, %arg2: memref<96x96xbf16, #tpu.memory_space<vmem>>, %arg3: memref<96x32xbf16, #tpu.memory_space<vmem>>, %arg4: memref<32x16xbf16, #tpu.memory_space<vmem>>, %arg5: memref<1x16xf32, #tpu.memory_space<vmem>>, %arg6: memref<96x16xf32, #tpu.memory_space<vmem>>, %arg7: memref<96x16xf32, #tpu.memory_space<vmem>>) attributes {dimension_semantics = [#tpu.dimension_semantics<parallel>, #tpu.dimension_semantics<arbitrary>], iteration_bounds = array<i64: 1, 1>, scalar_prefetch = 0 : i64, scratch_operands = 1 : i64, tpu.core_type = #tpu.core_type<tc>, window_params = [{transform_indices = @transform_0, window_bounds = array<i64: 96, 96>}, {transform_indices = @transform_1, window_bounds = array<i64: 96, 32>}, {pipeline_mode = #tpu.pipeline_mode<synchronous>, transform_indices = @transform_2, window_bounds = array<i64: 32, 16>}, {pipeline_mode = #tpu.pipeline_mode<synchronous>, transform_indices = @transform_3, window_bounds = array<i64: 1, 16>}, {transform_indices = @transform_4, window_bounds = array<i64: 96, 16>}]} {
    %c0_i32 = arith.constant 0 : i32
    %0 = arith.cmpi eq, %arg1, %c0_i32 : i32
    %1 = arith.extui %0 : i1 to i32
    %c0_i32_0 = arith.constant 0 : i32
    %2 = arith.cmpi ne, %1, %c0_i32_0 : i32
    scf.if %2 {
      %cst_13 = arith.constant 0.000000e+00 : f32
      %15 = vector.broadcast %cst_13 : f32 to vector<96x16xf32>
      %c0_14 = arith.constant 0 : index
      %c0_15 = arith.constant 0 : index
      %16 = vector.load %arg7[%c0_14, %c0_15] : memref<96x16xf32, #tpu.memory_space<vmem>>, vector<96x16xf32>
      tpu.vector_store %arg7[%c0_14, %c0_15], %15 {strides = array<i32>} : memref<96x16xf32, #tpu.memory_space<vmem>>, vector<96x16xf32>,
    } else {
    }
    %c0 = arith.constant 0 : index
    %c0_1 = arith.constant 0 : index
    %3 = vector.load %arg3[%c0, %c0_1] : memref<96x32xbf16, #tpu.memory_space<vmem>>, vector<96x32xbf16>
    %c0_2 = arith.constant 0 : index
    %c0_3 = arith.constant 0 : index
    %4 = vector.load %arg4[%c0_2, %c0_3] : memref<32x16xbf16, #tpu.memory_space<vmem>>, vector<32x16xbf16>
    %cst = arith.constant dense<0.000000e+00> : vector<96x16xf32>
    %5 = tpu.matmul %3, %4, %cst {dimension_numbers = #tpu.dot_dimension_numbers<[1], [0], [0], [1], [0, 0, 1, 1], [], []>} : vector<96x32xbf16>, vector<32x16xbf16>, vector<96x16xf32> -> vector<96x16xf32>
    %c0_4 = arith.constant 0 : index
    %c0_5 = arith.constant 0 : index
    %6 = vector.load %arg7[%c0_4, %c0_5] : memref<96x16xf32, #tpu.memory_space<vmem>>, vector<96x16xf32>
    %c0_6 = arith.constant 0 : index
    %c0_7 = arith.constant 0 : index
    %7 = vector.load %arg2[%c0_6, %c0_7] : memref<96x96xbf16, #tpu.memory_space<vmem>>, vector<96x96xbf16>
    %8 = arith.truncf %5 : vector<96x16xf32> to vector<96x16xbf16>
    %cst_8 = arith.constant dense<0.000000e+00> : vector<96x16xf32>
    %9 = tpu.matmul %7, %8, %cst_8 {dimension_numbers = #tpu.dot_dimension_numbers<[1], [0], [0], [1], [0, 0, 1, 1], [], []>} : vector<96x96xbf16>, vector<96x16xbf16>, vector<96x16xf32> -> vector<96x16xf32>
    %10 = arith.addf %6, %9 : vector<96x16xf32>
    %c0_9 = arith.constant 0 : index
    %c0_10 = arith.constant 0 : index
    %11 = vector.load %arg7[%c0_9, %c0_10] : memref<96x16xf32, #tpu.memory_space<vmem>>, vector<96x16xf32>
    tpu.vector_store %arg7[%c0_9, %c0_10], %10 {strides = array<i32>} : memref<96x16xf32, #tpu.memory_space<vmem>>, vector<96x16xf32>,
    %c0_i32_11 = arith.constant 0 : i32
    %12 = arith.cmpi eq, %arg1, %c0_i32_11 : i32
    %13 = arith.extui %12 : i1 to i32
    %c0_i32_12 = arith.constant 0 : i32
    %14 = arith.cmpi ne, %13, %c0_i32_12 : i32
    scf.if %14 {
      %c0_13 = arith.constant 0 : index
      %c0_14 = arith.constant 0 : index
      %15 = vector.load %arg7[%c0_13, %c0_14] : memref<96x16xf32, #tpu.memory_space<vmem>>, vector<96x16xf32>
      %c0_15 = arith.constant 0 : index
      %c0_16 = arith.constant 0 : index
      %16 = vector.load %arg5[%c0_15, %c0_16] : memref<1x16xf32, #tpu.memory_space<vmem>>, vector<1x16xf32>
      %17 = vector.broadcast %16 : vector<1x16xf32> to vector<96x16xf32>
      %18 = arith.addf %15, %17 : vector<96x16xf32>
      %c0_17 = arith.constant 0 : index
      %c0_18 = arith.constant 0 : index
      %19 = vector.load %arg6[%c0_17, %c0_18] : memref<96x16xf32, #tpu.memory_space<vmem>>, vector<96x16xf32>
      tpu.vector_store %arg6[%c0_17, %c0_18], %18 {strides = array<i32>} : memref<96x16xf32, #tpu.memory_space<vmem>>, vector<96x16xf32>,
    } else {
    }
    return
  }
  func.func @transform_0(%arg0: i32, %arg1: i32) -> (i32, i32) {
    %c0_i32 = arith.constant 0 : i32
    return %arg0, %arg1 : i32, i32
  }
  func.func @transform_1(%arg0: i32, %arg1: i32) -> (i32, i32) {
    %c0_i32 = arith.constant 0 : i32
    %c0_i32_0 = arith.constant 0 : i32
    return %arg1, %c0_i32 : i32, i32
  }
  func.func @transform_2(%arg0: i32, %arg1: i32) -> (i32, i32) {
    %c0_i32 = arith.constant 0 : i32
    %c0_i32_0 = arith.constant 0 : i32
    %c0_i32_1 = arith.constant 0 : i32
    return %c0_i32, %c0_i32_0 : i32, i32
  }
  func.func @transform_3(%arg0: i32, %arg1: i32) -> (i32, i32) {
    %c0_i32 = arith.constant 0 : i32
    %c0_i32_0 = arith.constant 0 : i32
    %c0_i32_1 = arith.constant 0 : i32
    return %c0_i32, %c0_i32_0 : i32, i32
  }
  func.func @transform_4(%arg0: i32, %arg1: i32) -> (i32, i32) {
    %c0_i32 = arith.constant 0 : i32
    %c0_i32_0 = arith.constant 0 : i32
    return %arg0, %c0_i32 : i32, i32
  }
}

module attributes {stable_mosaic.version = 11 : i64} {
  func.func @_gcn_layer_kernel(%arg0: i32, %arg1: i32, %arg2: memref<96x96xbf16, #tpu.memory_space<vmem>>, %arg3: memref<96x32xbf16, #tpu.memory_space<vmem>>, %arg4: memref<32x32xbf16, #tpu.memory_space<vmem>>, %arg5: memref<1x32xf32, #tpu.memory_space<vmem>>, %arg6: memref<96x32xbf16, #tpu.memory_space<vmem>>, %arg7: memref<96x32xf32, #tpu.memory_space<vmem>>) attributes {dimension_semantics = [#tpu.dimension_semantics<parallel>, #tpu.dimension_semantics<arbitrary>], iteration_bounds = array<i64: 1, 1>, scalar_prefetch = 0 : i64, scratch_operands = 1 : i64, tpu.core_type = #tpu.core_type<tc>, window_params = [{transform_indices = @transform_0, window_bounds = array<i64: 96, 96>}, {transform_indices = @transform_1, window_bounds = array<i64: 96, 32>}, {pipeline_mode = #tpu.pipeline_mode<synchronous>, transform_indices = @transform_2, window_bounds = array<i64: 32, 32>}, {pipeline_mode = #tpu.pipeline_mode<synchronous>, transform_indices = @transform_3, window_bounds = array<i64: 1, 32>}, {transform_indices = @transform_4, window_bounds = array<i64: 96, 32>}]} {
    %c0_i32 = arith.constant 0 : i32
    %0 = arith.cmpi eq, %arg1, %c0_i32 : i32
    %1 = arith.extui %0 : i1 to i32
    %c0_i32_0 = arith.constant 0 : i32
    %2 = arith.cmpi ne, %1, %c0_i32_0 : i32
    scf.if %2 {
      %cst_13 = arith.constant 0.000000e+00 : f32
      %15 = vector.broadcast %cst_13 : f32 to vector<96x32xf32>
      %c0_14 = arith.constant 0 : index
      %c0_15 = arith.constant 0 : index
      %16 = vector.load %arg7[%c0_14, %c0_15] : memref<96x32xf32, #tpu.memory_space<vmem>>, vector<96x32xf32>
      tpu.vector_store %arg7[%c0_14, %c0_15], %15 {strides = array<i32>} : memref<96x32xf32, #tpu.memory_space<vmem>>, vector<96x32xf32>,
    } else {
    }
    %c0 = arith.constant 0 : index
    %c0_1 = arith.constant 0 : index
    %3 = vector.load %arg3[%c0, %c0_1] : memref<96x32xbf16, #tpu.memory_space<vmem>>, vector<96x32xbf16>
    %c0_2 = arith.constant 0 : index
    %c0_3 = arith.constant 0 : index
    %4 = vector.load %arg4[%c0_2, %c0_3] : memref<32x32xbf16, #tpu.memory_space<vmem>>, vector<32x32xbf16>
    %cst = arith.constant dense<0.000000e+00> : vector<96x32xf32>
    %5 = tpu.matmul %3, %4, %cst {dimension_numbers = #tpu.dot_dimension_numbers<[1], [0], [0], [1], [0, 0, 1, 1], [], []>} : vector<96x32xbf16>, vector<32x32xbf16>, vector<96x32xf32> -> vector<96x32xf32>
    %c0_4 = arith.constant 0 : index
    %c0_5 = arith.constant 0 : index
    %6 = vector.load %arg7[%c0_4, %c0_5] : memref<96x32xf32, #tpu.memory_space<vmem>>, vector<96x32xf32>
    %c0_6 = arith.constant 0 : index
    %c0_7 = arith.constant 0 : index
    %7 = vector.load %arg2[%c0_6, %c0_7] : memref<96x96xbf16, #tpu.memory_space<vmem>>, vector<96x96xbf16>
    %8 = arith.truncf %5 : vector<96x32xf32> to vector<96x32xbf16>
    %cst_8 = arith.constant dense<0.000000e+00> : vector<96x32xf32>
    %9 = tpu.matmul %7, %8, %cst_8 {dimension_numbers = #tpu.dot_dimension_numbers<[1], [0], [0], [1], [0, 0, 1, 1], [], []>} : vector<96x96xbf16>, vector<96x32xbf16>, vector<96x32xf32> -> vector<96x32xf32>
    %10 = arith.addf %6, %9 : vector<96x32xf32>
    %c0_9 = arith.constant 0 : index
    %c0_10 = arith.constant 0 : index
    %11 = vector.load %arg7[%c0_9, %c0_10] : memref<96x32xf32, #tpu.memory_space<vmem>>, vector<96x32xf32>
    tpu.vector_store %arg7[%c0_9, %c0_10], %10 {strides = array<i32>} : memref<96x32xf32, #tpu.memory_space<vmem>>, vector<96x32xf32>,
    %c0_i32_11 = arith.constant 0 : i32
    %12 = arith.cmpi eq, %arg1, %c0_i32_11 : i32
    %13 = arith.extui %12 : i1 to i32
    %c0_i32_12 = arith.constant 0 : i32
    %14 = arith.cmpi ne, %13, %c0_i32_12 : i32
    scf.if %14 {
      %c0_13 = arith.constant 0 : index
      %c0_14 = arith.constant 0 : index
      %15 = vector.load %arg7[%c0_13, %c0_14] : memref<96x32xf32, #tpu.memory_space<vmem>>, vector<96x32xf32>
      %c0_15 = arith.constant 0 : index
      %c0_16 = arith.constant 0 : index
      %16 = vector.load %arg5[%c0_15, %c0_16] : memref<1x32xf32, #tpu.memory_space<vmem>>, vector<1x32xf32>
      %17 = vector.broadcast %16 : vector<1x32xf32> to vector<96x32xf32>
      %18 = arith.addf %15, %17 : vector<96x32xf32>
      %cst_17 = arith.constant 0.000000e+00 : f32
      %19 = vector.broadcast %cst_17 : f32 to vector<96x32xf32>
      %20 = arith.maximumf %18, %19 : vector<96x32xf32>
      %21 = arith.truncf %20 : vector<96x32xf32> to vector<96x32xbf16>
      %c0_18 = arith.constant 0 : index
      %c0_19 = arith.constant 0 : index
      %22 = vector.load %arg6[%c0_18, %c0_19] : memref<96x32xbf16, #tpu.memory_space<vmem>>, vector<96x32xbf16>
      tpu.vector_store %arg6[%c0_18, %c0_19], %21 {strides = array<i32>} : memref<96x32xbf16, #tpu.memory_space<vmem>>, vector<96x32xbf16>,
    } else {
    }
    return
  }
  func.func @transform_0(%arg0: i32, %arg1: i32) -> (i32, i32) {
    %c0_i32 = arith.constant 0 : i32
    return %arg0, %arg1 : i32, i32
  }
  func.func @transform_1(%arg0: i32, %arg1: i32) -> (i32, i32) {
    %c0_i32 = arith.constant 0 : i32
    %c0_i32_0 = arith.constant 0 : i32
    return %arg1, %c0_i32 : i32, i32
  }
  func.func @transform_2(%arg0: i32, %arg1: i32) -> (i32, i32) {
    %c0_i32 = arith.constant 0 : i32
    %c0_i32_0 = arith.constant 0 : i32
    %c0_i32_1 = arith.constant 0 : i32
    return %c0_i32, %c0_i32_0 : i32, i32
  }
  func.func @transform_3(%arg0: i32, %arg1: i32) -> (i32, i32) {
    %c0_i32 = arith.constant 0 : i32
    %c0_i32_0 = arith.constant 0 : i32
    %c0_i32_1 = arith.constant 0 : i32
    return %c0_i32, %c0_i32_0 : i32, i32
  }
  func.func @transform_4(%arg0: i32, %arg1: i32) -> (i32, i32) {
    %c0_i32 = arith.constant 0 : i32
    %c0_i32_0 = arith.constant 0 : i32
    return %arg0, %c0_i32 : i32, i32
  }
}

module attributes {stable_mosaic.version = 11 : i64} {
  func.func @_gcn_layer_kernel(%arg0: i32, %arg1: i32, %arg2: memref<64x64xbf16, #tpu.memory_space<vmem>>, %arg3: memref<64x32xbf16, #tpu.memory_space<vmem>>, %arg4: memref<32x16xbf16, #tpu.memory_space<vmem>>, %arg5: memref<1x16xf32, #tpu.memory_space<vmem>>, %arg6: memref<64x16xf32, #tpu.memory_space<vmem>>, %arg7: memref<64x16xf32, #tpu.memory_space<vmem>>) attributes {dimension_semantics = [#tpu.dimension_semantics<parallel>, #tpu.dimension_semantics<arbitrary>], iteration_bounds = array<i64: 1, 1>, scalar_prefetch = 0 : i64, scratch_operands = 1 : i64, tpu.core_type = #tpu.core_type<tc>, window_params = [{transform_indices = @transform_0, window_bounds = array<i64: 64, 64>}, {transform_indices = @transform_1, window_bounds = array<i64: 64, 32>}, {pipeline_mode = #tpu.pipeline_mode<synchronous>, transform_indices = @transform_2, window_bounds = array<i64: 32, 16>}, {pipeline_mode = #tpu.pipeline_mode<synchronous>, transform_indices = @transform_3, window_bounds = array<i64: 1, 16>}, {transform_indices = @transform_4, window_bounds = array<i64: 64, 16>}]} {
    %c0_i32 = arith.constant 0 : i32
    %0 = arith.cmpi eq, %arg1, %c0_i32 : i32
    %1 = arith.extui %0 : i1 to i32
    %c0_i32_0 = arith.constant 0 : i32
    %2 = arith.cmpi ne, %1, %c0_i32_0 : i32
    scf.if %2 {
      %cst_13 = arith.constant 0.000000e+00 : f32
      %15 = vector.broadcast %cst_13 : f32 to vector<64x16xf32>
      %c0_14 = arith.constant 0 : index
      %c0_15 = arith.constant 0 : index
      %16 = vector.load %arg7[%c0_14, %c0_15] : memref<64x16xf32, #tpu.memory_space<vmem>>, vector<64x16xf32>
      tpu.vector_store %arg7[%c0_14, %c0_15], %15 {strides = array<i32>} : memref<64x16xf32, #tpu.memory_space<vmem>>, vector<64x16xf32>,
    } else {
    }
    %c0 = arith.constant 0 : index
    %c0_1 = arith.constant 0 : index
    %3 = vector.load %arg3[%c0, %c0_1] : memref<64x32xbf16, #tpu.memory_space<vmem>>, vector<64x32xbf16>
    %c0_2 = arith.constant 0 : index
    %c0_3 = arith.constant 0 : index
    %4 = vector.load %arg4[%c0_2, %c0_3] : memref<32x16xbf16, #tpu.memory_space<vmem>>, vector<32x16xbf16>
    %cst = arith.constant dense<0.000000e+00> : vector<64x16xf32>
    %5 = tpu.matmul %3, %4, %cst {dimension_numbers = #tpu.dot_dimension_numbers<[1], [0], [0], [1], [0, 0, 1, 1], [], []>} : vector<64x32xbf16>, vector<32x16xbf16>, vector<64x16xf32> -> vector<64x16xf32>
    %c0_4 = arith.constant 0 : index
    %c0_5 = arith.constant 0 : index
    %6 = vector.load %arg7[%c0_4, %c0_5] : memref<64x16xf32, #tpu.memory_space<vmem>>, vector<64x16xf32>
    %c0_6 = arith.constant 0 : index
    %c0_7 = arith.constant 0 : index
    %7 = vector.load %arg2[%c0_6, %c0_7] : memref<64x64xbf16, #tpu.memory_space<vmem>>, vector<64x64xbf16>
    %8 = arith.truncf %5 : vector<64x16xf32> to vector<64x16xbf16>
    %cst_8 = arith.constant dense<0.000000e+00> : vector<64x16xf32>
    %9 = tpu.matmul %7, %8, %cst_8 {dimension_numbers = #tpu.dot_dimension_numbers<[1], [0], [0], [1], [0, 0, 1, 1], [], []>} : vector<64x64xbf16>, vector<64x16xbf16>, vector<64x16xf32> -> vector<64x16xf32>
    %10 = arith.addf %6, %9 : vector<64x16xf32>
    %c0_9 = arith.constant 0 : index
    %c0_10 = arith.constant 0 : index
    %11 = vector.load %arg7[%c0_9, %c0_10] : memref<64x16xf32, #tpu.memory_space<vmem>>, vector<64x16xf32>
    tpu.vector_store %arg7[%c0_9, %c0_10], %10 {strides = array<i32>} : memref<64x16xf32, #tpu.memory_space<vmem>>, vector<64x16xf32>,
    %c0_i32_11 = arith.constant 0 : i32
    %12 = arith.cmpi eq, %arg1, %c0_i32_11 : i32
    %13 = arith.extui %12 : i1 to i32
    %c0_i32_12 = arith.constant 0 : i32
    %14 = arith.cmpi ne, %13, %c0_i32_12 : i32
    scf.if %14 {
      %c0_13 = arith.constant 0 : index
      %c0_14 = arith.constant 0 : index
      %15 = vector.load %arg7[%c0_13, %c0_14] : memref<64x16xf32, #tpu.memory_space<vmem>>, vector<64x16xf32>
      %c0_15 = arith.constant 0 : index
      %c0_16 = arith.constant 0 : index
      %16 = vector.load %arg5[%c0_15, %c0_16] : memref<1x16xf32, #tpu.memory_space<vmem>>, vector<1x16xf32>
      %17 = vector.broadcast %16 : vector<1x16xf32> to vector<64x16xf32>
      %18 = arith.addf %15, %17 : vector<64x16xf32>
      %c0_17 = arith.constant 0 : index
      %c0_18 = arith.constant 0 : index
      %19 = vector.load %arg6[%c0_17, %c0_18] : memref<64x16xf32, #tpu.memory_space<vmem>>, vector<64x16xf32>
      tpu.vector_store %arg6[%c0_17, %c0_18], %18 {strides = array<i32>} : memref<64x16xf32, #tpu.memory_space<vmem>>, vector<64x16xf32>,
    } else {
    }
    return
  }
  func.func @transform_0(%arg0: i32, %arg1: i32) -> (i32, i32) {
    %c0_i32 = arith.constant 0 : i32
    return %arg0, %arg1 : i32, i32
  }
  func.func @transform_1(%arg0: i32, %arg1: i32) -> (i32, i32) {
    %c0_i32 = arith.constant 0 : i32
    %c0_i32_0 = arith.constant 0 : i32
    return %arg1, %c0_i32 : i32, i32
  }
  func.func @transform_2(%arg0: i32, %arg1: i32) -> (i32, i32) {
    %c0_i32 = arith.constant 0 : i32
    %c0_i32_0 = arith.constant 0 : i32
    %c0_i32_1 = arith.constant 0 : i32
    return %c0_i32, %c0_i32_0 : i32, i32
  }
  func.func @transform_3(%arg0: i32, %arg1: i32) -> (i32, i32) {
    %c0_i32 = arith.constant 0 : i32
    %c0_i32_0 = arith.constant 0 : i32
    %c0_i32_1 = arith.constant 0 : i32
    return %c0_i32, %c0_i32_0 : i32, i32
  }
  func.func @transform_4(%arg0: i32, %arg1: i32) -> (i32, i32) {
    %c0_i32 = arith.constant 0 : i32
    %c0_i32_0 = arith.constant 0 : i32
    return %arg0, %c0_i32 : i32, i32
  }
}

module attributes {stable_mosaic.version = 11 : i64} {
  func.func @_gcn_layer_kernel(%arg0: i32, %arg1: i32, %arg2: memref<64x64xbf16, #tpu.memory_space<vmem>>, %arg3: memref<64x32xbf16, #tpu.memory_space<vmem>>, %arg4: memref<32x32xbf16, #tpu.memory_space<vmem>>, %arg5: memref<1x32xf32, #tpu.memory_space<vmem>>, %arg6: memref<64x32xbf16, #tpu.memory_space<vmem>>, %arg7: memref<64x32xf32, #tpu.memory_space<vmem>>) attributes {dimension_semantics = [#tpu.dimension_semantics<parallel>, #tpu.dimension_semantics<arbitrary>], iteration_bounds = array<i64: 1, 1>, scalar_prefetch = 0 : i64, scratch_operands = 1 : i64, tpu.core_type = #tpu.core_type<tc>, window_params = [{transform_indices = @transform_0, window_bounds = array<i64: 64, 64>}, {transform_indices = @transform_1, window_bounds = array<i64: 64, 32>}, {pipeline_mode = #tpu.pipeline_mode<synchronous>, transform_indices = @transform_2, window_bounds = array<i64: 32, 32>}, {pipeline_mode = #tpu.pipeline_mode<synchronous>, transform_indices = @transform_3, window_bounds = array<i64: 1, 32>}, {transform_indices = @transform_4, window_bounds = array<i64: 64, 32>}]} {
    %c0_i32 = arith.constant 0 : i32
    %0 = arith.cmpi eq, %arg1, %c0_i32 : i32
    %1 = arith.extui %0 : i1 to i32
    %c0_i32_0 = arith.constant 0 : i32
    %2 = arith.cmpi ne, %1, %c0_i32_0 : i32
    scf.if %2 {
      %cst_13 = arith.constant 0.000000e+00 : f32
      %15 = vector.broadcast %cst_13 : f32 to vector<64x32xf32>
      %c0_14 = arith.constant 0 : index
      %c0_15 = arith.constant 0 : index
      %16 = vector.load %arg7[%c0_14, %c0_15] : memref<64x32xf32, #tpu.memory_space<vmem>>, vector<64x32xf32>
      tpu.vector_store %arg7[%c0_14, %c0_15], %15 {strides = array<i32>} : memref<64x32xf32, #tpu.memory_space<vmem>>, vector<64x32xf32>,
    } else {
    }
    %c0 = arith.constant 0 : index
    %c0_1 = arith.constant 0 : index
    %3 = vector.load %arg3[%c0, %c0_1] : memref<64x32xbf16, #tpu.memory_space<vmem>>, vector<64x32xbf16>
    %c0_2 = arith.constant 0 : index
    %c0_3 = arith.constant 0 : index
    %4 = vector.load %arg4[%c0_2, %c0_3] : memref<32x32xbf16, #tpu.memory_space<vmem>>, vector<32x32xbf16>
    %cst = arith.constant dense<0.000000e+00> : vector<64x32xf32>
    %5 = tpu.matmul %3, %4, %cst {dimension_numbers = #tpu.dot_dimension_numbers<[1], [0], [0], [1], [0, 0, 1, 1], [], []>} : vector<64x32xbf16>, vector<32x32xbf16>, vector<64x32xf32> -> vector<64x32xf32>
    %c0_4 = arith.constant 0 : index
    %c0_5 = arith.constant 0 : index
    %6 = vector.load %arg7[%c0_4, %c0_5] : memref<64x32xf32, #tpu.memory_space<vmem>>, vector<64x32xf32>
    %c0_6 = arith.constant 0 : index
    %c0_7 = arith.constant 0 : index
    %7 = vector.load %arg2[%c0_6, %c0_7] : memref<64x64xbf16, #tpu.memory_space<vmem>>, vector<64x64xbf16>
    %8 = arith.truncf %5 : vector<64x32xf32> to vector<64x32xbf16>
    %cst_8 = arith.constant dense<0.000000e+00> : vector<64x32xf32>
    %9 = tpu.matmul %7, %8, %cst_8 {dimension_numbers = #tpu.dot_dimension_numbers<[1], [0], [0], [1], [0, 0, 1, 1], [], []>} : vector<64x64xbf16>, vector<64x32xbf16>, vector<64x32xf32> -> vector<64x32xf32>
    %10 = arith.addf %6, %9 : vector<64x32xf32>
    %c0_9 = arith.constant 0 : index
    %c0_10 = arith.constant 0 : index
    %11 = vector.load %arg7[%c0_9, %c0_10] : memref<64x32xf32, #tpu.memory_space<vmem>>, vector<64x32xf32>
    tpu.vector_store %arg7[%c0_9, %c0_10], %10 {strides = array<i32>} : memref<64x32xf32, #tpu.memory_space<vmem>>, vector<64x32xf32>,
    %c0_i32_11 = arith.constant 0 : i32
    %12 = arith.cmpi eq, %arg1, %c0_i32_11 : i32
    %13 = arith.extui %12 : i1 to i32
    %c0_i32_12 = arith.constant 0 : i32
    %14 = arith.cmpi ne, %13, %c0_i32_12 : i32
    scf.if %14 {
      %c0_13 = arith.constant 0 : index
      %c0_14 = arith.constant 0 : index
      %15 = vector.load %arg7[%c0_13, %c0_14] : memref<64x32xf32, #tpu.memory_space<vmem>>, vector<64x32xf32>
      %c0_15 = arith.constant 0 : index
      %c0_16 = arith.constant 0 : index
      %16 = vector.load %arg5[%c0_15, %c0_16] : memref<1x32xf32, #tpu.memory_space<vmem>>, vector<1x32xf32>
      %17 = vector.broadcast %16 : vector<1x32xf32> to vector<64x32xf32>
      %18 = arith.addf %15, %17 : vector<64x32xf32>
      %cst_17 = arith.constant 0.000000e+00 : f32
      %19 = vector.broadcast %cst_17 : f32 to vector<64x32xf32>
      %20 = arith.maximumf %18, %19 : vector<64x32xf32>
      %21 = arith.truncf %20 : vector<64x32xf32> to vector<64x32xbf16>
      %c0_18 = arith.constant 0 : index
      %c0_19 = arith.constant 0 : index
      %22 = vector.load %arg6[%c0_18, %c0_19] : memref<64x32xbf16, #tpu.memory_space<vmem>>, vector<64x32xbf16>
      tpu.vector_store %arg6[%c0_18, %c0_19], %21 {strides = array<i32>} : memref<64x32xbf16, #tpu.memory_space<vmem>>, vector<64x32xbf16>,
    } else {
    }
    return
  }
  func.func @transform_0(%arg0: i32, %arg1: i32) -> (i32, i32) {
    %c0_i32 = arith.constant 0 : i32
    return %arg0, %arg1 : i32, i32
  }
  func.func @transform_1(%arg0: i32, %arg1: i32) -> (i32, i32) {
    %c0_i32 = arith.constant 0 : i32
    %c0_i32_0 = arith.constant 0 : i32
    return %arg1, %c0_i32 : i32, i32
  }
  func.func @transform_2(%arg0: i32, %arg1: i32) -> (i32, i32) {
    %c0_i32 = arith.constant 0 : i32
    %c0_i32_0 = arith.constant 0 : i32
    %c0_i32_1 = arith.constant 0 : i32
    return %c0_i32, %c0_i32_0 : i32, i32
  }
  func.func @transform_3(%arg0: i32, %arg1: i32) -> (i32, i32) {
    %c0_i32 = arith.constant 0 : i32
    %c0_i32_0 = arith.constant 0 : i32
    %c0_i32_1 = arith.constant 0 : i32
    return %c0_i32, %c0_i32_0 : i32, i32
  }
  func.func @transform_4(%arg0: i32, %arg1: i32) -> (i32, i32) {
    %c0_i32 = arith.constant 0 : i32
    %c0_i32_0 = arith.constant 0 : i32
    return %arg0, %c0_i32 : i32, i32
  }
}

module attributes {stable_mosaic.version = 11 : i64} {
  func.func @_mlp_head_kernel(%arg0: i32, %arg1: memref<12x101xf32, #tpu.memory_space<vmem>>, %arg2: memref<101x32xf32, #tpu.memory_space<vmem>>, %arg3: memref<1x32xf32, #tpu.memory_space<vmem>>, %arg4: memref<32x16xf32, #tpu.memory_space<vmem>>, %arg5: memref<1x16xf32, #tpu.memory_space<vmem>>, %arg6: memref<16x8xf32, #tpu.memory_space<vmem>>, %arg7: memref<1x8xf32, #tpu.memory_space<vmem>>, %arg8: memref<1x8xf32, #tpu.memory_space<vmem>>, %arg9: memref<1x1xf32, #tpu.memory_space<vmem>>, %arg10: memref<12x1xf32, #tpu.memory_space<vmem>>) attributes {dimension_semantics = [#tpu.dimension_semantics<arbitrary>], iteration_bounds = array<i64: 1>, scalar_prefetch = 0 : i64, scratch_operands = 0 : i64, tpu.core_type = #tpu.core_type<tc>, window_params = [{pipeline_mode = #tpu.pipeline_mode<synchronous>, transform_indices = @transform_0, window_bounds = array<i64: 12, 101>}, {pipeline_mode = #tpu.pipeline_mode<synchronous>, transform_indices = @transform_1, window_bounds = array<i64: 101, 32>}, {pipeline_mode = #tpu.pipeline_mode<synchronous>, transform_indices = @transform_2, window_bounds = array<i64: 1, 32>}, {pipeline_mode = #tpu.pipeline_mode<synchronous>, transform_indices = @transform_3, window_bounds = array<i64: 32, 16>}, {pipeline_mode = #tpu.pipeline_mode<synchronous>, transform_indices = @transform_4, window_bounds = array<i64: 1, 16>}, {pipeline_mode = #tpu.pipeline_mode<synchronous>, transform_indices = @transform_5, window_bounds = array<i64: 16, 8>}, {pipeline_mode = #tpu.pipeline_mode<synchronous>, transform_indices = @transform_6, window_bounds = array<i64: 1, 8>}, {pipeline_mode = #tpu.pipeline_mode<synchronous>, transform_indices = @transform_7, window_bounds = array<i64: 1, 8>}, {pipeline_mode = #tpu.pipeline_mode<synchronous>, transform_indices = @transform_8, window_bounds = array<i64: 1, 1>}, {pipeline_mode = #tpu.pipeline_mode<synchronous>, transform_indices = @transform_9, window_bounds = array<i64: 12, 1>}]} {
    %c0 = arith.constant 0 : index
    %c0_0 = arith.constant 0 : index
    %0 = vector.load %arg1[%c0, %c0_0] : memref<12x101xf32, #tpu.memory_space<vmem>>, vector<12x101xf32>
    %c0_1 = arith.constant 0 : index
    %c0_2 = arith.constant 0 : index
    %1 = vector.load %arg2[%c0_1, %c0_2] : memref<101x32xf32, #tpu.memory_space<vmem>>, vector<101x32xf32>
    %cst = arith.constant dense<0.000000e+00> : vector<12x32xf32>
    %2 = tpu.matmul %0, %1, %cst {dimension_numbers = #tpu.dot_dimension_numbers<[1], [0], [0], [1], [0, 0, 1, 1], [], []>} : vector<12x101xf32>, vector<101x32xf32>, vector<12x32xf32> -> vector<12x32xf32>
    %c0_3 = arith.constant 0 : index
    %c0_4 = arith.constant 0 : index
    %3 = vector.load %arg3[%c0_3, %c0_4] : memref<1x32xf32, #tpu.memory_space<vmem>>, vector<1x32xf32>
    %4 = vector.broadcast %3 : vector<1x32xf32> to vector<12x32xf32>
    %5 = arith.addf %2, %4 : vector<12x32xf32>
    %cst_5 = arith.constant 0.000000e+00 : f32
    %6 = vector.broadcast %cst_5 : f32 to vector<12x32xf32>
    %7 = arith.maximumf %5, %6 : vector<12x32xf32>
    %c0_6 = arith.constant 0 : index
    %c0_7 = arith.constant 0 : index
    %8 = vector.load %arg4[%c0_6, %c0_7] : memref<32x16xf32, #tpu.memory_space<vmem>>, vector<32x16xf32>
    %cst_8 = arith.constant dense<0.000000e+00> : vector<12x16xf32>
    %9 = tpu.matmul %7, %8, %cst_8 {dimension_numbers = #tpu.dot_dimension_numbers<[1], [0], [0], [1], [0, 0, 1, 1], [], []>} : vector<12x32xf32>, vector<32x16xf32>, vector<12x16xf32> -> vector<12x16xf32>
    %c0_9 = arith.constant 0 : index
    %c0_10 = arith.constant 0 : index
    %10 = vector.load %arg5[%c0_9, %c0_10] : memref<1x16xf32, #tpu.memory_space<vmem>>, vector<1x16xf32>
    %11 = vector.broadcast %10 : vector<1x16xf32> to vector<12x16xf32>
    %12 = arith.addf %9, %11 : vector<12x16xf32>
    %cst_11 = arith.constant 0.000000e+00 : f32
    %13 = vector.broadcast %cst_11 : f32 to vector<12x16xf32>
    %14 = arith.maximumf %12, %13 : vector<12x16xf32>
    %c0_12 = arith.constant 0 : index
    %c0_13 = arith.constant 0 : index
    %15 = vector.load %arg6[%c0_12, %c0_13] : memref<16x8xf32, #tpu.memory_space<vmem>>, vector<16x8xf32>
    %cst_14 = arith.constant dense<0.000000e+00> : vector<12x8xf32>
    %16 = tpu.matmul %14, %15, %cst_14 {dimension_numbers = #tpu.dot_dimension_numbers<[1], [0], [0], [1], [0, 0, 1, 1], [], []>} : vector<12x16xf32>, vector<16x8xf32>, vector<12x8xf32> -> vector<12x8xf32>
    %c0_15 = arith.constant 0 : index
    %c0_16 = arith.constant 0 : index
    %17 = vector.load %arg7[%c0_15, %c0_16] : memref<1x8xf32, #tpu.memory_space<vmem>>, vector<1x8xf32>
    %18 = vector.broadcast %17 : vector<1x8xf32> to vector<12x8xf32>
    %19 = arith.addf %16, %18 : vector<12x8xf32>
    %cst_17 = arith.constant 0.000000e+00 : f32
    %20 = vector.broadcast %cst_17 : f32 to vector<12x8xf32>
    %21 = arith.maximumf %19, %20 : vector<12x8xf32>
    %c0_18 = arith.constant 0 : index
    %c0_19 = arith.constant 0 : index
    %22 = vector.load %arg8[%c0_18, %c0_19] : memref<1x8xf32, #tpu.memory_space<vmem>>, vector<1x8xf32>
    %23 = vector.broadcast %22 : vector<1x8xf32> to vector<12x8xf32>
    %24 = arith.mulf %21, %23 : vector<12x8xf32>
    %cst_20 = arith.constant dense<0.000000e+00> : vector<12xf32>
    %25 = vector.multi_reduction <add>, %24, %cst_20 [1] : vector<12x8xf32> to vector<12xf32>
    %26 = vector.shape_cast %25 : vector<12xf32> to vector<12x1xf32>
    %c0_21 = arith.constant 0 : index
    %c0_22 = arith.constant 0 : index
    %27 = vector.load %arg9[%c0_21, %c0_22] : memref<1x1xf32, #tpu.memory_space<vmem>>, vector<1x1xf32>
    %28 = vector.broadcast %27 : vector<1x1xf32> to vector<12x1xf32>
    %29 = arith.addf %26, %28 : vector<12x1xf32>
    %c0_23 = arith.constant 0 : index
    %c0_24 = arith.constant 0 : index
    %30 = vector.load %arg10[%c0_23, %c0_24] : memref<12x1xf32, #tpu.memory_space<vmem>>, vector<12x1xf32>
    tpu.vector_store %arg10[%c0_23, %c0_24], %29 {strides = array<i32>} : memref<12x1xf32, #tpu.memory_space<vmem>>, vector<12x1xf32>,
    return
  }
  func.func @transform_0(%arg0: i32) -> (i32, i32) {
    %c0_i32 = arith.constant 0 : i32
    %c0_i32_0 = arith.constant 0 : i32
    %c0_i32_1 = arith.constant 0 : i32
    return %c0_i32, %c0_i32_0 : i32, i32
  }
  func.func @transform_1(%arg0: i32) -> (i32, i32) {
    %c0_i32 = arith.constant 0 : i32
    %c0_i32_0 = arith.constant 0 : i32
    %c0_i32_1 = arith.constant 0 : i32
    return %c0_i32, %c0_i32_0 : i32, i32
  }
  func.func @transform_2(%arg0: i32) -> (i32, i32) {
    %c0_i32 = arith.constant 0 : i32
    %c0_i32_0 = arith.constant 0 : i32
    %c0_i32_1 = arith.constant 0 : i32
    return %c0_i32, %c0_i32_0 : i32, i32
  }
  func.func @transform_3(%arg0: i32) -> (i32, i32) {
    %c0_i32 = arith.constant 0 : i32
    %c0_i32_0 = arith.constant 0 : i32
    %c0_i32_1 = arith.constant 0 : i32
    return %c0_i32, %c0_i32_0 : i32, i32
  }
  func.func @transform_4(%arg0: i32) -> (i32, i32) {
    %c0_i32 = arith.constant 0 : i32
    %c0_i32_0 = arith.constant 0 : i32
    %c0_i32_1 = arith.constant 0 : i32
    return %c0_i32, %c0_i32_0 : i32, i32
  }
  func.func @transform_5(%arg0: i32) -> (i32, i32) {
    %c0_i32 = arith.constant 0 : i32
    %c0_i32_0 = arith.constant 0 : i32
    %c0_i32_1 = arith.constant 0 : i32
    return %c0_i32, %c0_i32_0 : i32, i32
  }
  func.func @transform_6(%arg0: i32) -> (i32, i32) {
    %c0_i32 = arith.constant 0 : i32
    %c0_i32_0 = arith.constant 0 : i32
    %c0_i32_1 = arith.constant 0 : i32
    return %c0_i32, %c0_i32_0 : i32, i32
  }
  func.func @transform_7(%arg0: i32) -> (i32, i32) {
    %c0_i32 = arith.constant 0 : i32
    %c0_i32_0 = arith.constant 0 : i32
    %c0_i32_1 = arith.constant 0 : i32
    return %c0_i32, %c0_i32_0 : i32, i32
  }
  func.func @transform_8(%arg0: i32) -> (i32, i32) {
    %c0_i32 = arith.constant 0 : i32
    %c0_i32_0 = arith.constant 0 : i32
    %c0_i32_1 = arith.constant 0 : i32
    return %c0_i32, %c0_i32_0 : i32, i32
  }
  func.func @transform_9(%arg0: i32) -> (i32, i32) {
    %c0_i32 = arith.constant 0 : i32
    %c0_i32_0 = arith.constant 0 : i32
    %c0_i32_1 = arith.constant 0 : i32
    return %c0_i32, %c0_i32_0 : i32, i32
  }
}

</mosaic_0001>

<llo_original>
// kernel: tile.10
$region0: #{tile.10}
  #allocation0 [shape = 's32[1]{0}', space=sflag, size = 0x4, scoped, tag = 'scoped memory for tile.10']
  %s0 = inlined_call_operand.vmem [shape: f32[32], index: 0, kind: input, shape index: {}]
  %s1 = inlined_call_operand.vmem [shape: f32[3,32], index: 1, kind: output, shape index: {}]
  // Predicated region
  $region2: #{tile.10} parent=0 // pred_check
    _
  $region3: #{tile.10} parent=0 // pred_check_branch
    %3 = sbr.rel (0) target = $region5
  $region4: #{tile.10} parent=0 // pred_region
    _
  $region5: #{tile.10} parent=0 // pred_fallthru
    _
  %v4 = vld [vmem:[%s0] ss:$0 sm:$0xff]
  %5 = vst [vmem:[%s1] sm:$0xf] %v4

// kernel: tile.14
$region0: #{tile.14}
  %s0 = inlined_call_operand.vmem [shape: f32[3,32], index: 0, kind: input, shape index: {}]
  %s1 = inlined_call_operand.vmem [shape: f32[1,96], index: 1, kind: output, shape index: {}]
  $region1: #{tile.14} parent=0
    #allocation0 [shape = 'u8[4096]{0}', space=vmem, size = 0x1000, scoped, tag = 'scoped mem for output reshape']
    #allocation1 [shape = 'u8[4096]{0}', space=vmem, size = 0x1000, scoped, tag = 'scoped mem for input reshape']
    %s3 = sshllo.u32 0, 4
    %v4 = vld [vmem:[%s0] sm:%s3]
    %5 = vst [vmem:[#allocation1] sm:%s3] %v4
    %v6 = vld [vmem:[#allocation1] sm:$0x1]
    %vm7 = vcmask 261120
    %8 = vst.msk [vmem:[#allocation0] sm:$0x1] %vm7, %v6
    %s9 = scalar_lea.vmem [#allocation1], 2
    %v10 = vld [vmem:[%s9] sm:$0x1]
    %11 = vrot.lane.b32.xlu0 %v10, 64
    %v12 = vpop.permute.xlu0 %11
    %vm13 = vcmask 785920
    %14 = vst.msk [vmem:[#allocation0] sm:$0x1] %vm13, %v12
    %s15 = scalar_lea.vmem [#allocation1], 1
    %v16 = vld [vmem:[%s15] sm:$0x1]
    %17 = vrot.lane.b32.xlu0 %v16, 32
    %v18 = vpop.permute.xlu0 %17
    %vm19 = vcmask 523520
    %20 = vst.msk [vmem:[#allocation0] sm:$0x1] %vm19, %v18
    %s22 = sshllo.u32 0, 1
    %v24 = vld [vmem:[#allocation0] sm:%s22]
    %s25 = sshllo.u32 0, 1
    %26 = vst [vmem:[%s1] sm:%s25] %v24

// kernel: tile.13
$region0: #{tile.13}
  #allocation0 [shape = 's32[1]{0}', space=sflag, size = 0x4, scoped, tag = 'scoped memory for tile.13']
  %s0 = inlined_call_operand.vmem [shape: f32[16], index: 0, kind: input, shape index: {}]
  %s1 = inlined_call_operand.vmem [shape: f32[3,16], index: 1, kind: output, shape index: {}]
  // Predicated region
  $region2: #{tile.13} parent=0 // pred_check
    _
  $region3: #{tile.13} parent=0 // pred_check_branch
    %3 = sbr.rel (0) target = $region5
  $region4: #{tile.13} parent=0 // pred_region
    _
  $region5: #{tile.13} parent=0 // pred_fallthru
    _
  %v4 = vld [vmem:[%s0] ss:$0 sm:$0xff]
  %5 = vst [vmem:[%s1] sm:$0xf] %v4

// kernel: tile.15
$region0: #{tile.15}
  %s0 = inlined_call_operand.vmem [shape: f32[3,16], index: 0, kind: input, shape index: {}]
  %s1 = inlined_call_operand.vmem [shape: f32[1,48], index: 1, kind: output, shape index: {}]
  $region1: #{tile.15} parent=0
    #allocation0 [shape = 'u8[4096]{0}', space=vmem, size = 0x1000, scoped, tag = 'scoped mem for output reshape']
    #allocation1 [shape = 'u8[4096]{0}', space=vmem, size = 0x1000, scoped, tag = 'scoped mem for input reshape']
    %s3 = sshllo.u32 0, 4
    %v4 = vld [vmem:[%s0] sm:%s3]
    %5 = vst [vmem:[#allocation1] sm:%s3] %v4
    %v6 = vld [vmem:[#allocation1] sm:$0x1]
    %vm7 = vcmask 130048
    %8 = vst.msk [vmem:[#allocation0] sm:$0x1] %vm7, %v6
    %s9 = scalar_lea.vmem [#allocation1], 2
    %v10 = vld [vmem:[%s9] sm:$0x1]
    %11 = vrot.lane.b32.xlu0 %v10, 32
    %v12 = vpop.permute.xlu0 %11
    %vm13 = vcmask 392448
    %14 = vst.msk [vmem:[#allocation0] sm:$0x1] %vm13, %v12
    %s15 = scalar_lea.vmem [#allocation1], 1
    %v16 = vld [vmem:[%s15] sm:$0x1]
    %17 = vrot.lane.b32.xlu0 %v16, 16
    %v18 = vpop.permute.xlu0 %17
    %vm19 = vcmask 261248
    %20 = vst.msk [vmem:[#allocation0] sm:$0x1] %vm19, %v18
    %s22 = sshllo.u32 0, 1
    %v24 = vld [vmem:[#allocation0] sm:%s22]
    %s25 = sshllo.u32 0, 1
    %26 = vst [vmem:[%s1] sm:%s25] %v24

// kernel: my_new_gcn_forward.9
$region0: #{my_new_gcn_forward.9}
  #allocation0 [shape = 'u32[]', space=smem, size = 0x4, offset = 0x4, fixed_abs, tag = 'smem constant byte address 0x4 - core index']
  #allocation1 [shape = 'u32[144,128]{1,0:T(1,128)}', space=vmem, size = 0x12000, scoped, tag = 'internal scratch']
  #allocation2 [shape = 'f32[32,96]{1,0:T(8,128)}', space=vmem, size = 0x4000, scoped, tag = 'scratch operand']
  %s0 = inlined_call_operand.vmem [shape: bf16[32,32], index: 0, kind: input, shape index: {}]
  %s1 = inlined_call_operand.vmem [shape: bf16[32,96], index: 1, kind: input, shape index: {}]
  %s2 = inlined_call_operand.vmem [shape: bf16[96,96], index: 2, kind: input, shape index: {}]
  %s3 = inlined_call_operand.vmem [shape: f32[1,96], index: 3, kind: input, shape index: {}]
  %s4 = inlined_call_operand.vmem [shape: bf16[32,96], index: 4, kind: output, shape index: {}]
  %s5 = sld [smem:[#allocation0]]
  $region34: #{my_new_gcn_forward.9} parent=0
    _
  %s7 = ssub.s32 1, %s5
  %s8 = scalar_select 0, %s7, %s5
  // Predicated region
  $region2: #{my_new_gcn_forward.9} parent=0 // pred_check
    _
  $region3: #{my_new_gcn_forward.9} parent=0 // pred_check_branch
    %10 = sbr.rel (0) target = $region5
  $region4: #{my_new_gcn_forward.9} parent=0 // pred_region
    _
  $region5: #{my_new_gcn_forward.9} parent=0 // pred_fallthru
    _
  // Predicated region
  $region6: #{my_new_gcn_forward.9} parent=0 // pred_check
    _
  $region7: #{my_new_gcn_forward.9} parent=0 // pred_check_branch
    %12 = sbr.rel (0) target = $region9
  $region8: #{my_new_gcn_forward.9} parent=0 // pred_region
    _
  $region9: #{my_new_gcn_forward.9} parent=0 // pred_fallthru
    _
  // Predicated region
  $region10: #{my_new_gcn_forward.9} parent=0 // pred_check
    _
  $region11: #{my_new_gcn_forward.9} parent=0 // pred_check_branch
    %14 = sbr.rel (0) target = $region13
  $region12: #{my_new_gcn_forward.9} parent=0 // pred_region
    _
  $region13: #{my_new_gcn_forward.9} parent=0 // pred_fallthru
    _
  // Predicated region
  $region14: #{my_new_gcn_forward.9} parent=0 // pred_check
    _
  $region15: #{my_new_gcn_forward.9} parent=0 // pred_check_branch
    %16 = sbr.rel (0) target = $region17
  $region16: #{my_new_gcn_forward.9} parent=0 // pred_region
    _
  $region17: #{my_new_gcn_forward.9} parent=0 // pred_fallthru
    _
  %p18 = scmp.eq.s32.totalorder 0, 0
  // Predicated region
  $region18: #{my_new_gcn_forward.9} parent=0 // pred_check
    %p19 = pneg %p18
  $region19: #{my_new_gcn_forward.9} parent=0 // pred_check_branch
    %21 = sbr.rel (%p19) target = $region21
  $region20: #{my_new_gcn_forward.9} parent=0 // pred_region
    %vm22 = vcmask 785408
    %23 = vst.msk [vmem:[#allocation2] sm:$0xff] %vm22, 0.0
    %24 = vst.msk [vmem:[#allocation2 + $0x8] sm:$0xff] %vm22, 0.0
    %25 = vst.msk [vmem:[#allocation2 + $0x10] sm:$0xff] %vm22, 0.0
    %26 = vst.msk [vmem:[#allocation2 + $0x18] sm:$0xff] %vm22, 0.0
  $region21: #{my_new_gcn_forward.9} parent=0 // pred_fallthru
    _
  %v27 = vld [vmem:[%s1] sm:$0xf]
  %v28 = vld [vmem:[%s1 + $0x4] sm:$0xf]
  %v29 = vld [vmem:[%s1 + $0x8] sm:$0xf]
  %v30 = vld [vmem:[%s1 + $0xc] sm:$0xf]
  %v31 = vld [vmem:[%s2] sm:$0xf]
  %v32 = vld [vmem:[%s2 + $0x4] sm:$0xf]
  %v33 = vld [vmem:[%s2 + $0x8] sm:$0xf]
  %v34 = vld [vmem:[%s2 + $0xc] sm:$0xf]
  %v35 = vld [vmem:[%s2 + $0x10] sm:$0xf]
  %v36 = vld [vmem:[%s2 + $0x14] sm:$0xf]
  %v37 = vld [vmem:[%s2 + $0x18] sm:$0xf]
  %v38 = vld [vmem:[%s2 + $0x1c] sm:$0xf]
  %v39 = vld [vmem:[%s2 + $0x20] sm:$0xf]
  %v40 = vld [vmem:[%s2 + $0x24] sm:$0xf]
  %v41 = vld [vmem:[%s2 + $0x28] sm:$0xf]
  %v42 = vld [vmem:[%s2 + $0x2c] sm:$0xf]
  %v47 = vunpack.c.l.b16 %v27
  %v48 = vunpack.c.l.b16 %v28
  %v49 = vunpack.c.l.b16 %v29
  %v50 = vunpack.c.l.b16 %v30
  %v51 = vpack.c.b16 %v48, %v47
  %v52 = vpack.c.b16 %v50, %v49
  %v65 = vunpack.c.l.b16 %v31
  %v66 = vunpack.c.l.b16 %v32
  %v67 = vunpack.c.l.b16 %v33
  %v68 = vunpack.c.l.b16 %v34
  %v69 = vunpack.c.l.b16 %v35
  %v70 = vunpack.c.l.b16 %v36
  %v71 = vunpack.c.l.b16 %v37
  %v72 = vunpack.c.l.b16 %v38
  %v73 = vunpack.c.l.b16 %v39
  %v74 = vunpack.c.l.b16 %v40
  %v75 = vunpack.c.l.b16 %v41
  %v76 = vunpack.c.l.b16 %v42
  %v77 = vpack.c.b16 %v66, %v65
  %v78 = vpack.c.b16 %v68, %v67
  %v79 = vpack.c.b16 %v70, %v69
  %v80 = vpack.c.b16 %v72, %v71
  %v81 = vpack.c.b16 %v74, %v73
  %v82 = vpack.c.b16 %v76, %v75
  %vm89 = vcmask 785408
  %v91 = vsel %vm89, %v51, 0
  %v94 = vsel %vm89, %v52, 0
  %96 = vmatprep.subr.bf16.mxu0 0
  %97 = vmatpush1.bf16.msra.mxu0 %v77
  %98 = vmatprep.subr.bf16.mxu0 0
  %99 = vmatpush1.bf16.msra.mxu0 %v78
  %100 = vmatprep.subr.bf16.mxu0 0
  %101 = vmatpush1.bf16.msra.mxu0 %v79
  %102 = vmatprep.subr.bf16.mxu0 0
  %103 = vmatpush1.bf16.msra.mxu0 %v80
  %104 = vmatprep.subr.bf16.mxu0 0
  %105 = vmatpush1.bf16.msra.mxu0 %v81
  %106 = vmatprep.subr.bf16.mxu0 0
  %107 = vmatpush1.bf16.msra.mxu0 %v82
  %108 = vmatprep.subr.bf16.mxu0 0
  %109 = vmatpush1.bf16.msra.mxu0 0
  %110 = vmatprep.subr.bf16.mxu0 0
  %111 = vmatpush1.bf16.msra.mxu0 0
  %112 = vmatprep.subr.bf16.mxu0 0
  %113 = vmatpush1.bf16.msra.mxu0 0
  %114 = vmatprep.subr.bf16.mxu0 0
  %115 = vmatpush1.bf16.msra.mxu0 0
  %116 = vmatprep.subr.bf16.mxu0 0
  %117 = vmatpush1.bf16.msra.mxu0 0
  %118 = vmatprep.subr.bf16.mxu0 0
  %119 = vmatpush1.bf16.msra.mxu0 0
  %120 = vmatprep.subr.bf16.mxu0 0
  %121 = vmatpush1.bf16.msra.mxu0 0
  %122 = vmatprep.subr.bf16.mxu0 0
  %123 = vmatpush1.bf16.msra.mxu0 0
  %124 = vmatprep.subr.bf16.mxu0 0
  %125 = vmatpush1.bf16.msra.mxu0 0
  %126 = vmatprep.subr.bf16.mxu0 0
  %127 = vmatpush1.bf16.msra.mxu0 0
  %128 = vmatprep.mubr.bf16.mxu0 0
  %129 = vmatmul.mubr.bf16.gmra.mrb[0].mxu0 %v91
  %v130 = vpop.f32.mrb[0].mxu0
  %v131 = vadd.f32 0.0, %v130
  %v132 = vpop.f32.mrb[0].mxu0
  %v133 = vpop.f32.mrb[0].mxu0
  %v134 = vadd.f32 0.0, %v133
  %v135 = vpop.f32.mrb[0].mxu0
  %136 = vmatprep.mubr.bf16.mxu0 0
  %137 = vmatmul.mubr.bf16.gmra.mrb[0].mxu0 %v94
  %v138 = vpop.f32.mrb[0].mxu0
  %v139 = vadd.f32 0.0, %v138
  %v140 = vpop.f32.mrb[0].mxu0
  %v141 = vpop.f32.mrb[0].mxu0
  %v142 = vadd.f32 0.0, %v141
  %v143 = vpop.f32.mrb[0].mxu0
  %144 = vdwg.mxu0
  %v145 = vld [vmem:[#allocation2] sm:$0xff]
  %v146 = vld [vmem:[#allocation2 + $0x8] sm:$0xff]
  %v147 = vld [vmem:[#allocation2 + $0x10] sm:$0xff]
  %v148 = vld [vmem:[#allocation2 + $0x18] sm:$0xff]
  %v149 = vld [vmem:[%s0] sm:$0xf]
  %v150 = vld [vmem:[%s0 + $0x4] sm:$0xf]
  %v151 = vld [vmem:[%s0 + $0x8] sm:$0xf]
  %v152 = vld [vmem:[%s0 + $0xc] sm:$0xf]
  %v153 = vpack.c.bf16 %v134, %v131
  %v154 = vpack.c.bf16 %v142, %v139
  %v159 = vunpack.c.l.b16 %v149
  %v160 = vunpack.c.l.b16 %v150
  %v161 = vunpack.c.l.b16 %v151
  %v162 = vunpack.c.l.b16 %v152
  %v163 = vpack.c.b16 %v160, %v159
  %v164 = vpack.c.b16 %v162, %v161
  %vm165 = vcmask 261120
  %v167 = vsel %vm165, %v163, 0
  %v170 = vsel %vm165, %v164, 0
  %172 = vmatprep.subr.bf16.mxu0 0
  %173 = vmatpush1.bf16.msra.mxu0 %v153
  %174 = vmatprep.subr.bf16.mxu0 0
  %175 = vmatpush1.bf16.msra.mxu0 %v154
  %176 = vmatprep.subr.bf16.mxu0 0
  %177 = vmatpush1.bf16.msra.mxu0 0
  %178 = vmatprep.subr.bf16.mxu0 0
  %179 = vmatpush1.bf16.msra.mxu0 0
  %180 = vmatprep.subr.bf16.mxu0 0
  %181 = vmatpush1.bf16.msra.mxu0 0
  %182 = vmatprep.subr.bf16.mxu0 0
  %183 = vmatpush1.bf16.msra.mxu0 0
  %184 = vmatprep.subr.bf16.mxu0 0
  %185 = vmatpush1.bf16.msra.mxu0 0
  %186 = vmatprep.subr.bf16.mxu0 0
  %187 = vmatpush1.bf16.msra.mxu0 0
  %188 = vmatprep.subr.bf16.mxu0 0
  %189 = vmatpush1.bf16.msra.mxu0 0
  %190 = vmatprep.subr.bf16.mxu0 0
  %191 = vmatpush1.bf16.msra.mxu0 0
  %192 = vmatprep.subr.bf16.mxu0 0
  %193 = vmatpush1.bf16.msra.mxu0 0
  %194 = vmatprep.subr.bf16.mxu0 0
  %195 = vmatpush1.bf16.msra.mxu0 0
  %196 = vmatprep.subr.bf16.mxu0 0
  %197 = vmatpush1.bf16.msra.mxu0 0
  %198 = vmatprep.subr.bf16.mxu0 0
  %199 = vmatpush1.bf16.msra.mxu0 0
  %200 = vmatprep.subr.bf16.mxu0 0
  %201 = vmatpush1.bf16.msra.mxu0 0
  %202 = vmatprep.subr.bf16.mxu0 0
  %203 = vmatpush1.bf16.msra.mxu0 0
  %204 = vmatprep.mubr.bf16.mxu0 0
  %205 = vmatmul.mubr.bf16.gmra.mrb[0].mxu0 %v167
  %v206 = vpop.f32.mrb[0].mxu0
  %v207 = vadd.f32 0.0, %v206
  %v208 = vpop.f32.mrb[0].mxu0
  %v209 = vpop.f32.mrb[0].mxu0
  %v210 = vadd.f32 0.0, %v209
  %v211 = vpop.f32.mrb[0].mxu0
  %212 = vmatprep.mubr.bf16.mxu0 0
  %213 = vmatmul.mubr.bf16.gmra.mrb[0].mxu0 %v170
  %v214 = vpop.f32.mrb[0].mxu0
  %v215 = vadd.f32 0.0, %v214
  %v216 = vpop.f32.mrb[0].mxu0
  %v217 = vpop.f32.mrb[0].mxu0
  %v218 = vadd.f32 0.0, %v217
  %v219 = vpop.f32.mrb[0].mxu0
  %220 = vdwg.mxu0
  %v221 = vadd.f32 %v145, %v207
  %v222 = vadd.f32 %v146, %v210
  %v223 = vadd.f32 %v147, %v215
  %v224 = vadd.f32 %v148, %v218
  %225 = vst.msk [vmem:[#allocation2] sm:$0xff] %vm89, %v221
  %226 = vst.msk [vmem:[#allocation2 + $0x8] sm:$0xff] %vm89, %v222
  %227 = vst.msk [vmem:[#allocation2 + $0x10] sm:$0xff] %vm89, %v223
  %228 = vst.msk [vmem:[#allocation2 + $0x18] sm:$0xff] %vm89, %v224
  // Predicated region
  $region22: #{my_new_gcn_forward.9} parent=0 // pred_check
    %p229 = pneg %p18
  $region23: #{my_new_gcn_forward.9} parent=0 // pred_check_branch
    %231 = sbr.rel (%p229) target = $region25
  $region24: #{my_new_gcn_forward.9} parent=0 // pred_region
    %v232 = vld [vmem:[#allocation2] sm:$0xff]
    %v233 = vld [vmem:[#allocation2 + $0x8] sm:$0xff]
    %v234 = vld [vmem:[#allocation2 + $0x10] sm:$0xff]
    %v235 = vld [vmem:[#allocation2 + $0x18] sm:$0xff]
    %v236 = vld [vmem:[%s3] sm:$0x1]
    %v238 = vlaneseq
    %v239 = vshrl.u32 %v238, 7
    %v240 = vsub.s32 0, %v239
    %v241 = vrot.slane %v236, %v240
    %v243 = vadd.f32 %v232, %v241
    %v244 = vadd.f32 %v233, %v241
    %v245 = vadd.f32 %v234, %v241
    %v246 = vadd.f32 %v235, %v241
    %v247 = vmax.f32 %v243, 0.0
    %v248 = vmax.f32 %v244, 0.0
    %v249 = vmax.f32 %v245, 0.0
    %v250 = vmax.f32 %v246, 0.0
    %v251 = vpack.c.bf16 %v248, %v247
    %v252 = vpack.c.bf16 %v250, %v249
    %v255 = vunpack.c.l.b16 %v251
    %v256 = vunpack.c.h.b16 %v251
    %v257 = vunpack.c.l.b16 %v252
    %v258 = vunpack.c.h.b16 %v252
    %v259 = vpack.c.b16 %v255, %v255
    %v260 = vpack.c.b16 %v256, %v256
    %v261 = vpack.c.b16 %v257, %v257
    %v262 = vpack.c.b16 %v258, %v258
    %vm267 = vcmask 781312
    %268 = vst.msk [vmem:[%s4] sm:$0xf] %vm267, %v259
    %269 = vst.msk [vmem:[%s4 + $0x4] sm:$0xf] %vm267, %v260
    %270 = vst.msk [vmem:[%s4 + $0x8] sm:$0xf] %vm267, %v261
    %271 = vst.msk [vmem:[%s4 + $0xc] sm:$0xf] %vm267, %v262
  $region25: #{my_new_gcn_forward.9} parent=0 // pred_fallthru
    _
  // Predicated region
  $region26: #{my_new_gcn_forward.9} parent=0 // pred_check
    _
  $region27: #{my_new_gcn_forward.9} parent=0 // pred_check_branch
    %273 = sbr.rel (0) target = $region29
  $region28: #{my_new_gcn_forward.9} parent=0 // pred_region
    _
  $region29: #{my_new_gcn_forward.9} parent=0 // pred_fallthru
    _
  // Predicated region
  $region30: #{my_new_gcn_forward.9} parent=0 // pred_check
    _
  $region31: #{my_new_gcn_forward.9} parent=0 // pred_check_branch
    %275 = sbr.rel (0) target = $region33
  $region32: #{my_new_gcn_forward.9} parent=0 // pred_region
    _
  $region33: #{my_new_gcn_forward.9} parent=0 // pred_fallthru
    _

// kernel: my_new_gcn_forward.10
$region0: #{my_new_gcn_forward.10}
  #allocation0 [shape = 'u32[]', space=smem, size = 0x4, offset = 0x4, fixed_abs, tag = 'smem constant byte address 0x4 - core index']
  #allocation1 [shape = 'u32[144,128]{1,0:T(1,128)}', space=vmem, size = 0x12000, scoped, tag = 'internal scratch']
  #allocation2 [shape = 'f32[32,48]{1,0:T(8,128)}', space=vmem, size = 0x4000, scoped, tag = 'scratch operand']
  %s0 = inlined_call_operand.vmem [shape: bf16[32,32], index: 0, kind: input, shape index: {}]
  %s1 = inlined_call_operand.vmem [shape: bf16[32,96], index: 1, kind: input, shape index: {}]
  %s2 = inlined_call_operand.vmem [shape: bf16[96,48], index: 2, kind: input, shape index: {}]
  %s3 = inlined_call_operand.vmem [shape: f32[1,48], index: 3, kind: input, shape index: {}]
  %s4 = inlined_call_operand.vmem [shape: f32[32,48], index: 4, kind: output, shape index: {}]
  %s5 = sld [smem:[#allocation0]]
  $region34: #{my_new_gcn_forward.10} parent=0
    _
  %s7 = ssub.s32 1, %s5
  %s8 = scalar_select 0, %s7, %s5
  // Predicated region
  $region2: #{my_new_gcn_forward.10} parent=0 // pred_check
    _
  $region3: #{my_new_gcn_forward.10} parent=0 // pred_check_branch
    %10 = sbr.rel (0) target = $region5
  $region4: #{my_new_gcn_forward.10} parent=0 // pred_region
    _
  $region5: #{my_new_gcn_forward.10} parent=0 // pred_fallthru
    _
  // Predicated region
  $region6: #{my_new_gcn_forward.10} parent=0 // pred_check
    _
  $region7: #{my_new_gcn_forward.10} parent=0 // pred_check_branch
    %12 = sbr.rel (0) target = $region9
  $region8: #{my_new_gcn_forward.10} parent=0 // pred_region
    _
  $region9: #{my_new_gcn_forward.10} parent=0 // pred_fallthru
    _
  // Predicated region
  $region10: #{my_new_gcn_forward.10} parent=0 // pred_check
    _
  $region11: #{my_new_gcn_forward.10} parent=0 // pred_check_branch
    %14 = sbr.rel (0) target = $region13
  $region12: #{my_new_gcn_forward.10} parent=0 // pred_region
    _
  $region13: #{my_new_gcn_forward.10} parent=0 // pred_fallthru
    _
  // Predicated region
  $region14: #{my_new_gcn_forward.10} parent=0 // pred_check
    _
  $region15: #{my_new_gcn_forward.10} parent=0 // pred_check_branch
    %16 = sbr.rel (0) target = $region17
  $region16: #{my_new_gcn_forward.10} parent=0 // pred_region
    _
  $region17: #{my_new_gcn_forward.10} parent=0 // pred_fallthru
    _
  %p18 = scmp.eq.s32.totalorder 0, 0
  // Predicated region
  $region18: #{my_new_gcn_forward.10} parent=0 // pred_check
    %p19 = pneg %p18
  $region19: #{my_new_gcn_forward.10} parent=0 // pred_check_branch
    %21 = sbr.rel (%p19) target = $region21
  $region20: #{my_new_gcn_forward.10} parent=0 // pred_region
    %vm22 = vcmask 392192
    %23 = vst.msk [vmem:[#allocation2] sm:$0xff] %vm22, 0.0
    %24 = vst.msk [vmem:[#allocation2 + $0x8] sm:$0xff] %vm22, 0.0
    %25 = vst.msk [vmem:[#allocation2 + $0x10] sm:$0xff] %vm22, 0.0
    %26 = vst.msk [vmem:[#allocation2 + $0x18] sm:$0xff] %vm22, 0.0
  $region21: #{my_new_gcn_forward.10} parent=0 // pred_fallthru
    _
  %v27 = vld [vmem:[%s1] sm:$0xf]
  %v28 = vld [vmem:[%s1 + $0x4] sm:$0xf]
  %v29 = vld [vmem:[%s1 + $0x8] sm:$0xf]
  %v30 = vld [vmem:[%s1 + $0xc] sm:$0xf]
  %v31 = vld [vmem:[%s2] sm:$0xf]
  %v32 = vld [vmem:[%s2 + $0x4] sm:$0xf]
  %v33 = vld [vmem:[%s2 + $0x8] sm:$0xf]
  %v34 = vld [vmem:[%s2 + $0xc] sm:$0xf]
  %v35 = vld [vmem:[%s2 + $0x10] sm:$0xf]
  %v36 = vld [vmem:[%s2 + $0x14] sm:$0xf]
  %v37 = vld [vmem:[%s2 + $0x18] sm:$0xf]
  %v38 = vld [vmem:[%s2 + $0x1c] sm:$0xf]
  %v39 = vld [vmem:[%s2 + $0x20] sm:$0xf]
  %v40 = vld [vmem:[%s2 + $0x24] sm:$0xf]
  %v41 = vld [vmem:[%s2 + $0x28] sm:$0xf]
  %v42 = vld [vmem:[%s2 + $0x2c] sm:$0xf]
  %v47 = vunpack.c.l.b16 %v27
  %v48 = vunpack.c.l.b16 %v28
  %v49 = vunpack.c.l.b16 %v29
  %v50 = vunpack.c.l.b16 %v30
  %v51 = vpack.c.b16 %v48, %v47
  %v52 = vpack.c.b16 %v50, %v49
  %v65 = vunpack.c.l.b16 %v31
  %v66 = vunpack.c.l.b16 %v32
  %v67 = vunpack.c.l.b16 %v33
  %v68 = vunpack.c.l.b16 %v34
  %v69 = vunpack.c.l.b16 %v35
  %v70 = vunpack.c.l.b16 %v36
  %v71 = vunpack.c.l.b16 %v37
  %v72 = vunpack.c.l.b16 %v38
  %v73 = vunpack.c.l.b16 %v39
  %v74 = vunpack.c.l.b16 %v40
  %v75 = vunpack.c.l.b16 %v41
  %v76 = vunpack.c.l.b16 %v42
  %v77 = vpack.c.b16 %v66, %v65
  %v78 = vpack.c.b16 %v68, %v67
  %v79 = vpack.c.b16 %v70, %v69
  %v80 = vpack.c.b16 %v72, %v71
  %v81 = vpack.c.b16 %v74, %v73
  %v82 = vpack.c.b16 %v76, %v75
  %vm89 = vcmask 785408
  %v91 = vsel %vm89, %v51, 0
  %v94 = vsel %vm89, %v52, 0
  %96 = vmatprep.subr.bf16.mxu0 0
  %97 = vmatpush1.bf16.msra.mxu0 %v77
  %98 = vmatprep.subr.bf16.mxu0 0
  %99 = vmatpush1.bf16.msra.mxu0 %v78
  %100 = vmatprep.subr.bf16.mxu0 0
  %101 = vmatpush1.bf16.msra.mxu0 %v79
  %102 = vmatprep.subr.bf16.mxu0 0
  %103 = vmatpush1.bf16.msra.mxu0 %v80
  %104 = vmatprep.subr.bf16.mxu0 0
  %105 = vmatpush1.bf16.msra.mxu0 %v81
  %106 = vmatprep.subr.bf16.mxu0 0
  %107 = vmatpush1.bf16.msra.mxu0 %v82
  %108 = vmatprep.subr.bf16.mxu0 0
  %109 = vmatpush1.bf16.msra.mxu0 0
  %110 = vmatprep.subr.bf16.mxu0 0
  %111 = vmatpush1.bf16.msra.mxu0 0
  %112 = vmatprep.subr.bf16.mxu0 0
  %113 = vmatpush1.bf16.msra.mxu0 0
  %114 = vmatprep.subr.bf16.mxu0 0
  %115 = vmatpush1.bf16.msra.mxu0 0
  %116 = vmatprep.subr.bf16.mxu0 0
  %117 = vmatpush1.bf16.msra.mxu0 0
  %118 = vmatprep.subr.bf16.mxu0 0
  %119 = vmatpush1.bf16.msra.mxu0 0
  %120 = vmatprep.subr.bf16.mxu0 0
  %121 = vmatpush1.bf16.msra.mxu0 0
  %122 = vmatprep.subr.bf16.mxu0 0
  %123 = vmatpush1.bf16.msra.mxu0 0
  %124 = vmatprep.subr.bf16.mxu0 0
  %125 = vmatpush1.bf16.msra.mxu0 0
  %126 = vmatprep.subr.bf16.mxu0 0
  %127 = vmatpush1.bf16.msra.mxu0 0
  %128 = vmatprep.mubr.bf16.mxu0 0
  %129 = vmatmul.mubr.bf16.gmra.mrb[0].mxu0 %v91
  %v130 = vpop.f32.mrb[0].mxu0
  %v131 = vadd.f32 0.0, %v130
  %v132 = vpop.f32.mrb[0].mxu0
  %v133 = vpop.f32.mrb[0].mxu0
  %v134 = vadd.f32 0.0, %v133
  %v135 = vpop.f32.mrb[0].mxu0
  %136 = vmatprep.mubr.bf16.mxu0 0
  %137 = vmatmul.mubr.bf16.gmra.mrb[0].mxu0 %v94
  %v138 = vpop.f32.mrb[0].mxu0
  %v139 = vadd.f32 0.0, %v138
  %v140 = vpop.f32.mrb[0].mxu0
  %v141 = vpop.f32.mrb[0].mxu0
  %v142 = vadd.f32 0.0, %v141
  %v143 = vpop.f32.mrb[0].mxu0
  %144 = vdwg.mxu0
  %v145 = vld [vmem:[#allocation2] sm:$0xff]
  %v146 = vld [vmem:[#allocation2 + $0x8] sm:$0xff]
  %v147 = vld [vmem:[#allocation2 + $0x10] sm:$0xff]
  %v148 = vld [vmem:[#allocation2 + $0x18] sm:$0xff]
  %v149 = vld [vmem:[%s0] sm:$0xf]
  %v150 = vld [vmem:[%s0 + $0x4] sm:$0xf]
  %v151 = vld [vmem:[%s0 + $0x8] sm:$0xf]
  %v152 = vld [vmem:[%s0 + $0xc] sm:$0xf]
  %v153 = vpack.c.bf16 %v134, %v131
  %v154 = vpack.c.bf16 %v142, %v139
  %v159 = vunpack.c.l.b16 %v149
  %v160 = vunpack.c.l.b16 %v150
  %v161 = vunpack.c.l.b16 %v151
  %v162 = vunpack.c.l.b16 %v152
  %v163 = vpack.c.b16 %v160, %v159
  %v164 = vpack.c.b16 %v162, %v161
  %vm165 = vcmask 261120
  %v167 = vsel %vm165, %v163, 0
  %v170 = vsel %vm165, %v164, 0
  %172 = vmatprep.subr.bf16.mxu0 0
  %173 = vmatpush1.bf16.msra.mxu0 %v153
  %174 = vmatprep.subr.bf16.mxu0 0
  %175 = vmatpush1.bf16.msra.mxu0 %v154
  %176 = vmatprep.subr.bf16.mxu0 0
  %177 = vmatpush1.bf16.msra.mxu0 0
  %178 = vmatprep.subr.bf16.mxu0 0
  %179 = vmatpush1.bf16.msra.mxu0 0
  %180 = vmatprep.subr.bf16.mxu0 0
  %181 = vmatpush1.bf16.msra.mxu0 0
  %182 = vmatprep.subr.bf16.mxu0 0
  %183 = vmatpush1.bf16.msra.mxu0 0
  %184 = vmatprep.subr.bf16.mxu0 0
  %185 = vmatpush1.bf16.msra.mxu0 0
  %186 = vmatprep.subr.bf16.mxu0 0
  %187 = vmatpush1.bf16.msra.mxu0 0
  %188 = vmatprep.subr.bf16.mxu0 0
  %189 = vmatpush1.bf16.msra.mxu0 0
  %190 = vmatprep.subr.bf16.mxu0 0
  %191 = vmatpush1.bf16.msra.mxu0 0
  %192 = vmatprep.subr.bf16.mxu0 0
  %193 = vmatpush1.bf16.msra.mxu0 0
  %194 = vmatprep.subr.bf16.mxu0 0
  %195 = vmatpush1.bf16.msra.mxu0 0
  %196 = vmatprep.subr.bf16.mxu0 0
  %197 = vmatpush1.bf16.msra.mxu0 0
  %198 = vmatprep.subr.bf16.mxu0 0
  %199 = vmatpush1.bf16.msra.mxu0 0
  %200 = vmatprep.subr.bf16.mxu0 0
  %201 = vmatpush1.bf16.msra.mxu0 0
  %202 = vmatprep.subr.bf16.mxu0 0
  %203 = vmatpush1.bf16.msra.mxu0 0
  %204 = vmatprep.mubr.bf16.mxu0 0
  %205 = vmatmul.mubr.bf16.gmra.mrb[0].mxu0 %v167
  %v206 = vpop.f32.mrb[0].mxu0
  %v207 = vadd.f32 0.0, %v206
  %v208 = vpop.f32.mrb[0].mxu0
  %v209 = vpop.f32.mrb[0].mxu0
  %v210 = vadd.f32 0.0, %v209
  %v211 = vpop.f32.mrb[0].mxu0
  %212 = vmatprep.mubr.bf16.mxu0 0
  %213 = vmatmul.mubr.bf16.gmra.mrb[0].mxu0 %v170
  %v214 = vpop.f32.mrb[0].mxu0
  %v215 = vadd.f32 0.0, %v214
  %v216 = vpop.f32.mrb[0].mxu0
  %v217 = vpop.f32.mrb[0].mxu0
  %v218 = vadd.f32 0.0, %v217
  %v219 = vpop.f32.mrb[0].mxu0
  %220 = vdwg.mxu0
  %v221 = vadd.f32 %v145, %v207
  %v222 = vadd.f32 %v146, %v210
  %v223 = vadd.f32 %v147, %v215
  %v224 = vadd.f32 %v148, %v218
  %vm225 = vcmask 392192
  %226 = vst.msk [vmem:[#allocation2] sm:$0xff] %vm225, %v221
  %227 = vst.msk [vmem:[#allocation2 + $0x8] sm:$0xff] %vm225, %v222
  %228 = vst.msk [vmem:[#allocation2 + $0x10] sm:$0xff] %vm225, %v223
  %229 = vst.msk [vmem:[#allocation2 + $0x18] sm:$0xff] %vm225, %v224
  // Predicated region
  $region22: #{my_new_gcn_forward.10} parent=0 // pred_check
    %p230 = pneg %p18
  $region23: #{my_new_gcn_forward.10} parent=0 // pred_check_branch
    %232 = sbr.rel (%p230) target = $region25
  $region24: #{my_new_gcn_forward.10} parent=0 // pred_region
    %v233 = vld [vmem:[#allocation2] sm:$0xff]
    %v234 = vld [vmem:[#allocation2 + $0x8] sm:$0xff]
    %v235 = vld [vmem:[#allocation2 + $0x10] sm:$0xff]
    %v236 = vld [vmem:[#allocation2 + $0x18] sm:$0xff]
    %v237 = vld [vmem:[%s3] sm:$0x1]
    %v239 = vlaneseq
    %v240 = vshrl.u32 %v239, 7
    %v241 = vsub.s32 0, %v240
    %v242 = vrot.slane %v237, %v241
    %v244 = vadd.f32 %v233, %v242
    %v245 = vadd.f32 %v234, %v242
    %v246 = vadd.f32 %v235, %v242
    %v247 = vadd.f32 %v236, %v242
    %248 = vst.msk [vmem:[%s4] sm:$0xff] %vm225, %v244
    %249 = vst.msk [vmem:[%s4 + $0x8] sm:$0xff] %vm225, %v245
    %250 = vst.msk [vmem:[%s4 + $0x10] sm:$0xff] %vm225, %v246
    %251 = vst.msk [vmem:[%s4 + $0x18] sm:$0xff] %vm225, %v247
  $region25: #{my_new_gcn_forward.10} parent=0 // pred_fallthru
    _
  // Predicated region
  $region26: #{my_new_gcn_forward.10} parent=0 // pred_check
    _
  $region27: #{my_new_gcn_forward.10} parent=0 // pred_check_branch
    %253 = sbr.rel (0) target = $region29
  $region28: #{my_new_gcn_forward.10} parent=0 // pred_region
    _
  $region29: #{my_new_gcn_forward.10} parent=0 // pred_fallthru
    _
  // Predicated region
  $region30: #{my_new_gcn_forward.10} parent=0 // pred_check
    _
  $region31: #{my_new_gcn_forward.10} parent=0 // pred_check_branch
    %255 = sbr.rel (0) target = $region33
  $region32: #{my_new_gcn_forward.10} parent=0 // pred_region
    _
  $region33: #{my_new_gcn_forward.10} parent=0 // pred_fallthru
    _

// kernel: my_new_gcn_forward.16
$region0: #{my_new_gcn_forward.16}
  #allocation0 [shape = 'u32[]', space=smem, size = 0x4, offset = 0x4, fixed_abs, tag = 'smem constant byte address 0x4 - core index']
  #allocation1 [shape = 'u32[144,128]{1,0:T(1,128)}', space=vmem, size = 0x12000, scoped, tag = 'internal scratch']
  #allocation2 [shape = 'f32[128,16]{1,0:T(8,128)}', space=vmem, size = 0x10000, scoped, tag = 'scratch operand']
  %s0 = inlined_call_operand.vmem [shape: bf16[128,128], index: 0, kind: input, shape index: {}]
  %s1 = inlined_call_operand.vmem [shape: bf16[128,32], index: 1, kind: input, shape index: {}]
  %s2 = inlined_call_operand.vmem [shape: bf16[32,16], index: 2, kind: input, shape index: {}]
  %s3 = inlined_call_operand.vmem [shape: f32[1,16], index: 3, kind: input, shape index: {}]
  %s4 = inlined_call_operand.vmem [shape: f32[128,16], index: 4, kind: output, shape index: {}]
  %s5 = sld [smem:[#allocation0]]
  $region34: #{my_new_gcn_forward.16} parent=0
    _
  %s7 = ssub.s32 1, %s5
  %s8 = scalar_select 0, %s7, %s5
  // Predicated region
  $region2: #{my_new_gcn_forward.16} parent=0 // pred_check
    _
  $region3: #{my_new_gcn_forward.16} parent=0 // pred_check_branch
    %10 = sbr.rel (0) target = $region5
  $region4: #{my_new_gcn_forward.16} parent=0 // pred_region
    _
  $region5: #{my_new_gcn_forward.16} parent=0 // pred_fallthru
    _
  // Predicated region
  $region6: #{my_new_gcn_forward.16} parent=0 // pred_check
    _
  $region7: #{my_new_gcn_forward.16} parent=0 // pred_check_branch
    %12 = sbr.rel (0) target = $region9
  $region8: #{my_new_gcn_forward.16} parent=0 // pred_region
    _
  $region9: #{my_new_gcn_forward.16} parent=0 // pred_fallthru
    _
  // Predicated region
  $region10: #{my_new_gcn_forward.16} parent=0 // pred_check
    _
  $region11: #{my_new_gcn_forward.16} parent=0 // pred_check_branch
    %14 = sbr.rel (0) target = $region13
  $region12: #{my_new_gcn_forward.16} parent=0 // pred_region
    _
  $region13: #{my_new_gcn_forward.16} parent=0 // pred_fallthru
    _
  // Predicated region
  $region14: #{my_new_gcn_forward.16} parent=0 // pred_check
    _
  $region15: #{my_new_gcn_forward.16} parent=0 // pred_check_branch
    %16 = sbr.rel (0) target = $region17
  $region16: #{my_new_gcn_forward.16} parent=0 // pred_region
    _
  $region17: #{my_new_gcn_forward.16} parent=0 // pred_fallthru
    _
  %p18 = scmp.eq.s32.totalorder 0, 0
  // Predicated region
  $region18: #{my_new_gcn_forward.16} parent=0 // pred_check
    %p19 = pneg %p18
  $region19: #{my_new_gcn_forward.16} parent=0 // pred_check_branch
    %21 = sbr.rel (%p19) target = $region21
  $region20: #{my_new_gcn_forward.16} parent=0 // pred_region
    %vm22 = vcmask 130048
    %23 = vst.msk [vmem:[#allocation2] sm:$0xff] %vm22, 0.0
    %24 = vst.msk [vmem:[#allocation2 + $0x8] sm:$0xff] %vm22, 0.0
    %25 = vst.msk [vmem:[#allocation2 + $0x10] sm:$0xff] %vm22, 0.0
    %26 = vst.msk [vmem:[#allocation2 + $0x18] sm:$0xff] %vm22, 0.0
    %27 = vst.msk [vmem:[#allocation2 + $0x20] sm:$0xff] %vm22, 0.0
    %28 = vst.msk [vmem:[#allocation2 + $0x28] sm:$0xff] %vm22, 0.0
    %29 = vst.msk [vmem:[#allocation2 + $0x30] sm:$0xff] %vm22, 0.0
    %30 = vst.msk [vmem:[#allocation2 + $0x38] sm:$0xff] %vm22, 0.0
    %31 = vst.msk [vmem:[#allocation2 + $0x40] sm:$0xff] %vm22, 0.0
    %32 = vst.msk [vmem:[#allocation2 + $0x48] sm:$0xff] %vm22, 0.0
    %33 = vst.msk [vmem:[#allocation2 + $0x50] sm:$0xff] %vm22, 0.0
    %34 = vst.msk [vmem:[#allocation2 + $0x58] sm:$0xff] %vm22, 0.0
    %35 = vst.msk [vmem:[#allocation2 + $0x60] sm:$0xff] %vm22, 0.0
    %36 = vst.msk [vmem:[#allocation2 + $0x68] sm:$0xff] %vm22, 0.0
    %37 = vst.msk [vmem:[#allocation2 + $0x70] sm:$0xff] %vm22, 0.0
    %38 = vst.msk [vmem:[#allocation2 + $0x78] sm:$0xff] %vm22, 0.0
  $region21: #{my_new_gcn_forward.16} parent=0 // pred_fallthru
    _
  %v39 = vld [vmem:[%s1] sm:$0xf]
  %v40 = vld [vmem:[%s1 + $0x4] sm:$0xf]
  %v41 = vld [vmem:[%s1 + $0x8] sm:$0xf]
  %v42 = vld [vmem:[%s1 + $0xc] sm:$0xf]
  %v43 = vld [vmem:[%s1 + $0x10] sm:$0xf]
  %v44 = vld [vmem:[%s1 + $0x14] sm:$0xf]
  %v45 = vld [vmem:[%s1 + $0x18] sm:$0xf]
  %v46 = vld [vmem:[%s1 + $0x1c] sm:$0xf]
  %v47 = vld [vmem:[%s1 + $0x20] sm:$0xf]
  %v48 = vld [vmem:[%s1 + $0x24] sm:$0xf]
  %v49 = vld [vmem:[%s1 + $0x28] sm:$0xf]
  %v50 = vld [vmem:[%s1 + $0x2c] sm:$0xf]
  %v51 = vld [vmem:[%s1 + $0x30] sm:$0xf]
  %v52 = vld [vmem:[%s1 + $0x34] sm:$0xf]
  %v53 = vld [vmem:[%s1 + $0x38] sm:$0xf]
  %v54 = vld [vmem:[%s1 + $0x3c] sm:$0xf]
  %v55 = vld [vmem:[%s2] sm:$0xf]
  %v56 = vld [vmem:[%s2 + $0x4] sm:$0xf]
  %v57 = vld [vmem:[%s2 + $0x8] sm:$0xf]
  %v58 = vld [vmem:[%s2 + $0xc] sm:$0xf]
  %v75 = vunpack.c.l.b16 %v39
  %v76 = vunpack.c.l.b16 %v40
  %v77 = vunpack.c.l.b16 %v41
  %v78 = vunpack.c.l.b16 %v42
  %v79 = vunpack.c.l.b16 %v43
  %v80 = vunpack.c.l.b16 %v44
  %v81 = vunpack.c.l.b16 %v45
  %v82 = vunpack.c.l.b16 %v46
  %v83 = vunpack.c.l.b16 %v47
  %v84 = vunpack.c.l.b16 %v48
  %v85 = vunpack.c.l.b16 %v49
  %v86 = vunpack.c.l.b16 %v50
  %v87 = vunpack.c.l.b16 %v51
  %v88 = vunpack.c.l.b16 %v52
  %v89 = vunpack.c.l.b16 %v53
  %v90 = vunpack.c.l.b16 %v54
  %v91 = vpack.c.b16 %v76, %v75
  %v92 = vpack.c.b16 %v78, %v77
  %v93 = vpack.c.b16 %v80, %v79
  %v94 = vpack.c.b16 %v82, %v81
  %v95 = vpack.c.b16 %v84, %v83
  %v96 = vpack.c.b16 %v86, %v85
  %v97 = vpack.c.b16 %v88, %v87
  %v98 = vpack.c.b16 %v90, %v89
  %v103 = vunpack.c.l.b16 %v55
  %v104 = vunpack.c.l.b16 %v56
  %v105 = vunpack.c.l.b16 %v57
  %v106 = vunpack.c.l.b16 %v58
  %v107 = vpack.c.b16 %v104, %v103
  %v108 = vpack.c.b16 %v106, %v105
  %vm111 = vcmask 261120
  %v113 = vsel %vm111, %v91, 0
  %v116 = vsel %vm111, %v92, 0
  %v119 = vsel %vm111, %v93, 0
  %v122 = vsel %vm111, %v94, 0
  %v125 = vsel %vm111, %v95, 0
  %v128 = vsel %vm111, %v96, 0
  %v131 = vsel %vm111, %v97, 0
  %v134 = vsel %vm111, %v98, 0
  %136 = vmatprep.subr.bf16.mxu0 0
  %137 = vmatpush1.bf16.msra.mxu0 %v107
  %138 = vmatprep.subr.bf16.mxu0 0
  %139 = vmatpush1.bf16.msra.mxu0 %v108
  %140 = vmatprep.subr.bf16.mxu0 0
  %141 = vmatpush1.bf16.msra.mxu0 0
  %142 = vmatprep.subr.bf16.mxu0 0
  %143 = vmatpush1.bf16.msra.mxu0 0
  %144 = vmatprep.subr.bf16.mxu0 0
  %145 = vmatpush1.bf16.msra.mxu0 0
  %146 = vmatprep.subr.bf16.mxu0 0
  %147 = vmatpush1.bf16.msra.mxu0 0
  %148 = vmatprep.subr.bf16.mxu0 0
  %149 = vmatpush1.bf16.msra.mxu0 0
  %150 = vmatprep.subr.bf16.mxu0 0
  %151 = vmatpush1.bf16.msra.mxu0 0
  %152 = vmatprep.subr.bf16.mxu0 0
  %153 = vmatpush1.bf16.msra.mxu0 0
  %154 = vmatprep.subr.bf16.mxu0 0
  %155 = vmatpush1.bf16.msra.mxu0 0
  %156 = vmatprep.subr.bf16.mxu0 0
  %157 = vmatpush1.bf16.msra.mxu0 0
  %158 = vmatprep.subr.bf16.mxu0 0
  %159 = vmatpush1.bf16.msra.mxu0 0
  %160 = vmatprep.subr.bf16.mxu0 0
  %161 = vmatpush1.bf16.msra.mxu0 0
  %162 = vmatprep.subr.bf16.mxu0 0
  %163 = vmatpush1.bf16.msra.mxu0 0
  %164 = vmatprep.subr.bf16.mxu0 0
  %165 = vmatpush1.bf16.msra.mxu0 0
  %166 = vmatprep.subr.bf16.mxu0 0
  %167 = vmatpush1.bf16.msra.mxu0 0
  %168 = vmatprep.mubr.bf16.mxu0 0
  %169 = vmatmul.mubr.bf16.gmra.mrb[0].mxu0 %v113
  %v170 = vpop.f32.mrb[0].mxu0
  %v171 = vadd.f32 0.0, %v170
  %v172 = vpop.f32.mrb[0].mxu0
  %v173 = vpop.f32.mrb[0].mxu0
  %v174 = vadd.f32 0.0, %v173
  %v175 = vpop.f32.mrb[0].mxu0
  %176 = vmatprep.mubr.bf16.mxu0 0
  %177 = vmatmul.mubr.bf16.gmra.mrb[0].mxu0 %v116
  %v178 = vpop.f32.mrb[0].mxu0
  %v179 = vadd.f32 0.0, %v178
  %v180 = vpop.f32.mrb[0].mxu0
  %v181 = vpop.f32.mrb[0].mxu0
  %v182 = vadd.f32 0.0, %v181
  %v183 = vpop.f32.mrb[0].mxu0
  %184 = vmatprep.mubr.bf16.mxu0 0
  %185 = vmatmul.mubr.bf16.gmra.mrb[0].mxu0 %v119
  %v186 = vpop.f32.mrb[0].mxu0
  %v187 = vadd.f32 0.0, %v186
  %v188 = vpop.f32.mrb[0].mxu0
  %v189 = vpop.f32.mrb[0].mxu0
  %v190 = vadd.f32 0.0, %v189
  %v191 = vpop.f32.mrb[0].mxu0
  %192 = vmatprep.mubr.bf16.mxu0 0
  %193 = vmatmul.mubr.bf16.gmra.mrb[0].mxu0 %v122
  %v194 = vpop.f32.mrb[0].mxu0
  %v195 = vadd.f32 0.0, %v194
  %v196 = vpop.f32.mrb[0].mxu0
  %v197 = vpop.f32.mrb[0].mxu0
  %v198 = vadd.f32 0.0, %v197
  %v199 = vpop.f32.mrb[0].mxu0
  %200 = vmatprep.mubr.bf16.mxu0 0
  %201 = vmatmul.mubr.bf16.gmra.mrb[0].mxu0 %v125
  %v202 = vpop.f32.mrb[0].mxu0
  %v203 = vadd.f32 0.0, %v202
  %v204 = vpop.f32.mrb[0].mxu0
  %v205 = vpop.f32.mrb[0].mxu0
  %v206 = vadd.f32 0.0, %v205
  %v207 = vpop.f32.mrb[0].mxu0
  %208 = vmatprep.mubr.bf16.mxu0 0
  %209 = vmatmul.mubr.bf16.gmra.mrb[0].mxu0 %v128
  %v210 = vpop.f32.mrb[0].mxu0
  %v211 = vadd.f32 0.0, %v210
  %v212 = vpop.f32.mrb[0].mxu0
  %v213 = vpop.f32.mrb[0].mxu0
  %v214 = vadd.f32 0.0, %v213
  %v215 = vpop.f32.mrb[0].mxu0
  %216 = vmatprep.mubr.bf16.mxu0 0
  %217 = vmatmul.mubr.bf16.gmra.mrb[0].mxu0 %v131
  %v218 = vpop.f32.mrb[0].mxu0
  %v219 = vadd.f32 0.0, %v218
  %v220 = vpop.f32.mrb[0].mxu0
  %v221 = vpop.f32.mrb[0].mxu0
  %v222 = vadd.f32 0.0, %v221
  %v223 = vpop.f32.mrb[0].mxu0
  %224 = vmatprep.mubr.bf16.mxu0 0
  %225 = vmatmul.mubr.bf16.gmra.mrb[0].mxu0 %v134
  %v226 = vpop.f32.mrb[0].mxu0
  %v227 = vadd.f32 0.0, %v226
  %v228 = vpop.f32.mrb[0].mxu0
  %v229 = vpop.f32.mrb[0].mxu0
  %v230 = vadd.f32 0.0, %v229
  %v231 = vpop.f32.mrb[0].mxu0
  %232 = vdwg.mxu0
  %v233 = vld [vmem:[#allocation2] sm:$0xff]
  %v234 = vld [vmem:[#allocation2 + $0x8] sm:$0xff]
  %v235 = vld [vmem:[#allocation2 + $0x10] sm:$0xff]
  %v236 = vld [vmem:[#allocation2 + $0x18] sm:$0xff]
  %v237 = vld [vmem:[#allocation2 + $0x20] sm:$0xff]
  %v238 = vld [vmem:[#allocation2 + $0x28] sm:$0xff]
  %v239 = vld [vmem:[#allocation2 + $0x30] sm:$0xff]
  %v240 = vld [vmem:[#allocation2 + $0x38] sm:$0xff]
  %v241 = vld [vmem:[#allocation2 + $0x40] sm:$0xff]
  %v242 = vld [vmem:[#allocation2 + $0x48] sm:$0xff]
  %v243 = vld [vmem:[#allocation2 + $0x50] sm:$0xff]
  %v244 = vld [vmem:[#allocation2 + $0x58] sm:$0xff]
  %v245 = vld [vmem:[#allocation2 + $0x60] sm:$0xff]
  %v246 = vld [vmem:[#allocation2 + $0x68] sm:$0xff]
  %v247 = vld [vmem:[#allocation2 + $0x70] sm:$0xff]
  %v248 = vld [vmem:[#allocation2 + $0x78] sm:$0xff]
  %v249 = vld [vmem:[%s0] sm:$0xf]
  %v250 = vld [vmem:[%s0 + $0x4] sm:$0xf]
  %v251 = vld [vmem:[%s0 + $0x8] sm:$0xf]
  %v252 = vld [vmem:[%s0 + $0xc] sm:$0xf]
  %v253 = vld [vmem:[%s0 + $0x10] sm:$0xf]
  %v254 = vld [vmem:[%s0 + $0x14] sm:$0xf]
  %v255 = vld [vmem:[%s0 + $0x18] sm:$0xf]
  %v256 = vld [vmem:[%s0 + $0x1c] sm:$0xf]
  %v257 = vld [vmem:[%s0 + $0x20] sm:$0xf]
  %v258 = vld [vmem:[%s0 + $0x24] sm:$0xf]
  %v259 = vld [vmem:[%s0 + $0x28] sm:$0xf]
  %v260 = vld [vmem:[%s0 + $0x2c] sm:$0xf]
  %v261 = vld [vmem:[%s0 + $0x30] sm:$0xf]
  %v262 = vld [vmem:[%s0 + $0x34] sm:$0xf]
  %v263 = vld [vmem:[%s0 + $0x38] sm:$0xf]
  %v264 = vld [vmem:[%s0 + $0x3c] sm:$0xf]
  %v265 = vpack.c.bf16 %v174, %v171
  %v266 = vpack.c.bf16 %v182, %v179
  %v267 = vpack.c.bf16 %v190, %v187
  %v268 = vpack.c.bf16 %v198, %v195
  %v269 = vpack.c.bf16 %v206, %v203
  %v270 = vpack.c.bf16 %v214, %v211
  %v271 = vpack.c.bf16 %v222, %v219
  %v272 = vpack.c.bf16 %v230, %v227
  %v289 = vunpack.c.l.b16 %v249
  %v290 = vunpack.c.l.b16 %v250
  %v291 = vunpack.c.l.b16 %v251
  %v292 = vunpack.c.l.b16 %v252
  %v293 = vunpack.c.l.b16 %v253
  %v294 = vunpack.c.l.b16 %v254
  %v295 = vunpack.c.l.b16 %v255
  %v296 = vunpack.c.l.b16 %v256
  %v297 = vunpack.c.l.b16 %v257
  %v298 = vunpack.c.l.b16 %v258
  %v299 = vunpack.c.l.b16 %v259
  %v300 = vunpack.c.l.b16 %v260
  %v301 = vunpack.c.l.b16 %v261
  %v302 = vunpack.c.l.b16 %v262
  %v303 = vunpack.c.l.b16 %v263
  %v304 = vunpack.c.l.b16 %v264
  %v305 = vpack.c.b16 %v290, %v289
  %v306 = vpack.c.b16 %v292, %v291
  %v307 = vpack.c.b16 %v294, %v293
  %v308 = vpack.c.b16 %v296, %v295
  %v309 = vpack.c.b16 %v298, %v297
  %v310 = vpack.c.b16 %v300, %v299
  %v311 = vpack.c.b16 %v302, %v301
  %v312 = vpack.c.b16 %v304, %v303
  %321 = vmatprep.subr.bf16.mxu0 0
  %322 = vmatpush1.bf16.msra.mxu0 %v265
  %323 = vmatprep.subr.bf16.mxu0 0
  %324 = vmatpush1.bf16.msra.mxu0 %v266
  %325 = vmatprep.subr.bf16.mxu0 0
  %326 = vmatpush1.bf16.msra.mxu0 %v267
  %327 = vmatprep.subr.bf16.mxu0 0
  %328 = vmatpush1.bf16.msra.mxu0 %v268
  %329 = vmatprep.subr.bf16.mxu0 0
  %330 = vmatpush1.bf16.msra.mxu0 %v269
  %331 = vmatprep.subr.bf16.mxu0 0
  %332 = vmatpush1.bf16.msra.mxu0 %v270
  %333 = vmatprep.subr.bf16.mxu0 0
  %334 = vmatpush1.bf16.msra.mxu0 %v271
  %335 = vmatprep.subr.bf16.mxu0 0
  %336 = vmatpush1.bf16.msra.mxu0 %v272
  %337 = vmatprep.subr.bf16.mxu0 0
  %338 = vmatpush1.bf16.msra.mxu0 0
  %339 = vmatprep.subr.bf16.mxu0 0
  %340 = vmatpush1.bf16.msra.mxu0 0
  %341 = vmatprep.subr.bf16.mxu0 0
  %342 = vmatpush1.bf16.msra.mxu0 0
  %343 = vmatprep.subr.bf16.mxu0 0
  %344 = vmatpush1.bf16.msra.mxu0 0
  %345 = vmatprep.subr.bf16.mxu0 0
  %346 = vmatpush1.bf16.msra.mxu0 0
  %347 = vmatprep.subr.bf16.mxu0 0
  %348 = vmatpush1.bf16.msra.mxu0 0
  %349 = vmatprep.subr.bf16.mxu0 0
  %350 = vmatpush1.bf16.msra.mxu0 0
  %351 = vmatprep.subr.bf16.mxu0 0
  %352 = vmatpush1.bf16.msra.mxu0 0
  %353 = vmatprep.mubr.bf16.mxu0 0
  %354 = vmatmul.mubr.bf16.gmra.mrb[0].mxu0 %v305
  %v355 = vpop.f32.mrb[0].mxu0
  %v356 = vadd.f32 0.0, %v355
  %v357 = vpop.f32.mrb[0].mxu0
  %v358 = vpop.f32.mrb[0].mxu0
  %v359 = vadd.f32 0.0, %v358
  %v360 = vpop.f32.mrb[0].mxu0
  %361 = vmatprep.mubr.bf16.mxu0 0
  %362 = vmatmul.mubr.bf16.gmra.mrb[0].mxu0 %v306
  %v363 = vpop.f32.mrb[0].mxu0
  %v364 = vadd.f32 0.0, %v363
  %v365 = vpop.f32.mrb[0].mxu0
  %v366 = vpop.f32.mrb[0].mxu0
  %v367 = vadd.f32 0.0, %v366
  %v368 = vpop.f32.mrb[0].mxu0
  %369 = vmatprep.mubr.bf16.mxu0 0
  %370 = vmatmul.mubr.bf16.gmra.mrb[0].mxu0 %v307
  %v371 = vpop.f32.mrb[0].mxu0
  %v372 = vadd.f32 0.0, %v371
  %v373 = vpop.f32.mrb[0].mxu0
  %v374 = vpop.f32.mrb[0].mxu0
  %v375 = vadd.f32 0.0, %v374
  %v376 = vpop.f32.mrb[0].mxu0
  %377 = vmatprep.mubr.bf16.mxu0 0
  %378 = vmatmul.mubr.bf16.gmra.mrb[0].mxu0 %v308
  %v379 = vpop.f32.mrb[0].mxu0
  %v380 = vadd.f32 0.0, %v379
  %v381 = vpop.f32.mrb[0].mxu0
  %v382 = vpop.f32.mrb[0].mxu0
  %v383 = vadd.f32 0.0, %v382
  %v384 = vpop.f32.mrb[0].mxu0
  %385 = vmatprep.mubr.bf16.mxu0 0
  %386 = vmatmul.mubr.bf16.gmra.mrb[0].mxu0 %v309
  %v387 = vpop.f32.mrb[0].mxu0
  %v388 = vadd.f32 0.0, %v387
  %v389 = vpop.f32.mrb[0].mxu0
  %v390 = vpop.f32.mrb[0].mxu0
  %v391 = vadd.f32 0.0, %v390
  %v392 = vpop.f32.mrb[0].mxu0
  %393 = vmatprep.mubr.bf16.mxu0 0
  %394 = vmatmul.mubr.bf16.gmra.mrb[0].mxu0 %v310
  %v395 = vpop.f32.mrb[0].mxu0
  %v396 = vadd.f32 0.0, %v395
  %v397 = vpop.f32.mrb[0].mxu0
  %v398 = vpop.f32.mrb[0].mxu0
  %v399 = vadd.f32 0.0, %v398
  %v400 = vpop.f32.mrb[0].mxu0
  %401 = vmatprep.mubr.bf16.mxu0 0
  %402 = vmatmul.mubr.bf16.gmra.mrb[0].mxu0 %v311
  %v403 = vpop.f32.mrb[0].mxu0
  %v404 = vadd.f32 0.0, %v403
  %v405 = vpop.f32.mrb[0].mxu0
  %v406 = vpop.f32.mrb[0].mxu0
  %v407 = vadd.f32 0.0, %v406
  %v408 = vpop.f32.mrb[0].mxu0
  %409 = vmatprep.mubr.bf16.mxu0 0
  %410 = vmatmul.mubr.bf16.gmra.mrb[0].mxu0 %v312
  %v411 = vpop.f32.mrb[0].mxu0
  %v412 = vadd.f32 0.0, %v411
  %v413 = vpop.f32.mrb[0].mxu0
  %v414 = vpop.f32.mrb[0].mxu0
  %v415 = vadd.f32 0.0, %v414
  %v416 = vpop.f32.mrb[0].mxu0
  %417 = vdwg.mxu0
  %v418 = vadd.f32 %v233, %v356
  %v419 = vadd.f32 %v234, %v359
  %v420 = vadd.f32 %v235, %v364
  %v421 = vadd.f32 %v236, %v367
  %v422 = vadd.f32 %v237, %v372
  %v423 = vadd.f32 %v238, %v375
  %v424 = vadd.f32 %v239, %v380
  %v425 = vadd.f32 %v240, %v383
  %v426 = vadd.f32 %v241, %v388
  %v427 = vadd.f32 %v242, %v391
  %v428 = vadd.f32 %v243, %v396
  %v429 = vadd.f32 %v244, %v399
  %v430 = vadd.f32 %v245, %v404
  %v431 = vadd.f32 %v246, %v407
  %v432 = vadd.f32 %v247, %v412
  %v433 = vadd.f32 %v248, %v415
  %vm434 = vcmask 130048
  %435 = vst.msk [vmem:[#allocation2] sm:$0xff] %vm434, %v418
  %436 = vst.msk [vmem:[#allocation2 + $0x8] sm:$0xff] %vm434, %v419
  %437 = vst.msk [vmem:[#allocation2 + $0x10] sm:$0xff] %vm434, %v420
  %438 = vst.msk [vmem:[#allocation2 + $0x18] sm:$0xff] %vm434, %v421
  %439 = vst.msk [vmem:[#allocation2 + $0x20] sm:$0xff] %vm434, %v422
  %440 = vst.msk [vmem:[#allocation2 + $0x28] sm:$0xff] %vm434, %v423
  %441 = vst.msk [vmem:[#allocation2 + $0x30] sm:$0xff] %vm434, %v424
  %442 = vst.msk [vmem:[#allocation2 + $0x38] sm:$0xff] %vm434, %v425
  %443 = vst.msk [vmem:[#allocation2 + $0x40] sm:$0xff] %vm434, %v426
  %444 = vst.msk [vmem:[#allocation2 + $0x48] sm:$0xff] %vm434, %v427
  %445 = vst.msk [vmem:[#allocation2 + $0x50] sm:$0xff] %vm434, %v428
  %446 = vst.msk [vmem:[#allocation2 + $0x58] sm:$0xff] %vm434, %v429
  %447 = vst.msk [vmem:[#allocation2 + $0x60] sm:$0xff] %vm434, %v430
  %448 = vst.msk [vmem:[#allocation2 + $0x68] sm:$0xff] %vm434, %v431
  %449 = vst.msk [vmem:[#allocation2 + $0x70] sm:$0xff] %vm434, %v432
  %450 = vst.msk [vmem:[#allocation2 + $0x78] sm:$0xff] %vm434, %v433
  // Predicated region
  $region22: #{my_new_gcn_forward.16} parent=0 // pred_check
    %p451 = pneg %p18
  $region23: #{my_new_gcn_forward.16} parent=0 // pred_check_branch
    %453 = sbr.rel (%p451) target = $region25
  $region24: #{my_new_gcn_forward.16} parent=0 // pred_region
    %v454 = vld [vmem:[#allocation2] sm:$0xff]
    %v455 = vld [vmem:[#allocation2 + $0x8] sm:$0xff]
    %v456 = vld [vmem:[#allocation2 + $0x10] sm:$0xff]
    %v457 = vld [vmem:[#allocation2 + $0x18] sm:$0xff]
    %v458 = vld [vmem:[#allocation2 + $0x20] sm:$0xff]
    %v459 = vld [vmem:[#allocation2 + $0x28] sm:$0xff]
    %v460 = vld [vmem:[#allocation2 + $0x30] sm:$0xff]
    %v461 = vld [vmem:[#allocation2 + $0x38] sm:$0xff]
    %v462 = vld [vmem:[#allocation2 + $0x40] sm:$0xff]
    %v463 = vld [vmem:[#allocation2 + $0x48] sm:$0xff]
    %v464 = vld [vmem:[#allocation2 + $0x50] sm:$0xff]
    %v465 = vld [vmem:[#allocation2 + $0x58] sm:$0xff]
    %v466 = vld [vmem:[#allocation2 + $0x60] sm:$0xff]
    %v467 = vld [vmem:[#allocation2 + $0x68] sm:$0xff]
    %v468 = vld [vmem:[#allocation2 + $0x70] sm:$0xff]
    %v469 = vld [vmem:[#allocation2 + $0x78] sm:$0xff]
    %v470 = vld [vmem:[%s3] sm:$0x1]
    %v472 = vlaneseq
    %v473 = vshrl.u32 %v472, 7
    %v474 = vsub.s32 0, %v473
    %v475 = vrot.slane %v470, %v474
    %v477 = vadd.f32 %v454, %v475
    %v478 = vadd.f32 %v455, %v475
    %v479 = vadd.f32 %v456, %v475
    %v480 = vadd.f32 %v457, %v475
    %v481 = vadd.f32 %v458, %v475
    %v482 = vadd.f32 %v459, %v475
    %v483 = vadd.f32 %v460, %v475
    %v484 = vadd.f32 %v461, %v475
    %v485 = vadd.f32 %v462, %v475
    %v486 = vadd.f32 %v463, %v475
    %v487 = vadd.f32 %v464, %v475
    %v488 = vadd.f32 %v465, %v475
    %v489 = vadd.f32 %v466, %v475
    %v490 = vadd.f32 %v467, %v475
    %v491 = vadd.f32 %v468, %v475
    %v492 = vadd.f32 %v469, %v475
    %493 = vst.msk [vmem:[%s4] sm:$0xff] %vm434, %v477
    %494 = vst.msk [vmem:[%s4 + $0x8] sm:$0xff] %vm434, %v478
    %495 = vst.msk [vmem:[%s4 + $0x10] sm:$0xff] %vm434, %v479
    %496 = vst.msk [vmem:[%s4 + $0x18] sm:$0xff] %vm434, %v480
    %497 = vst.msk [vmem:[%s4 + $0x20] sm:$0xff] %vm434, %v481
    %498 = vst.msk [vmem:[%s4 + $0x28] sm:$0xff] %vm434, %v482
    %499 = vst.msk [vmem:[%s4 + $0x30] sm:$0xff] %vm434, %v483
    %500 = vst.msk [vmem:[%s4 + $0x38] sm:$0xff] %vm434, %v484
    %501 = vst.msk [vmem:[%s4 + $0x40] sm:$0xff] %vm434, %v485
    %502 = vst.msk [vmem:[%s4 + $0x48] sm:$0xff] %vm434, %v486
    %503 = vst.msk [vmem:[%s4 + $0x50] sm:$0xff] %vm434, %v487
    %504 = vst.msk [vmem:[%s4 + $0x58] sm:$0xff] %vm434, %v488
    %505 = vst.msk [vmem:[%s4 + $0x60] sm:$0xff] %vm434, %v489
    %506 = vst.msk [vmem:[%s4 + $0x68] sm:$0xff] %vm434, %v490
    %507 = vst.msk [vmem:[%s4 + $0x70] sm:$0xff] %vm434, %v491
    %508 = vst.msk [vmem:[%s4 + $0x78] sm:$0xff] %vm434, %v492
  $region25: #{my_new_gcn_forward.16} parent=0 // pred_fallthru
    _
  // Predicated region
  $region26: #{my_new_gcn_forward.16} parent=0 // pred_check
    _
  $region27: #{my_new_gcn_forward.16} parent=0 // pred_check_branch
    %510 = sbr.rel (0) target = $region29
  $region28: #{my_new_gcn_forward.16} parent=0 // pred_region
    _
  $region29: #{my_new_gcn_forward.16} parent=0 // pred_fallthru
    _
  // Predicated region
  $region30: #{my_new_gcn_forward.16} parent=0 // pred_check
    _
  $region31: #{my_new_gcn_forward.16} parent=0 // pred_check_branch
    %512 = sbr.rel (0) target = $region33
  $region32: #{my_new_gcn_forward.16} parent=0 // pred_region
    _
  $region33: #{my_new_gcn_forward.16} parent=0 // pred_fallthru
    _

// kernel: my_new_gcn_forward.15
$region0: #{my_new_gcn_forward.15}
  #allocation0 [shape = 'u32[]', space=smem, size = 0x4, offset = 0x4, fixed_abs, tag = 'smem constant byte address 0x4 - core index']
  #allocation1 [shape = 'u32[144,128]{1,0:T(1,128)}', space=vmem, size = 0x12000, scoped, tag = 'internal scratch']
  #allocation2 [shape = 'f32[128,32]{1,0:T(8,128)}', space=vmem, size = 0x10000, scoped, tag = 'scratch operand']
  %s0 = inlined_call_operand.vmem [shape: bf16[128,128], index: 0, kind: input, shape index: {}]
  %s1 = inlined_call_operand.vmem [shape: bf16[128,32], index: 1, kind: input, shape index: {}]
  %s2 = inlined_call_operand.vmem [shape: bf16[32,32], index: 2, kind: input, shape index: {}]
  %s3 = inlined_call_operand.vmem [shape: f32[1,32], index: 3, kind: input, shape index: {}]
  %s4 = inlined_call_operand.vmem [shape: bf16[128,32], index: 4, kind: output, shape index: {}]
  %s5 = sld [smem:[#allocation0]]
  $region34: #{my_new_gcn_forward.15} parent=0
    _
  %s7 = ssub.s32 1, %s5
  %s8 = scalar_select 0, %s7, %s5
  // Predicated region
  $region2: #{my_new_gcn_forward.15} parent=0 // pred_check
    _
  $region3: #{my_new_gcn_forward.15} parent=0 // pred_check_branch
    %10 = sbr.rel (0) target = $region5
  $region4: #{my_new_gcn_forward.15} parent=0 // pred_region
    _
  $region5: #{my_new_gcn_forward.15} parent=0 // pred_fallthru
    _
  // Predicated region
  $region6: #{my_new_gcn_forward.15} parent=0 // pred_check
    _
  $region7: #{my_new_gcn_forward.15} parent=0 // pred_check_branch
    %12 = sbr.rel (0) target = $region9
  $region8: #{my_new_gcn_forward.15} parent=0 // pred_region
    _
  $region9: #{my_new_gcn_forward.15} parent=0 // pred_fallthru
    _
  // Predicated region
  $region10: #{my_new_gcn_forward.15} parent=0 // pred_check
    _
  $region11: #{my_new_gcn_forward.15} parent=0 // pred_check_branch
    %14 = sbr.rel (0) target = $region13
  $region12: #{my_new_gcn_forward.15} parent=0 // pred_region
    _
  $region13: #{my_new_gcn_forward.15} parent=0 // pred_fallthru
    _
  // Predicated region
  $region14: #{my_new_gcn_forward.15} parent=0 // pred_check
    _
  $region15: #{my_new_gcn_forward.15} parent=0 // pred_check_branch
    %16 = sbr.rel (0) target = $region17
  $region16: #{my_new_gcn_forward.15} parent=0 // pred_region
    _
  $region17: #{my_new_gcn_forward.15} parent=0 // pred_fallthru
    _
  %p18 = scmp.eq.s32.totalorder 0, 0
  // Predicated region
  $region18: #{my_new_gcn_forward.15} parent=0 // pred_check
    %p19 = pneg %p18
  $region19: #{my_new_gcn_forward.15} parent=0 // pred_check_branch
    %21 = sbr.rel (%p19) target = $region21
  $region20: #{my_new_gcn_forward.15} parent=0 // pred_region
    %vm22 = vcmask 261120
    %23 = vst.msk [vmem:[#allocation2] sm:$0xff] %vm22, 0.0
    %24 = vst.msk [vmem:[#allocation2 + $0x8] sm:$0xff] %vm22, 0.0
    %25 = vst.msk [vmem:[#allocation2 + $0x10] sm:$0xff] %vm22, 0.0
    %26 = vst.msk [vmem:[#allocation2 + $0x18] sm:$0xff] %vm22, 0.0
    %27 = vst.msk [vmem:[#allocation2 + $0x20] sm:$0xff] %vm22, 0.0
    %28 = vst.msk [vmem:[#allocation2 + $0x28] sm:$0xff] %vm22, 0.0
    %29 = vst.msk [vmem:[#allocation2 + $0x30] sm:$0xff] %vm22, 0.0
    %30 = vst.msk [vmem:[#allocation2 + $0x38] sm:$0xff] %vm22, 0.0
    %31 = vst.msk [vmem:[#allocation2 + $0x40] sm:$0xff] %vm22, 0.0
    %32 = vst.msk [vmem:[#allocation2 + $0x48] sm:$0xff] %vm22, 0.0
    %33 = vst.msk [vmem:[#allocation2 + $0x50] sm:$0xff] %vm22, 0.0
    %34 = vst.msk [vmem:[#allocation2 + $0x58] sm:$0xff] %vm22, 0.0
    %35 = vst.msk [vmem:[#allocation2 + $0x60] sm:$0xff] %vm22, 0.0
    %36 = vst.msk [vmem:[#allocation2 + $0x68] sm:$0xff] %vm22, 0.0
    %37 = vst.msk [vmem:[#allocation2 + $0x70] sm:$0xff] %vm22, 0.0
    %38 = vst.msk [vmem:[#allocation2 + $0x78] sm:$0xff] %vm22, 0.0
  $region21: #{my_new_gcn_forward.15} parent=0 // pred_fallthru
    _
  %v39 = vld [vmem:[%s1] sm:$0xf]
  %v40 = vld [vmem:[%s1 + $0x4] sm:$0xf]
  %v41 = vld [vmem:[%s1 + $0x8] sm:$0xf]
  %v42 = vld [vmem:[%s1 + $0xc] sm:$0xf]
  %v43 = vld [vmem:[%s1 + $0x10] sm:$0xf]
  %v44 = vld [vmem:[%s1 + $0x14] sm:$0xf]
  %v45 = vld [vmem:[%s1 + $0x18] sm:$0xf]
  %v46 = vld [vmem:[%s1 + $0x1c] sm:$0xf]
  %v47 = vld [vmem:[%s1 + $0x20] sm:$0xf]
  %v48 = vld [vmem:[%s1 + $0x24] sm:$0xf]
  %v49 = vld [vmem:[%s1 + $0x28] sm:$0xf]
  %v50 = vld [vmem:[%s1 + $0x2c] sm:$0xf]
  %v51 = vld [vmem:[%s1 + $0x30] sm:$0xf]
  %v52 = vld [vmem:[%s1 + $0x34] sm:$0xf]
  %v53 = vld [vmem:[%s1 + $0x38] sm:$0xf]
  %v54 = vld [vmem:[%s1 + $0x3c] sm:$0xf]
  %v55 = vld [vmem:[%s2] sm:$0xf]
  %v56 = vld [vmem:[%s2 + $0x4] sm:$0xf]
  %v57 = vld [vmem:[%s2 + $0x8] sm:$0xf]
  %v58 = vld [vmem:[%s2 + $0xc] sm:$0xf]
  %v75 = vunpack.c.l.b16 %v39
  %v76 = vunpack.c.l.b16 %v40
  %v77 = vunpack.c.l.b16 %v41
  %v78 = vunpack.c.l.b16 %v42
  %v79 = vunpack.c.l.b16 %v43
  %v80 = vunpack.c.l.b16 %v44
  %v81 = vunpack.c.l.b16 %v45
  %v82 = vunpack.c.l.b16 %v46
  %v83 = vunpack.c.l.b16 %v47
  %v84 = vunpack.c.l.b16 %v48
  %v85 = vunpack.c.l.b16 %v49
  %v86 = vunpack.c.l.b16 %v50
  %v87 = vunpack.c.l.b16 %v51
  %v88 = vunpack.c.l.b16 %v52
  %v89 = vunpack.c.l.b16 %v53
  %v90 = vunpack.c.l.b16 %v54
  %v91 = vpack.c.b16 %v76, %v75
  %v92 = vpack.c.b16 %v78, %v77
  %v93 = vpack.c.b16 %v80, %v79
  %v94 = vpack.c.b16 %v82, %v81
  %v95 = vpack.c.b16 %v84, %v83
  %v96 = vpack.c.b16 %v86, %v85
  %v97 = vpack.c.b16 %v88, %v87
  %v98 = vpack.c.b16 %v90, %v89
  %v103 = vunpack.c.l.b16 %v55
  %v104 = vunpack.c.l.b16 %v56
  %v105 = vunpack.c.l.b16 %v57
  %v106 = vunpack.c.l.b16 %v58
  %v107 = vpack.c.b16 %v104, %v103
  %v108 = vpack.c.b16 %v106, %v105
  %vm111 = vcmask 261120
  %v113 = vsel %vm111, %v91, 0
  %v116 = vsel %vm111, %v92, 0
  %v119 = vsel %vm111, %v93, 0
  %v122 = vsel %vm111, %v94, 0
  %v125 = vsel %vm111, %v95, 0
  %v128 = vsel %vm111, %v96, 0
  %v131 = vsel %vm111, %v97, 0
  %v134 = vsel %vm111, %v98, 0
  %136 = vmatprep.subr.bf16.mxu0 0
  %137 = vmatpush1.bf16.msra.mxu0 %v107
  %138 = vmatprep.subr.bf16.mxu0 0
  %139 = vmatpush1.bf16.msra.mxu0 %v108
  %140 = vmatprep.subr.bf16.mxu0 0
  %141 = vmatpush1.bf16.msra.mxu0 0
  %142 = vmatprep.subr.bf16.mxu0 0
  %143 = vmatpush1.bf16.msra.mxu0 0
  %144 = vmatprep.subr.bf16.mxu0 0
  %145 = vmatpush1.bf16.msra.mxu0 0
  %146 = vmatprep.subr.bf16.mxu0 0
  %147 = vmatpush1.bf16.msra.mxu0 0
  %148 = vmatprep.subr.bf16.mxu0 0
  %149 = vmatpush1.bf16.msra.mxu0 0
  %150 = vmatprep.subr.bf16.mxu0 0
  %151 = vmatpush1.bf16.msra.mxu0 0
  %152 = vmatprep.subr.bf16.mxu0 0
  %153 = vmatpush1.bf16.msra.mxu0 0
  %154 = vmatprep.subr.bf16.mxu0 0
  %155 = vmatpush1.bf16.msra.mxu0 0
  %156 = vmatprep.subr.bf16.mxu0 0
  %157 = vmatpush1.bf16.msra.mxu0 0
  %158 = vmatprep.subr.bf16.mxu0 0
  %159 = vmatpush1.bf16.msra.mxu0 0
  %160 = vmatprep.subr.bf16.mxu0 0
  %161 = vmatpush1.bf16.msra.mxu0 0
  %162 = vmatprep.subr.bf16.mxu0 0
  %163 = vmatpush1.bf16.msra.mxu0 0
  %164 = vmatprep.subr.bf16.mxu0 0
  %165 = vmatpush1.bf16.msra.mxu0 0
  %166 = vmatprep.subr.bf16.mxu0 0
  %167 = vmatpush1.bf16.msra.mxu0 0
  %168 = vmatprep.mubr.bf16.mxu0 0
  %169 = vmatmul.mubr.bf16.gmra.mrb[0].mxu0 %v113
  %v170 = vpop.f32.mrb[0].mxu0
  %v171 = vadd.f32 0.0, %v170
  %v172 = vpop.f32.mrb[0].mxu0
  %v173 = vpop.f32.mrb[0].mxu0
  %v174 = vadd.f32 0.0, %v173
  %v175 = vpop.f32.mrb[0].mxu0
  %176 = vmatprep.mubr.bf16.mxu0 0
  %177 = vmatmul.mubr.bf16.gmra.mrb[0].mxu0 %v116
  %v178 = vpop.f32.mrb[0].mxu0
  %v179 = vadd.f32 0.0, %v178
  %v180 = vpop.f32.mrb[0].mxu0
  %v181 = vpop.f32.mrb[0].mxu0
  %v182 = vadd.f32 0.0, %v181
  %v183 = vpop.f32.mrb[0].mxu0
  %184 = vmatprep.mubr.bf16.mxu0 0
  %185 = vmatmul.mubr.bf16.gmra.mrb[0].mxu0 %v119
  %v186 = vpop.f32.mrb[0].mxu0
  %v187 = vadd.f32 0.0, %v186
  %v188 = vpop.f32.mrb[0].mxu0
  %v189 = vpop.f32.mrb[0].mxu0
  %v190 = vadd.f32 0.0, %v189
  %v191 = vpop.f32.mrb[0].mxu0
  %192 = vmatprep.mubr.bf16.mxu0 0
  %193 = vmatmul.mubr.bf16.gmra.mrb[0].mxu0 %v122
  %v194 = vpop.f32.mrb[0].mxu0
  %v195 = vadd.f32 0.0, %v194
  %v196 = vpop.f32.mrb[0].mxu0
  %v197 = vpop.f32.mrb[0].mxu0
  %v198 = vadd.f32 0.0, %v197
  %v199 = vpop.f32.mrb[0].mxu0
  %200 = vmatprep.mubr.bf16.mxu0 0
  %201 = vmatmul.mubr.bf16.gmra.mrb[0].mxu0 %v125
  %v202 = vpop.f32.mrb[0].mxu0
  %v203 = vadd.f32 0.0, %v202
  %v204 = vpop.f32.mrb[0].mxu0
  %v205 = vpop.f32.mrb[0].mxu0
  %v206 = vadd.f32 0.0, %v205
  %v207 = vpop.f32.mrb[0].mxu0
  %208 = vmatprep.mubr.bf16.mxu0 0
  %209 = vmatmul.mubr.bf16.gmra.mrb[0].mxu0 %v128
  %v210 = vpop.f32.mrb[0].mxu0
  %v211 = vadd.f32 0.0, %v210
  %v212 = vpop.f32.mrb[0].mxu0
  %v213 = vpop.f32.mrb[0].mxu0
  %v214 = vadd.f32 0.0, %v213
  %v215 = vpop.f32.mrb[0].mxu0
  %216 = vmatprep.mubr.bf16.mxu0 0
  %217 = vmatmul.mubr.bf16.gmra.mrb[0].mxu0 %v131
  %v218 = vpop.f32.mrb[0].mxu0
  %v219 = vadd.f32 0.0, %v218
  %v220 = vpop.f32.mrb[0].mxu0
  %v221 = vpop.f32.mrb[0].mxu0
  %v222 = vadd.f32 0.0, %v221
  %v223 = vpop.f32.mrb[0].mxu0
  %224 = vmatprep.mubr.bf16.mxu0 0
  %225 = vmatmul.mubr.bf16.gmra.mrb[0].mxu0 %v134
  %v226 = vpop.f32.mrb[0].mxu0
  %v227 = vadd.f32 0.0, %v226
  %v228 = vpop.f32.mrb[0].mxu0
  %v229 = vpop.f32.mrb[0].mxu0
  %v230 = vadd.f32 0.0, %v229
  %v231 = vpop.f32.mrb[0].mxu0
  %232 = vdwg.mxu0
  %v233 = vld [vmem:[#allocation2] sm:$0xff]
  %v234 = vld [vmem:[#allocation2 + $0x8] sm:$0xff]
  %v235 = vld [vmem:[#allocation2 + $0x10] sm:$0xff]
  %v236 = vld [vmem:[#allocation2 + $0x18] sm:$0xff]
  %v237 = vld [vmem:[#allocation2 + $0x20] sm:$0xff]
  %v238 = vld [vmem:[#allocation2 + $0x28] sm:$0xff]
  %v239 = vld [vmem:[#allocation2 + $0x30] sm:$0xff]
  %v240 = vld [vmem:[#allocation2 + $0x38] sm:$0xff]
  %v241 = vld [vmem:[#allocation2 + $0x40] sm:$0xff]
  %v242 = vld [vmem:[#allocation2 + $0x48] sm:$0xff]
  %v243 = vld [vmem:[#allocation2 + $0x50] sm:$0xff]
  %v244 = vld [vmem:[#allocation2 + $0x58] sm:$0xff]
  %v245 = vld [vmem:[#allocation2 + $0x60] sm:$0xff]
  %v246 = vld [vmem:[#allocation2 + $0x68] sm:$0xff]
  %v247 = vld [vmem:[#allocation2 + $0x70] sm:$0xff]
  %v248 = vld [vmem:[#allocation2 + $0x78] sm:$0xff]
  %v249 = vld [vmem:[%s0] sm:$0xf]
  %v250 = vld [vmem:[%s0 + $0x4] sm:$0xf]
  %v251 = vld [vmem:[%s0 + $0x8] sm:$0xf]
  %v252 = vld [vmem:[%s0 + $0xc] sm:$0xf]
  %v253 = vld [vmem:[%s0 + $0x10] sm:$0xf]
  %v254 = vld [vmem:[%s0 + $0x14] sm:$0xf]
  %v255 = vld [vmem:[%s0 + $0x18] sm:$0xf]
  %v256 = vld [vmem:[%s0 + $0x1c] sm:$0xf]
  %v257 = vld [vmem:[%s0 + $0x20] sm:$0xf]
  %v258 = vld [vmem:[%s0 + $0x24] sm:$0xf]
  %v259 = vld [vmem:[%s0 + $0x28] sm:$0xf]
  %v260 = vld [vmem:[%s0 + $0x2c] sm:$0xf]
  %v261 = vld [vmem:[%s0 + $0x30] sm:$0xf]
  %v262 = vld [vmem:[%s0 + $0x34] sm:$0xf]
  %v263 = vld [vmem:[%s0 + $0x38] sm:$0xf]
  %v264 = vld [vmem:[%s0 + $0x3c] sm:$0xf]
  %v265 = vpack.c.bf16 %v174, %v171
  %v266 = vpack.c.bf16 %v182, %v179
  %v267 = vpack.c.bf16 %v190, %v187
  %v268 = vpack.c.bf16 %v198, %v195
  %v269 = vpack.c.bf16 %v206, %v203
  %v270 = vpack.c.bf16 %v214, %v211
  %v271 = vpack.c.bf16 %v222, %v219
  %v272 = vpack.c.bf16 %v230, %v227
  %v289 = vunpack.c.l.b16 %v249
  %v290 = vunpack.c.l.b16 %v250
  %v291 = vunpack.c.l.b16 %v251
  %v292 = vunpack.c.l.b16 %v252
  %v293 = vunpack.c.l.b16 %v253
  %v294 = vunpack.c.l.b16 %v254
  %v295 = vunpack.c.l.b16 %v255
  %v296 = vunpack.c.l.b16 %v256
  %v297 = vunpack.c.l.b16 %v257
  %v298 = vunpack.c.l.b16 %v258
  %v299 = vunpack.c.l.b16 %v259
  %v300 = vunpack.c.l.b16 %v260
  %v301 = vunpack.c.l.b16 %v261
  %v302 = vunpack.c.l.b16 %v262
  %v303 = vunpack.c.l.b16 %v263
  %v304 = vunpack.c.l.b16 %v264
  %v305 = vpack.c.b16 %v290, %v289
  %v306 = vpack.c.b16 %v292, %v291
  %v307 = vpack.c.b16 %v294, %v293
  %v308 = vpack.c.b16 %v296, %v295
  %v309 = vpack.c.b16 %v298, %v297
  %v310 = vpack.c.b16 %v300, %v299
  %v311 = vpack.c.b16 %v302, %v301
  %v312 = vpack.c.b16 %v304, %v303
  %321 = vmatprep.subr.bf16.mxu0 0
  %322 = vmatpush1.bf16.msra.mxu0 %v265
  %323 = vmatprep.subr.bf16.mxu0 0
  %324 = vmatpush1.bf16.msra.mxu0 %v266
  %325 = vmatprep.subr.bf16.mxu0 0
  %326 = vmatpush1.bf16.msra.mxu0 %v267
  %327 = vmatprep.subr.bf16.mxu0 0
  %328 = vmatpush1.bf16.msra.mxu0 %v268
  %329 = vmatprep.subr.bf16.mxu0 0
  %330 = vmatpush1.bf16.msra.mxu0 %v269
  %331 = vmatprep.subr.bf16.mxu0 0
  %332 = vmatpush1.bf16.msra.mxu0 %v270
  %333 = vmatprep.subr.bf16.mxu0 0
  %334 = vmatpush1.bf16.msra.mxu0 %v271
  %335 = vmatprep.subr.bf16.mxu0 0
  %336 = vmatpush1.bf16.msra.mxu0 %v272
  %337 = vmatprep.subr.bf16.mxu0 0
  %338 = vmatpush1.bf16.msra.mxu0 0
  %339 = vmatprep.subr.bf16.mxu0 0
  %340 = vmatpush1.bf16.msra.mxu0 0
  %341 = vmatprep.subr.bf16.mxu0 0
  %342 = vmatpush1.bf16.msra.mxu0 0
  %343 = vmatprep.subr.bf16.mxu0 0
  %344 = vmatpush1.bf16.msra.mxu0 0
  %345 = vmatprep.subr.bf16.mxu0 0
  %346 = vmatpush1.bf16.msra.mxu0 0
  %347 = vmatprep.subr.bf16.mxu0 0
  %348 = vmatpush1.bf16.msra.mxu0 0
  %349 = vmatprep.subr.bf16.mxu0 0
  %350 = vmatpush1.bf16.msra.mxu0 0
  %351 = vmatprep.subr.bf16.mxu0 0
  %352 = vmatpush1.bf16.msra.mxu0 0
  %353 = vmatprep.mubr.bf16.mxu0 0
  %354 = vmatmul.mubr.bf16.gmra.mrb[0].mxu0 %v305
  %v355 = vpop.f32.mrb[0].mxu0
  %v356 = vadd.f32 0.0, %v355
  %v357 = vpop.f32.mrb[0].mxu0
  %v358 = vpop.f32.mrb[0].mxu0
  %v359 = vadd.f32 0.0, %v358
  %v360 = vpop.f32.mrb[0].mxu0
  %361 = vmatprep.mubr.bf16.mxu0 0
  %362 = vmatmul.mubr.bf16.gmra.mrb[0].mxu0 %v306
  %v363 = vpop.f32.mrb[0].mxu0
  %v364 = vadd.f32 0.0, %v363
  %v365 = vpop.f32.mrb[0].mxu0
  %v366 = vpop.f32.mrb[0].mxu0
  %v367 = vadd.f32 0.0, %v366
  %v368 = vpop.f32.mrb[0].mxu0
  %369 = vmatprep.mubr.bf16.mxu0 0
  %370 = vmatmul.mubr.bf16.gmra.mrb[0].mxu0 %v307
  %v371 = vpop.f32.mrb[0].mxu0
  %v372 = vadd.f32 0.0, %v371
  %v373 = vpop.f32.mrb[0].mxu0
  %v374 = vpop.f32.mrb[0].mxu0
  %v375 = vadd.f32 0.0, %v374
  %v376 = vpop.f32.mrb[0].mxu0
  %377 = vmatprep.mubr.bf16.mxu0 0
  %378 = vmatmul.mubr.bf16.gmra.mrb[0].mxu0 %v308
  %v379 = vpop.f32.mrb[0].mxu0
  %v380 = vadd.f32 0.0, %v379
  %v381 = vpop.f32.mrb[0].mxu0
  %v382 = vpop.f32.mrb[0].mxu0
  %v383 = vadd.f32 0.0, %v382
  %v384 = vpop.f32.mrb[0].mxu0
  %385 = vmatprep.mubr.bf16.mxu0 0
  %386 = vmatmul.mubr.bf16.gmra.mrb[0].mxu0 %v309
  %v387 = vpop.f32.mrb[0].mxu0
  %v388 = vadd.f32 0.0, %v387
  %v389 = vpop.f32.mrb[0].mxu0
  %v390 = vpop.f32.mrb[0].mxu0
  %v391 = vadd.f32 0.0, %v390
  %v392 = vpop.f32.mrb[0].mxu0
  %393 = vmatprep.mubr.bf16.mxu0 0
  %394 = vmatmul.mubr.bf16.gmra.mrb[0].mxu0 %v310
  %v395 = vpop.f32.mrb[0].mxu0
  %v396 = vadd.f32 0.0, %v395
  %v397 = vpop.f32.mrb[0].mxu0
  %v398 = vpop.f32.mrb[0].mxu0
  %v399 = vadd.f32 0.0, %v398
  %v400 = vpop.f32.mrb[0].mxu0
  %401 = vmatprep.mubr.bf16.mxu0 0
  %402 = vmatmul.mubr.bf16.gmra.mrb[0].mxu0 %v311
  %v403 = vpop.f32.mrb[0].mxu0
  %v404 = vadd.f32 0.0, %v403
  %v405 = vpop.f32.mrb[0].mxu0
  %v406 = vpop.f32.mrb[0].mxu0
  %v407 = vadd.f32 0.0, %v406
  %v408 = vpop.f32.mrb[0].mxu0
  %409 = vmatprep.mubr.bf16.mxu0 0
  %410 = vmatmul.mubr.bf16.gmra.mrb[0].mxu0 %v312
  %v411 = vpop.f32.mrb[0].mxu0
  %v412 = vadd.f32 0.0, %v411
  %v413 = vpop.f32.mrb[0].mxu0
  %v414 = vpop.f32.mrb[0].mxu0
  %v415 = vadd.f32 0.0, %v414
  %v416 = vpop.f32.mrb[0].mxu0
  %417 = vdwg.mxu0
  %v418 = vadd.f32 %v233, %v356
  %v419 = vadd.f32 %v234, %v359
  %v420 = vadd.f32 %v235, %v364
  %v421 = vadd.f32 %v236, %v367
  %v422 = vadd.f32 %v237, %v372
  %v423 = vadd.f32 %v238, %v375
  %v424 = vadd.f32 %v239, %v380
  %v425 = vadd.f32 %v240, %v383
  %v426 = vadd.f32 %v241, %v388
  %v427 = vadd.f32 %v242, %v391
  %v428 = vadd.f32 %v243, %v396
  %v429 = vadd.f32 %v244, %v399
  %v430 = vadd.f32 %v245, %v404
  %v431 = vadd.f32 %v246, %v407
  %v432 = vadd.f32 %v247, %v412
  %v433 = vadd.f32 %v248, %v415
  %434 = vst.msk [vmem:[#allocation2] sm:$0xff] %vm111, %v418
  %435 = vst.msk [vmem:[#allocation2 + $0x8] sm:$0xff] %vm111, %v419
  %436 = vst.msk [vmem:[#allocation2 + $0x10] sm:$0xff] %vm111, %v420
  %437 = vst.msk [vmem:[#allocation2 + $0x18] sm:$0xff] %vm111, %v421
  %438 = vst.msk [vmem:[#allocation2 + $0x20] sm:$0xff] %vm111, %v422
  %439 = vst.msk [vmem:[#allocation2 + $0x28] sm:$0xff] %vm111, %v423
  %440 = vst.msk [vmem:[#allocation2 + $0x30] sm:$0xff] %vm111, %v424
  %441 = vst.msk [vmem:[#allocation2 + $0x38] sm:$0xff] %vm111, %v425
  %442 = vst.msk [vmem:[#allocation2 + $0x40] sm:$0xff] %vm111, %v426
  %443 = vst.msk [vmem:[#allocation2 + $0x48] sm:$0xff] %vm111, %v427
  %444 = vst.msk [vmem:[#allocation2 + $0x50] sm:$0xff] %vm111, %v428
  %445 = vst.msk [vmem:[#allocation2 + $0x58] sm:$0xff] %vm111, %v429
  %446 = vst.msk [vmem:[#allocation2 + $0x60] sm:$0xff] %vm111, %v430
  %447 = vst.msk [vmem:[#allocation2 + $0x68] sm:$0xff] %vm111, %v431
  %448 = vst.msk [vmem:[#allocation2 + $0x70] sm:$0xff] %vm111, %v432
  %449 = vst.msk [vmem:[#allocation2 + $0x78] sm:$0xff] %vm111, %v433
  // Predicated region
  $region22: #{my_new_gcn_forward.15} parent=0 // pred_check
    %p450 = pneg %p18
  $region23: #{my_new_gcn_forward.15} parent=0 // pred_check_branch
    %452 = sbr.rel (%p450) target = $region25
  $region24: #{my_new_gcn_forward.15} parent=0 // pred_region
    %v453 = vld [vmem:[#allocation2] sm:$0xff]
    %v454 = vld [vmem:[#allocation2 + $0x8] sm:$0xff]
    %v455 = vld [vmem:[#allocation2 + $0x10] sm:$0xff]
    %v456 = vld [vmem:[#allocation2 + $0x18] sm:$0xff]
    %v457 = vld [vmem:[#allocation2 + $0x20] sm:$0xff]
    %v458 = vld [vmem:[#allocation2 + $0x28] sm:$0xff]
    %v459 = vld [vmem:[#allocation2 + $0x30] sm:$0xff]
    %v460 = vld [vmem:[#allocation2 + $0x38] sm:$0xff]
    %v461 = vld [vmem:[#allocation2 + $0x40] sm:$0xff]
    %v462 = vld [vmem:[#allocation2 + $0x48] sm:$0xff]
    %v463 = vld [vmem:[#allocation2 + $0x50] sm:$0xff]
    %v464 = vld [vmem:[#allocation2 + $0x58] sm:$0xff]
    %v465 = vld [vmem:[#allocation2 + $0x60] sm:$0xff]
    %v466 = vld [vmem:[#allocation2 + $0x68] sm:$0xff]
    %v467 = vld [vmem:[#allocation2 + $0x70] sm:$0xff]
    %v468 = vld [vmem:[#allocation2 + $0x78] sm:$0xff]
    %v469 = vld [vmem:[%s3] sm:$0x1]
    %v471 = vlaneseq
    %v472 = vshrl.u32 %v471, 7
    %v473 = vsub.s32 0, %v472
    %v474 = vrot.slane %v469, %v473
    %v476 = vadd.f32 %v453, %v474
    %v477 = vadd.f32 %v454, %v474
    %v478 = vadd.f32 %v455, %v474
    %v479 = vadd.f32 %v456, %v474
    %v480 = vadd.f32 %v457, %v474
    %v481 = vadd.f32 %v458, %v474
    %v482 = vadd.f32 %v459, %v474
    %v483 = vadd.f32 %v460, %v474
    %v484 = vadd.f32 %v461, %v474
    %v485 = vadd.f32 %v462, %v474
    %v486 = vadd.f32 %v463, %v474
    %v487 = vadd.f32 %v464, %v474
    %v488 = vadd.f32 %v465, %v474
    %v489 = vadd.f32 %v466, %v474
    %v490 = vadd.f32 %v467, %v474
    %v491 = vadd.f32 %v468, %v474
    %v492 = vmax.f32 %v476, 0.0
    %v493 = vmax.f32 %v477, 0.0
    %v494 = vmax.f32 %v478, 0.0
    %v495 = vmax.f32 %v479, 0.0
    %v496 = vmax.f32 %v480, 0.0
    %v497 = vmax.f32 %v481, 0.0
    %v498 = vmax.f32 %v482, 0.0
    %v499 = vmax.f32 %v483, 0.0
    %v500 = vmax.f32 %v484, 0.0
    %v501 = vmax.f32 %v485, 0.0
    %v502 = vmax.f32 %v486, 0.0
    %v503 = vmax.f32 %v487, 0.0
    %v504 = vmax.f32 %v488, 0.0
    %v505 = vmax.f32 %v489, 0.0
    %v506 = vmax.f32 %v490, 0.0
    %v507 = vmax.f32 %v491, 0.0
    %v508 = vpack.c.bf16 %v493, %v492
    %v509 = vpack.c.bf16 %v495, %v494
    %v510 = vpack.c.bf16 %v497, %v496
    %v511 = vpack.c.bf16 %v499, %v498
    %v512 = vpack.c.bf16 %v501, %v500
    %v513 = vpack.c.bf16 %v503, %v502
    %v514 = vpack.c.bf16 %v505, %v504
    %v515 = vpack.c.bf16 %v507, %v506
    %v524 = vunpack.c.l.b16 %v508
    %v525 = vunpack.c.h.b16 %v508
    %v526 = vunpack.c.l.b16 %v509
    %v527 = vunpack.c.h.b16 %v509
    %v528 = vunpack.c.l.b16 %v510
    %v529 = vunpack.c.h.b16 %v510
    %v530 = vunpack.c.l.b16 %v511
    %v531 = vunpack.c.h.b16 %v511
    %v532 = vunpack.c.l.b16 %v512
    %v533 = vunpack.c.h.b16 %v512
    %v534 = vunpack.c.l.b16 %v513
    %v535 = vunpack.c.h.b16 %v513
    %v536 = vunpack.c.l.b16 %v514
    %v537 = vunpack.c.h.b16 %v514
    %v538 = vunpack.c.l.b16 %v515
    %v539 = vunpack.c.h.b16 %v515
    %v540 = vpack.c.b16 %v524, %v524
    %v541 = vpack.c.b16 %v525, %v525
    %v542 = vpack.c.b16 %v526, %v526
    %v543 = vpack.c.b16 %v527, %v527
    %v544 = vpack.c.b16 %v528, %v528
    %v545 = vpack.c.b16 %v529, %v529
    %v546 = vpack.c.b16 %v530, %v530
    %v547 = vpack.c.b16 %v531, %v531
    %v548 = vpack.c.b16 %v532, %v532
    %v549 = vpack.c.b16 %v533, %v533
    %v550 = vpack.c.b16 %v534, %v534
    %v551 = vpack.c.b16 %v535, %v535
    %v552 = vpack.c.b16 %v536, %v536
    %v553 = vpack.c.b16 %v537, %v537
    %v554 = vpack.c.b16 %v538, %v538
    %v555 = vpack.c.b16 %v539, %v539
    %vm572 = vcmask 257024
    %573 = vst.msk [vmem:[%s4] sm:$0xf] %vm572, %v540
    %574 = vst.msk [vmem:[%s4 + $0x4] sm:$0xf] %vm572, %v541
    %575 = vst.msk [vmem:[%s4 + $0x8] sm:$0xf] %vm572, %v542
    %576 = vst.msk [vmem:[%s4 + $0xc] sm:$0xf] %vm572, %v543
    %577 = vst.msk [vmem:[%s4 + $0x10] sm:$0xf] %vm572, %v544
    %578 = vst.msk [vmem:[%s4 + $0x14] sm:$0xf] %vm572, %v545
    %579 = vst.msk [vmem:[%s4 + $0x18] sm:$0xf] %vm572, %v546
    %580 = vst.msk [vmem:[%s4 + $0x1c] sm:$0xf] %vm572, %v547
    %581 = vst.msk [vmem:[%s4 + $0x20] sm:$0xf] %vm572, %v548
    %582 = vst.msk [vmem:[%s4 + $0x24] sm:$0xf] %vm572, %v549
    %583 = vst.msk [vmem:[%s4 + $0x28] sm:$0xf] %vm572, %v550
    %584 = vst.msk [vmem:[%s4 + $0x2c] sm:$0xf] %vm572, %v551
    %585 = vst.msk [vmem:[%s4 + $0x30] sm:$0xf] %vm572, %v552
    %586 = vst.msk [vmem:[%s4 + $0x34] sm:$0xf] %vm572, %v553
    %587 = vst.msk [vmem:[%s4 + $0x38] sm:$0xf] %vm572, %v554
    %588 = vst.msk [vmem:[%s4 + $0x3c] sm:$0xf] %vm572, %v555
  $region25: #{my_new_gcn_forward.15} parent=0 // pred_fallthru
    _
  // Predicated region
  $region26: #{my_new_gcn_forward.15} parent=0 // pred_check
    _
  $region27: #{my_new_gcn_forward.15} parent=0 // pred_check_branch
    %590 = sbr.rel (0) target = $region29
  $region28: #{my_new_gcn_forward.15} parent=0 // pred_region
    _
  $region29: #{my_new_gcn_forward.15} parent=0 // pred_fallthru
    _
  // Predicated region
  $region30: #{my_new_gcn_forward.15} parent=0 // pred_check
    _
  $region31: #{my_new_gcn_forward.15} parent=0 // pred_check_branch
    %592 = sbr.rel (0) target = $region33
  $region32: #{my_new_gcn_forward.15} parent=0 // pred_region
    _
  $region33: #{my_new_gcn_forward.15} parent=0 // pred_fallthru
    _

// kernel: my_new_gcn_forward.14
$region0: #{my_new_gcn_forward.14}
  #allocation0 [shape = 'u32[]', space=smem, size = 0x4, offset = 0x4, fixed_abs, tag = 'smem constant byte address 0x4 - core index']
  #allocation1 [shape = 'u32[144,128]{1,0:T(1,128)}', space=vmem, size = 0x12000, scoped, tag = 'internal scratch']
  #allocation2 [shape = 'f32[96,16]{1,0:T(8,128)}', space=vmem, size = 0xc000, scoped, tag = 'scratch operand']
  %s0 = inlined_call_operand.vmem [shape: bf16[96,96], index: 0, kind: input, shape index: {}]
  %s1 = inlined_call_operand.vmem [shape: bf16[96,32], index: 1, kind: input, shape index: {}]
  %s2 = inlined_call_operand.vmem [shape: bf16[32,16], index: 2, kind: input, shape index: {}]
  %s3 = inlined_call_operand.vmem [shape: f32[1,16], index: 3, kind: input, shape index: {}]
  %s4 = inlined_call_operand.vmem [shape: f32[96,16], index: 4, kind: output, shape index: {}]
  %s5 = sld [smem:[#allocation0]]
  $region34: #{my_new_gcn_forward.14} parent=0
    _
  %s7 = ssub.s32 1, %s5
  %s8 = scalar_select 0, %s7, %s5
  // Predicated region
  $region2: #{my_new_gcn_forward.14} parent=0 // pred_check
    _
  $region3: #{my_new_gcn_forward.14} parent=0 // pred_check_branch
    %10 = sbr.rel (0) target = $region5
  $region4: #{my_new_gcn_forward.14} parent=0 // pred_region
    _
  $region5: #{my_new_gcn_forward.14} parent=0 // pred_fallthru
    _
  // Predicated region
  $region6: #{my_new_gcn_forward.14} parent=0 // pred_check
    _
  $region7: #{my_new_gcn_forward.14} parent=0 // pred_check_branch
    %12 = sbr.rel (0) target = $region9
  $region8: #{my_new_gcn_forward.14} parent=0 // pred_region
    _
  $region9: #{my_new_gcn_forward.14} parent=0 // pred_fallthru
    _
  // Predicated region
  $region10: #{my_new_gcn_forward.14} parent=0 // pred_check
    _
  $region11: #{my_new_gcn_forward.14} parent=0 // pred_check_branch
    %14 = sbr.rel (0) target = $region13
  $region12: #{my_new_gcn_forward.14} parent=0 // pred_region
    _
  $region13: #{my_new_gcn_forward.14} parent=0 // pred_fallthru
    _
  // Predicated region
  $region14: #{my_new_gcn_forward.14} parent=0 // pred_check
    _
  $region15: #{my_new_gcn_forward.14} parent=0 // pred_check_branch
    %16 = sbr.rel (0) target = $region17
  $region16: #{my_new_gcn_forward.14} parent=0 // pred_region
    _
  $region17: #{my_new_gcn_forward.14} parent=0 // pred_fallthru
    _
  %p18 = scmp.eq.s32.totalorder 0, 0
  // Predicated region
  $region18: #{my_new_gcn_forward.14} parent=0 // pred_check
    %p19 = pneg %p18
  $region19: #{my_new_gcn_forward.14} parent=0 // pred_check_branch
    %21 = sbr.rel (%p19) target = $region21
  $region20: #{my_new_gcn_forward.14} parent=0 // pred_region
    %vm22 = vcmask 130048
    %23 = vst.msk [vmem:[#allocation2] sm:$0xff] %vm22, 0.0
    %24 = vst.msk [vmem:[#allocation2 + $0x8] sm:$0xff] %vm22, 0.0
    %25 = vst.msk [vmem:[#allocation2 + $0x10] sm:$0xff] %vm22, 0.0
    %26 = vst.msk [vmem:[#allocation2 + $0x18] sm:$0xff] %vm22, 0.0
    %27 = vst.msk [vmem:[#allocation2 + $0x20] sm:$0xff] %vm22, 0.0
    %28 = vst.msk [vmem:[#allocation2 + $0x28] sm:$0xff] %vm22, 0.0
    %29 = vst.msk [vmem:[#allocation2 + $0x30] sm:$0xff] %vm22, 0.0
    %30 = vst.msk [vmem:[#allocation2 + $0x38] sm:$0xff] %vm22, 0.0
    %31 = vst.msk [vmem:[#allocation2 + $0x40] sm:$0xff] %vm22, 0.0
    %32 = vst.msk [vmem:[#allocation2 + $0x48] sm:$0xff] %vm22, 0.0
    %33 = vst.msk [vmem:[#allocation2 + $0x50] sm:$0xff] %vm22, 0.0
    %34 = vst.msk [vmem:[#allocation2 + $0x58] sm:$0xff] %vm22, 0.0
  $region21: #{my_new_gcn_forward.14} parent=0 // pred_fallthru
    _
  %v35 = vld [vmem:[%s1] sm:$0xf]
  %v36 = vld [vmem:[%s1 + $0x4] sm:$0xf]
  %v37 = vld [vmem:[%s1 + $0x8] sm:$0xf]
  %v38 = vld [vmem:[%s1 + $0xc] sm:$0xf]
  %v39 = vld [vmem:[%s1 + $0x10] sm:$0xf]
  %v40 = vld [vmem:[%s1 + $0x14] sm:$0xf]
  %v41 = vld [vmem:[%s1 + $0x18] sm:$0xf]
  %v42 = vld [vmem:[%s1 + $0x1c] sm:$0xf]
  %v43 = vld [vmem:[%s1 + $0x20] sm:$0xf]
  %v44 = vld [vmem:[%s1 + $0x24] sm:$0xf]
  %v45 = vld [vmem:[%s1 + $0x28] sm:$0xf]
  %v46 = vld [vmem:[%s1 + $0x2c] sm:$0xf]
  %v47 = vld [vmem:[%s2] sm:$0xf]
  %v48 = vld [vmem:[%s2 + $0x4] sm:$0xf]
  %v49 = vld [vmem:[%s2 + $0x8] sm:$0xf]
  %v50 = vld [vmem:[%s2 + $0xc] sm:$0xf]
  %v63 = vunpack.c.l.b16 %v35
  %v64 = vunpack.c.l.b16 %v36
  %v65 = vunpack.c.l.b16 %v37
  %v66 = vunpack.c.l.b16 %v38
  %v67 = vunpack.c.l.b16 %v39
  %v68 = vunpack.c.l.b16 %v40
  %v69 = vunpack.c.l.b16 %v41
  %v70 = vunpack.c.l.b16 %v42
  %v71 = vunpack.c.l.b16 %v43
  %v72 = vunpack.c.l.b16 %v44
  %v73 = vunpack.c.l.b16 %v45
  %v74 = vunpack.c.l.b16 %v46
  %v75 = vpack.c.b16 %v64, %v63
  %v76 = vpack.c.b16 %v66, %v65
  %v77 = vpack.c.b16 %v68, %v67
  %v78 = vpack.c.b16 %v70, %v69
  %v79 = vpack.c.b16 %v72, %v71
  %v80 = vpack.c.b16 %v74, %v73
  %v85 = vunpack.c.l.b16 %v47
  %v86 = vunpack.c.l.b16 %v48
  %v87 = vunpack.c.l.b16 %v49
  %v88 = vunpack.c.l.b16 %v50
  %v89 = vpack.c.b16 %v86, %v85
  %v90 = vpack.c.b16 %v88, %v87
  %vm93 = vcmask 261120
  %v95 = vsel %vm93, %v75, 0
  %v98 = vsel %vm93, %v76, 0
  %v101 = vsel %vm93, %v77, 0
  %v104 = vsel %vm93, %v78, 0
  %v107 = vsel %vm93, %v79, 0
  %v110 = vsel %vm93, %v80, 0
  %112 = vmatprep.subr.bf16.mxu0 0
  %113 = vmatpush1.bf16.msra.mxu0 %v89
  %114 = vmatprep.subr.bf16.mxu0 0
  %115 = vmatpush1.bf16.msra.mxu0 %v90
  %116 = vmatprep.subr.bf16.mxu0 0
  %117 = vmatpush1.bf16.msra.mxu0 0
  %118 = vmatprep.subr.bf16.mxu0 0
  %119 = vmatpush1.bf16.msra.mxu0 0
  %120 = vmatprep.subr.bf16.mxu0 0
  %121 = vmatpush1.bf16.msra.mxu0 0
  %122 = vmatprep.subr.bf16.mxu0 0
  %123 = vmatpush1.bf16.msra.mxu0 0
  %124 = vmatprep.subr.bf16.mxu0 0
  %125 = vmatpush1.bf16.msra.mxu0 0
  %126 = vmatprep.subr.bf16.mxu0 0
  %127 = vmatpush1.bf16.msra.mxu0 0
  %128 = vmatprep.subr.bf16.mxu0 0
  %129 = vmatpush1.bf16.msra.mxu0 0
  %130 = vmatprep.subr.bf16.mxu0 0
  %131 = vmatpush1.bf16.msra.mxu0 0
  %132 = vmatprep.subr.bf16.mxu0 0
  %133 = vmatpush1.bf16.msra.mxu0 0
  %134 = vmatprep.subr.bf16.mxu0 0
  %135 = vmatpush1.bf16.msra.mxu0 0
  %136 = vmatprep.subr.bf16.mxu0 0
  %137 = vmatpush1.bf16.msra.mxu0 0
  %138 = vmatprep.subr.bf16.mxu0 0
  %139 = vmatpush1.bf16.msra.mxu0 0
  %140 = vmatprep.subr.bf16.mxu0 0
  %141 = vmatpush1.bf16.msra.mxu0 0
  %142 = vmatprep.subr.bf16.mxu0 0
  %143 = vmatpush1.bf16.msra.mxu0 0
  %144 = vmatprep.mubr.bf16.mxu0 0
  %145 = vmatmul.mubr.bf16.gmra.mrb[0].mxu0 %v95
  %v146 = vpop.f32.mrb[0].mxu0
  %v147 = vadd.f32 0.0, %v146
  %v148 = vpop.f32.mrb[0].mxu0
  %v149 = vpop.f32.mrb[0].mxu0
  %v150 = vadd.f32 0.0, %v149
  %v151 = vpop.f32.mrb[0].mxu0
  %152 = vmatprep.mubr.bf16.mxu0 0
  %153 = vmatmul.mubr.bf16.gmra.mrb[0].mxu0 %v98
  %v154 = vpop.f32.mrb[0].mxu0
  %v155 = vadd.f32 0.0, %v154
  %v156 = vpop.f32.mrb[0].mxu0
  %v157 = vpop.f32.mrb[0].mxu0
  %v158 = vadd.f32 0.0, %v157
  %v159 = vpop.f32.mrb[0].mxu0
  %160 = vmatprep.mubr.bf16.mxu0 0
  %161 = vmatmul.mubr.bf16.gmra.mrb[0].mxu0 %v101
  %v162 = vpop.f32.mrb[0].mxu0
  %v163 = vadd.f32 0.0, %v162
  %v164 = vpop.f32.mrb[0].mxu0
  %v165 = vpop.f32.mrb[0].mxu0
  %v166 = vadd.f32 0.0, %v165
  %v167 = vpop.f32.mrb[0].mxu0
  %168 = vmatprep.mubr.bf16.mxu0 0
  %169 = vmatmul.mubr.bf16.gmra.mrb[0].mxu0 %v104
  %v170 = vpop.f32.mrb[0].mxu0
  %v171 = vadd.f32 0.0, %v170
  %v172 = vpop.f32.mrb[0].mxu0
  %v173 = vpop.f32.mrb[0].mxu0
  %v174 = vadd.f32 0.0, %v173
  %v175 = vpop.f32.mrb[0].mxu0
  %176 = vmatprep.mubr.bf16.mxu0 0
  %177 = vmatmul.mubr.bf16.gmra.mrb[0].mxu0 %v107
  %v178 = vpop.f32.mrb[0].mxu0
  %v179 = vadd.f32 0.0, %v178
  %v180 = vpop.f32.mrb[0].mxu0
  %v181 = vpop.f32.mrb[0].mxu0
  %v182 = vadd.f32 0.0, %v181
  %v183 = vpop.f32.mrb[0].mxu0
  %184 = vmatprep.mubr.bf16.mxu0 0
  %185 = vmatmul.mubr.bf16.gmra.mrb[0].mxu0 %v110
  %v186 = vpop.f32.mrb[0].mxu0
  %v187 = vadd.f32 0.0, %v186
  %v188 = vpop.f32.mrb[0].mxu0
  %v189 = vpop.f32.mrb[0].mxu0
  %v190 = vadd.f32 0.0, %v189
  %v191 = vpop.f32.mrb[0].mxu0
  %192 = vdwg.mxu0
  %v193 = vld [vmem:[#allocation2] sm:$0xff]
  %v194 = vld [vmem:[#allocation2 + $0x8] sm:$0xff]
  %v195 = vld [vmem:[#allocation2 + $0x10] sm:$0xff]
  %v196 = vld [vmem:[#allocation2 + $0x18] sm:$0xff]
  %v197 = vld [vmem:[#allocation2 + $0x20] sm:$0xff]
  %v198 = vld [vmem:[#allocation2 + $0x28] sm:$0xff]
  %v199 = vld [vmem:[#allocation2 + $0x30] sm:$0xff]
  %v200 = vld [vmem:[#allocation2 + $0x38] sm:$0xff]
  %v201 = vld [vmem:[#allocation2 + $0x40] sm:$0xff]
  %v202 = vld [vmem:[#allocation2 + $0x48] sm:$0xff]
  %v203 = vld [vmem:[#allocation2 + $0x50] sm:$0xff]
  %v204 = vld [vmem:[#allocation2 + $0x58] sm:$0xff]
  %v205 = vld [vmem:[%s0] sm:$0xf]
  %v206 = vld [vmem:[%s0 + $0x4] sm:$0xf]
  %v207 = vld [vmem:[%s0 + $0x8] sm:$0xf]
  %v208 = vld [vmem:[%s0 + $0xc] sm:$0xf]
  %v209 = vld [vmem:[%s0 + $0x10] sm:$0xf]
  %v210 = vld [vmem:[%s0 + $0x14] sm:$0xf]
  %v211 = vld [vmem:[%s0 + $0x18] sm:$0xf]
  %v212 = vld [vmem:[%s0 + $0x1c] sm:$0xf]
  %v213 = vld [vmem:[%s0 + $0x20] sm:$0xf]
  %v214 = vld [vmem:[%s0 + $0x24] sm:$0xf]
  %v215 = vld [vmem:[%s0 + $0x28] sm:$0xf]
  %v216 = vld [vmem:[%s0 + $0x2c] sm:$0xf]
  %v217 = vpack.c.bf16 %v150, %v147
  %v218 = vpack.c.bf16 %v158, %v155
  %v219 = vpack.c.bf16 %v166, %v163
  %v220 = vpack.c.bf16 %v174, %v171
  %v221 = vpack.c.bf16 %v182, %v179
  %v222 = vpack.c.bf16 %v190, %v187
  %v235 = vunpack.c.l.b16 %v205
  %v236 = vunpack.c.l.b16 %v206
  %v237 = vunpack.c.l.b16 %v207
  %v238 = vunpack.c.l.b16 %v208
  %v239 = vunpack.c.l.b16 %v209
  %v240 = vunpack.c.l.b16 %v210
  %v241 = vunpack.c.l.b16 %v211
  %v242 = vunpack.c.l.b16 %v212
  %v243 = vunpack.c.l.b16 %v213
  %v244 = vunpack.c.l.b16 %v214
  %v245 = vunpack.c.l.b16 %v215
  %v246 = vunpack.c.l.b16 %v216
  %v247 = vpack.c.b16 %v236, %v235
  %v248 = vpack.c.b16 %v238, %v237
  %v249 = vpack.c.b16 %v240, %v239
  %v250 = vpack.c.b16 %v242, %v241
  %v251 = vpack.c.b16 %v244, %v243
  %v252 = vpack.c.b16 %v246, %v245
  %vm253 = vcmask 785408
  %v255 = vsel %vm253, %v247, 0
  %v258 = vsel %vm253, %v248, 0
  %v261 = vsel %vm253, %v249, 0
  %v264 = vsel %vm253, %v250, 0
  %v267 = vsel %vm253, %v251, 0
  %v270 = vsel %vm253, %v252, 0
  %272 = vmatprep.subr.bf16.mxu0 0
  %273 = vmatpush1.bf16.msra.mxu0 %v217
  %274 = vmatprep.subr.bf16.mxu0 0
  %275 = vmatpush1.bf16.msra.mxu0 %v218
  %276 = vmatprep.subr.bf16.mxu0 0
  %277 = vmatpush1.bf16.msra.mxu0 %v219
  %278 = vmatprep.subr.bf16.mxu0 0
  %279 = vmatpush1.bf16.msra.mxu0 %v220
  %280 = vmatprep.subr.bf16.mxu0 0
  %281 = vmatpush1.bf16.msra.mxu0 %v221
  %282 = vmatprep.subr.bf16.mxu0 0
  %283 = vmatpush1.bf16.msra.mxu0 %v222
  %284 = vmatprep.subr.bf16.mxu0 0
  %285 = vmatpush1.bf16.msra.mxu0 0
  %286 = vmatprep.subr.bf16.mxu0 0
  %287 = vmatpush1.bf16.msra.mxu0 0
  %288 = vmatprep.subr.bf16.mxu0 0
  %289 = vmatpush1.bf16.msra.mxu0 0
  %290 = vmatprep.subr.bf16.mxu0 0
  %291 = vmatpush1.bf16.msra.mxu0 0
  %292 = vmatprep.subr.bf16.mxu0 0
  %293 = vmatpush1.bf16.msra.mxu0 0
  %294 = vmatprep.subr.bf16.mxu0 0
  %295 = vmatpush1.bf16.msra.mxu0 0
  %296 = vmatprep.subr.bf16.mxu0 0
  %297 = vmatpush1.bf16.msra.mxu0 0
  %298 = vmatprep.subr.bf16.mxu0 0
  %299 = vmatpush1.bf16.msra.mxu0 0
  %300 = vmatprep.subr.bf16.mxu0 0
  %301 = vmatpush1.bf16.msra.mxu0 0
  %302 = vmatprep.subr.bf16.mxu0 0
  %303 = vmatpush1.bf16.msra.mxu0 0
  %304 = vmatprep.mubr.bf16.mxu0 0
  %305 = vmatmul.mubr.bf16.gmra.mrb[0].mxu0 %v255
  %v306 = vpop.f32.mrb[0].mxu0
  %v307 = vadd.f32 0.0, %v306
  %v308 = vpop.f32.mrb[0].mxu0
  %v309 = vpop.f32.mrb[0].mxu0
  %v310 = vadd.f32 0.0, %v309
  %v311 = vpop.f32.mrb[0].mxu0
  %312 = vmatprep.mubr.bf16.mxu0 0
  %313 = vmatmul.mubr.bf16.gmra.mrb[0].mxu0 %v258
  %v314 = vpop.f32.mrb[0].mxu0
  %v315 = vadd.f32 0.0, %v314
  %v316 = vpop.f32.mrb[0].mxu0
  %v317 = vpop.f32.mrb[0].mxu0
  %v318 = vadd.f32 0.0, %v317
  %v319 = vpop.f32.mrb[0].mxu0
  %320 = vmatprep.mubr.bf16.mxu0 0
  %321 = vmatmul.mubr.bf16.gmra.mrb[0].mxu0 %v261
  %v322 = vpop.f32.mrb[0].mxu0
  %v323 = vadd.f32 0.0, %v322
  %v324 = vpop.f32.mrb[0].mxu0
  %v325 = vpop.f32.mrb[0].mxu0
  %v326 = vadd.f32 0.0, %v325
  %v327 = vpop.f32.mrb[0].mxu0
  %328 = vmatprep.mubr.bf16.mxu0 0
  %329 = vmatmul.mubr.bf16.gmra.mrb[0].mxu0 %v264
  %v330 = vpop.f32.mrb[0].mxu0
  %v331 = vadd.f32 0.0, %v330
  %v332 = vpop.f32.mrb[0].mxu0
  %v333 = vpop.f32.mrb[0].mxu0
  %v334 = vadd.f32 0.0, %v333
  %v335 = vpop.f32.mrb[0].mxu0
  %336 = vmatprep.mubr.bf16.mxu0 0
  %337 = vmatmul.mubr.bf16.gmra.mrb[0].mxu0 %v267
  %v338 = vpop.f32.mrb[0].mxu0
  %v339 = vadd.f32 0.0, %v338
  %v340 = vpop.f32.mrb[0].mxu0
  %v341 = vpop.f32.mrb[0].mxu0
  %v342 = vadd.f32 0.0, %v341
  %v343 = vpop.f32.mrb[0].mxu0
  %344 = vmatprep.mubr.bf16.mxu0 0
  %345 = vmatmul.mubr.bf16.gmra.mrb[0].mxu0 %v270
  %v346 = vpop.f32.mrb[0].mxu0
  %v347 = vadd.f32 0.0, %v346
  %v348 = vpop.f32.mrb[0].mxu0
  %v349 = vpop.f32.mrb[0].mxu0
  %v350 = vadd.f32 0.0, %v349
  %v351 = vpop.f32.mrb[0].mxu0
  %352 = vdwg.mxu0
  %v353 = vadd.f32 %v193, %v307
  %v354 = vadd.f32 %v194, %v310
  %v355 = vadd.f32 %v195, %v315
  %v356 = vadd.f32 %v196, %v318
  %v357 = vadd.f32 %v197, %v323
  %v358 = vadd.f32 %v198, %v326
  %v359 = vadd.f32 %v199, %v331
  %v360 = vadd.f32 %v200, %v334
  %v361 = vadd.f32 %v201, %v339
  %v362 = vadd.f32 %v202, %v342
  %v363 = vadd.f32 %v203, %v347
  %v364 = vadd.f32 %v204, %v350
  %vm365 = vcmask 130048
  %366 = vst.msk [vmem:[#allocation2] sm:$0xff] %vm365, %v353
  %367 = vst.msk [vmem:[#allocation2 + $0x8] sm:$0xff] %vm365, %v354
  %368 = vst.msk [vmem:[#allocation2 + $0x10] sm:$0xff] %vm365, %v355
  %369 = vst.msk [vmem:[#allocation2 + $0x18] sm:$0xff] %vm365, %v356
  %370 = vst.msk [vmem:[#allocation2 + $0x20] sm:$0xff] %vm365, %v357
  %371 = vst.msk [vmem:[#allocation2 + $0x28] sm:$0xff] %vm365, %v358
  %372 = vst.msk [vmem:[#allocation2 + $0x30] sm:$0xff] %vm365, %v359
  %373 = vst.msk [vmem:[#allocation2 + $0x38] sm:$0xff] %vm365, %v360
  %374 = vst.msk [vmem:[#allocation2 + $0x40] sm:$0xff] %vm365, %v361
  %375 = vst.msk [vmem:[#allocation2 + $0x48] sm:$0xff] %vm365, %v362
  %376 = vst.msk [vmem:[#allocation2 + $0x50] sm:$0xff] %vm365, %v363
  %377 = vst.msk [vmem:[#allocation2 + $0x58] sm:$0xff] %vm365, %v364
  // Predicated region
  $region22: #{my_new_gcn_forward.14} parent=0 // pred_check
    %p378 = pneg %p18
  $region23: #{my_new_gcn_forward.14} parent=0 // pred_check_branch
    %380 = sbr.rel (%p378) target = $region25
  $region24: #{my_new_gcn_forward.14} parent=0 // pred_region
    %v381 = vld [vmem:[#allocation2] sm:$0xff]
    %v382 = vld [vmem:[#allocation2 + $0x8] sm:$0xff]
    %v383 = vld [vmem:[#allocation2 + $0x10] sm:$0xff]
    %v384 = vld [vmem:[#allocation2 + $0x18] sm:$0xff]
    %v385 = vld [vmem:[#allocation2 + $0x20] sm:$0xff]
    %v386 = vld [vmem:[#allocation2 + $0x28] sm:$0xff]
    %v387 = vld [vmem:[#allocation2 + $0x30] sm:$0xff]
    %v388 = vld [vmem:[#allocation2 + $0x38] sm:$0xff]
    %v389 = vld [vmem:[#allocation2 + $0x40] sm:$0xff]
    %v390 = vld [vmem:[#allocation2 + $0x48] sm:$0xff]
    %v391 = vld [vmem:[#allocation2 + $0x50] sm:$0xff]
    %v392 = vld [vmem:[#allocation2 + $0x58] sm:$0xff]
    %v393 = vld [vmem:[%s3] sm:$0x1]
    %v395 = vlaneseq
    %v396 = vshrl.u32 %v395, 7
    %v397 = vsub.s32 0, %v396
    %v398 = vrot.slane %v393, %v397
    %v400 = vadd.f32 %v381, %v398
    %v401 = vadd.f32 %v382, %v398
    %v402 = vadd.f32 %v383, %v398
    %v403 = vadd.f32 %v384, %v398
    %v404 = vadd.f32 %v385, %v398
    %v405 = vadd.f32 %v386, %v398
    %v406 = vadd.f32 %v387, %v398
    %v407 = vadd.f32 %v388, %v398
    %v408 = vadd.f32 %v389, %v398
    %v409 = vadd.f32 %v390, %v398
    %v410 = vadd.f32 %v391, %v398
    %v411 = vadd.f32 %v392, %v398
    %412 = vst.msk [vmem:[%s4] sm:$0xff] %vm365, %v400
    %413 = vst.msk [vmem:[%s4 + $0x8] sm:$0xff] %vm365, %v401
    %414 = vst.msk [vmem:[%s4 + $0x10] sm:$0xff] %vm365, %v402
    %415 = vst.msk [vmem:[%s4 + $0x18] sm:$0xff] %vm365, %v403
    %416 = vst.msk [vmem:[%s4 + $0x20] sm:$0xff] %vm365, %v404
    %417 = vst.msk [vmem:[%s4 + $0x28] sm:$0xff] %vm365, %v405
    %418 = vst.msk [vmem:[%s4 + $0x30] sm:$0xff] %vm365, %v406
    %419 = vst.msk [vmem:[%s4 + $0x38] sm:$0xff] %vm365, %v407
    %420 = vst.msk [vmem:[%s4 + $0x40] sm:$0xff] %vm365, %v408
    %421 = vst.msk [vmem:[%s4 + $0x48] sm:$0xff] %vm365, %v409
    %422 = vst.msk [vmem:[%s4 + $0x50] sm:$0xff] %vm365, %v410
    %423 = vst.msk [vmem:[%s4 + $0x58] sm:$0xff] %vm365, %v411
  $region25: #{my_new_gcn_forward.14} parent=0 // pred_fallthru
    _
  // Predicated region
  $region26: #{my_new_gcn_forward.14} parent=0 // pred_check
    _
  $region27: #{my_new_gcn_forward.14} parent=0 // pred_check_branch
    %425 = sbr.rel (0) target = $region29
  $region28: #{my_new_gcn_forward.14} parent=0 // pred_region
    _
  $region29: #{my_new_gcn_forward.14} parent=0 // pred_fallthru
    _
  // Predicated region
  $region30: #{my_new_gcn_forward.14} parent=0 // pred_check
    _
  $region31: #{my_new_gcn_forward.14} parent=0 // pred_check_branch
    %427 = sbr.rel (0) target = $region33
  $region32: #{my_new_gcn_forward.14} parent=0 // pred_region
    _
  $region33: #{my_new_gcn_forward.14} parent=0 // pred_fallthru
    _

// kernel: my_new_gcn_forward.13
$region0: #{my_new_gcn_forward.13}
  #allocation0 [shape = 'u32[]', space=smem, size = 0x4, offset = 0x4, fixed_abs, tag = 'smem constant byte address 0x4 - core index']
  #allocation1 [shape = 'u32[144,128]{1,0:T(1,128)}', space=vmem, size = 0x12000, scoped, tag = 'internal scratch']
  #allocation2 [shape = 'f32[96,32]{1,0:T(8,128)}', space=vmem, size = 0xc000, scoped, tag = 'scratch operand']
  %s0 = inlined_call_operand.vmem [shape: bf16[96,96], index: 0, kind: input, shape index: {}]
  %s1 = inlined_call_operand.vmem [shape: bf16[96,32], index: 1, kind: input, shape index: {}]
  %s2 = inlined_call_operand.vmem [shape: bf16[32,32], index: 2, kind: input, shape index: {}]
  %s3 = inlined_call_operand.vmem [shape: f32[1,32], index: 3, kind: input, shape index: {}]
  %s4 = inlined_call_operand.vmem [shape: bf16[96,32], index: 4, kind: output, shape index: {}]
  %s5 = sld [smem:[#allocation0]]
  $region34: #{my_new_gcn_forward.13} parent=0
    _
  %s7 = ssub.s32 1, %s5
  %s8 = scalar_select 0, %s7, %s5
  // Predicated region
  $region2: #{my_new_gcn_forward.13} parent=0 // pred_check
    _
  $region3: #{my_new_gcn_forward.13} parent=0 // pred_check_branch
    %10 = sbr.rel (0) target = $region5
  $region4: #{my_new_gcn_forward.13} parent=0 // pred_region
    _
  $region5: #{my_new_gcn_forward.13} parent=0 // pred_fallthru
    _
  // Predicated region
  $region6: #{my_new_gcn_forward.13} parent=0 // pred_check
    _
  $region7: #{my_new_gcn_forward.13} parent=0 // pred_check_branch
    %12 = sbr.rel (0) target = $region9
  $region8: #{my_new_gcn_forward.13} parent=0 // pred_region
    _
  $region9: #{my_new_gcn_forward.13} parent=0 // pred_fallthru
    _
  // Predicated region
  $region10: #{my_new_gcn_forward.13} parent=0 // pred_check
    _
  $region11: #{my_new_gcn_forward.13} parent=0 // pred_check_branch
    %14 = sbr.rel (0) target = $region13
  $region12: #{my_new_gcn_forward.13} parent=0 // pred_region
    _
  $region13: #{my_new_gcn_forward.13} parent=0 // pred_fallthru
    _
  // Predicated region
  $region14: #{my_new_gcn_forward.13} parent=0 // pred_check
    _
  $region15: #{my_new_gcn_forward.13} parent=0 // pred_check_branch
    %16 = sbr.rel (0) target = $region17
  $region16: #{my_new_gcn_forward.13} parent=0 // pred_region
    _
  $region17: #{my_new_gcn_forward.13} parent=0 // pred_fallthru
    _
  %p18 = scmp.eq.s32.totalorder 0, 0
  // Predicated region
  $region18: #{my_new_gcn_forward.13} parent=0 // pred_check
    %p19 = pneg %p18
  $region19: #{my_new_gcn_forward.13} parent=0 // pred_check_branch
    %21 = sbr.rel (%p19) target = $region21
  $region20: #{my_new_gcn_forward.13} parent=0 // pred_region
    %vm22 = vcmask 261120
    %23 = vst.msk [vmem:[#allocation2] sm:$0xff] %vm22, 0.0
    %24 = vst.msk [vmem:[#allocation2 + $0x8] sm:$0xff] %vm22, 0.0
    %25 = vst.msk [vmem:[#allocation2 + $0x10] sm:$0xff] %vm22, 0.0
    %26 = vst.msk [vmem:[#allocation2 + $0x18] sm:$0xff] %vm22, 0.0
    %27 = vst.msk [vmem:[#allocation2 + $0x20] sm:$0xff] %vm22, 0.0
    %28 = vst.msk [vmem:[#allocation2 + $0x28] sm:$0xff] %vm22, 0.0
    %29 = vst.msk [vmem:[#allocation2 + $0x30] sm:$0xff] %vm22, 0.0
    %30 = vst.msk [vmem:[#allocation2 + $0x38] sm:$0xff] %vm22, 0.0
    %31 = vst.msk [vmem:[#allocation2 + $0x40] sm:$0xff] %vm22, 0.0
    %32 = vst.msk [vmem:[#allocation2 + $0x48] sm:$0xff] %vm22, 0.0
    %33 = vst.msk [vmem:[#allocation2 + $0x50] sm:$0xff] %vm22, 0.0
    %34 = vst.msk [vmem:[#allocation2 + $0x58] sm:$0xff] %vm22, 0.0
  $region21: #{my_new_gcn_forward.13} parent=0 // pred_fallthru
    _
  %v35 = vld [vmem:[%s1] sm:$0xf]
  %v36 = vld [vmem:[%s1 + $0x4] sm:$0xf]
  %v37 = vld [vmem:[%s1 + $0x8] sm:$0xf]
  %v38 = vld [vmem:[%s1 + $0xc] sm:$0xf]
  %v39 = vld [vmem:[%s1 + $0x10] sm:$0xf]
  %v40 = vld [vmem:[%s1 + $0x14] sm:$0xf]
  %v41 = vld [vmem:[%s1 + $0x18] sm:$0xf]
  %v42 = vld [vmem:[%s1 + $0x1c] sm:$0xf]
  %v43 = vld [vmem:[%s1 + $0x20] sm:$0xf]
  %v44 = vld [vmem:[%s1 + $0x24] sm:$0xf]
  %v45 = vld [vmem:[%s1 + $0x28] sm:$0xf]
  %v46 = vld [vmem:[%s1 + $0x2c] sm:$0xf]
  %v47 = vld [vmem:[%s2] sm:$0xf]
  %v48 = vld [vmem:[%s2 + $0x4] sm:$0xf]
  %v49 = vld [vmem:[%s2 + $0x8] sm:$0xf]
  %v50 = vld [vmem:[%s2 + $0xc] sm:$0xf]
  %v63 = vunpack.c.l.b16 %v35
  %v64 = vunpack.c.l.b16 %v36
  %v65 = vunpack.c.l.b16 %v37
  %v66 = vunpack.c.l.b16 %v38
  %v67 = vunpack.c.l.b16 %v39
  %v68 = vunpack.c.l.b16 %v40
  %v69 = vunpack.c.l.b16 %v41
  %v70 = vunpack.c.l.b16 %v42
  %v71 = vunpack.c.l.b16 %v43
  %v72 = vunpack.c.l.b16 %v44
  %v73 = vunpack.c.l.b16 %v45
  %v74 = vunpack.c.l.b16 %v46
  %v75 = vpack.c.b16 %v64, %v63
  %v76 = vpack.c.b16 %v66, %v65
  %v77 = vpack.c.b16 %v68, %v67
  %v78 = vpack.c.b16 %v70, %v69
  %v79 = vpack.c.b16 %v72, %v71
  %v80 = vpack.c.b16 %v74, %v73
  %v85 = vunpack.c.l.b16 %v47
  %v86 = vunpack.c.l.b16 %v48
  %v87 = vunpack.c.l.b16 %v49
  %v88 = vunpack.c.l.b16 %v50
  %v89 = vpack.c.b16 %v86, %v85
  %v90 = vpack.c.b16 %v88, %v87
  %vm93 = vcmask 261120
  %v95 = vsel %vm93, %v75, 0
  %v98 = vsel %vm93, %v76, 0
  %v101 = vsel %vm93, %v77, 0
  %v104 = vsel %vm93, %v78, 0
  %v107 = vsel %vm93, %v79, 0
  %v110 = vsel %vm93, %v80, 0
  %112 = vmatprep.subr.bf16.mxu0 0
  %113 = vmatpush1.bf16.msra.mxu0 %v89
  %114 = vmatprep.subr.bf16.mxu0 0
  %115 = vmatpush1.bf16.msra.mxu0 %v90
  %116 = vmatprep.subr.bf16.mxu0 0
  %117 = vmatpush1.bf16.msra.mxu0 0
  %118 = vmatprep.subr.bf16.mxu0 0
  %119 = vmatpush1.bf16.msra.mxu0 0
  %120 = vmatprep.subr.bf16.mxu0 0
  %121 = vmatpush1.bf16.msra.mxu0 0
  %122 = vmatprep.subr.bf16.mxu0 0
  %123 = vmatpush1.bf16.msra.mxu0 0
  %124 = vmatprep.subr.bf16.mxu0 0
  %125 = vmatpush1.bf16.msra.mxu0 0
  %126 = vmatprep.subr.bf16.mxu0 0
  %127 = vmatpush1.bf16.msra.mxu0 0
  %128 = vmatprep.subr.bf16.mxu0 0
  %129 = vmatpush1.bf16.msra.mxu0 0
  %130 = vmatprep.subr.bf16.mxu0 0
  %131 = vmatpush1.bf16.msra.mxu0 0
  %132 = vmatprep.subr.bf16.mxu0 0
  %133 = vmatpush1.bf16.msra.mxu0 0
  %134 = vmatprep.subr.bf16.mxu0 0
  %135 = vmatpush1.bf16.msra.mxu0 0
  %136 = vmatprep.subr.bf16.mxu0 0
  %137 = vmatpush1.bf16.msra.mxu0 0
  %138 = vmatprep.subr.bf16.mxu0 0
  %139 = vmatpush1.bf16.msra.mxu0 0
  %140 = vmatprep.subr.bf16.mxu0 0
  %141 = vmatpush1.bf16.msra.mxu0 0
  %142 = vmatprep.subr.bf16.mxu0 0
  %143 = vmatpush1.bf16.msra.mxu0 0
  %144 = vmatprep.mubr.bf16.mxu0 0
  %145 = vmatmul.mubr.bf16.gmra.mrb[0].mxu0 %v95
  %v146 = vpop.f32.mrb[0].mxu0
  %v147 = vadd.f32 0.0, %v146
  %v148 = vpop.f32.mrb[0].mxu0
  %v149 = vpop.f32.mrb[0].mxu0
  %v150 = vadd.f32 0.0, %v149
  %v151 = vpop.f32.mrb[0].mxu0
  %152 = vmatprep.mubr.bf16.mxu0 0
  %153 = vmatmul.mubr.bf16.gmra.mrb[0].mxu0 %v98
  %v154 = vpop.f32.mrb[0].mxu0
  %v155 = vadd.f32 0.0, %v154
  %v156 = vpop.f32.mrb[0].mxu0
  %v157 = vpop.f32.mrb[0].mxu0
  %v158 = vadd.f32 0.0, %v157
  %v159 = vpop.f32.mrb[0].mxu0
  %160 = vmatprep.mubr.bf16.mxu0 0
  %161 = vmatmul.mubr.bf16.gmra.mrb[0].mxu0 %v101
  %v162 = vpop.f32.mrb[0].mxu0
  %v163 = vadd.f32 0.0, %v162
  %v164 = vpop.f32.mrb[0].mxu0
  %v165 = vpop.f32.mrb[0].mxu0
  %v166 = vadd.f32 0.0, %v165
  %v167 = vpop.f32.mrb[0].mxu0
  %168 = vmatprep.mubr.bf16.mxu0 0
  %169 = vmatmul.mubr.bf16.gmra.mrb[0].mxu0 %v104
  %v170 = vpop.f32.mrb[0].mxu0
  %v171 = vadd.f32 0.0, %v170
  %v172 = vpop.f32.mrb[0].mxu0
  %v173 = vpop.f32.mrb[0].mxu0
  %v174 = vadd.f32 0.0, %v173
  %v175 = vpop.f32.mrb[0].mxu0
  %176 = vmatprep.mubr.bf16.mxu0 0
  %177 = vmatmul.mubr.bf16.gmra.mrb[0].mxu0 %v107
  %v178 = vpop.f32.mrb[0].mxu0
  %v179 = vadd.f32 0.0, %v178
  %v180 = vpop.f32.mrb[0].mxu0
  %v181 = vpop.f32.mrb[0].mxu0
  %v182 = vadd.f32 0.0, %v181
  %v183 = vpop.f32.mrb[0].mxu0
  %184 = vmatprep.mubr.bf16.mxu0 0
  %185 = vmatmul.mubr.bf16.gmra.mrb[0].mxu0 %v110
  %v186 = vpop.f32.mrb[0].mxu0
  %v187 = vadd.f32 0.0, %v186
  %v188 = vpop.f32.mrb[0].mxu0
  %v189 = vpop.f32.mrb[0].mxu0
  %v190 = vadd.f32 0.0, %v189
  %v191 = vpop.f32.mrb[0].mxu0
  %192 = vdwg.mxu0
  %v193 = vld [vmem:[#allocation2] sm:$0xff]
  %v194 = vld [vmem:[#allocation2 + $0x8] sm:$0xff]
  %v195 = vld [vmem:[#allocation2 + $0x10] sm:$0xff]
  %v196 = vld [vmem:[#allocation2 + $0x18] sm:$0xff]
  %v197 = vld [vmem:[#allocation2 + $0x20] sm:$0xff]
  %v198 = vld [vmem:[#allocation2 + $0x28] sm:$0xff]
  %v199 = vld [vmem:[#allocation2 + $0x30] sm:$0xff]
  %v200 = vld [vmem:[#allocation2 + $0x38] sm:$0xff]
  %v201 = vld [vmem:[#allocation2 + $0x40] sm:$0xff]
  %v202 = vld [vmem:[#allocation2 + $0x48] sm:$0xff]
  %v203 = vld [vmem:[#allocation2 + $0x50] sm:$0xff]
  %v204 = vld [vmem:[#allocation2 + $0x58] sm:$0xff]
  %v205 = vld [vmem:[%s0] sm:$0xf]
  %v206 = vld [vmem:[%s0 + $0x4] sm:$0xf]
  %v207 = vld [vmem:[%s0 + $0x8] sm:$0xf]
  %v208 = vld [vmem:[%s0 + $0xc] sm:$0xf]
  %v209 = vld [vmem:[%s0 + $0x10] sm:$0xf]
  %v210 = vld [vmem:[%s0 + $0x14] sm:$0xf]
  %v211 = vld [vmem:[%s0 + $0x18] sm:$0xf]
  %v212 = vld [vmem:[%s0 + $0x1c] sm:$0xf]
  %v213 = vld [vmem:[%s0 + $0x20] sm:$0xf]
  %v214 = vld [vmem:[%s0 + $0x24] sm:$0xf]
  %v215 = vld [vmem:[%s0 + $0x28] sm:$0xf]
  %v216 = vld [vmem:[%s0 + $0x2c] sm:$0xf]
  %v217 = vpack.c.bf16 %v150, %v147
  %v218 = vpack.c.bf16 %v158, %v155
  %v219 = vpack.c.bf16 %v166, %v163
  %v220 = vpack.c.bf16 %v174, %v171
  %v221 = vpack.c.bf16 %v182, %v179
  %v222 = vpack.c.bf16 %v190, %v187
  %v235 = vunpack.c.l.b16 %v205
  %v236 = vunpack.c.l.b16 %v206
  %v237 = vunpack.c.l.b16 %v207
  %v238 = vunpack.c.l.b16 %v208
  %v239 = vunpack.c.l.b16 %v209
  %v240 = vunpack.c.l.b16 %v210
  %v241 = vunpack.c.l.b16 %v211
  %v242 = vunpack.c.l.b16 %v212
  %v243 = vunpack.c.l.b16 %v213
  %v244 = vunpack.c.l.b16 %v214
  %v245 = vunpack.c.l.b16 %v215
  %v246 = vunpack.c.l.b16 %v216
  %v247 = vpack.c.b16 %v236, %v235
  %v248 = vpack.c.b16 %v238, %v237
  %v249 = vpack.c.b16 %v240, %v239
  %v250 = vpack.c.b16 %v242, %v241
  %v251 = vpack.c.b16 %v244, %v243
  %v252 = vpack.c.b16 %v246, %v245
  %vm253 = vcmask 785408
  %v255 = vsel %vm253, %v247, 0
  %v258 = vsel %vm253, %v248, 0
  %v261 = vsel %vm253, %v249, 0
  %v264 = vsel %vm253, %v250, 0
  %v267 = vsel %vm253, %v251, 0
  %v270 = vsel %vm253, %v252, 0
  %272 = vmatprep.subr.bf16.mxu0 0
  %273 = vmatpush1.bf16.msra.mxu0 %v217
  %274 = vmatprep.subr.bf16.mxu0 0
  %275 = vmatpush1.bf16.msra.mxu0 %v218
  %276 = vmatprep.subr.bf16.mxu0 0
  %277 = vmatpush1.bf16.msra.mxu0 %v219
  %278 = vmatprep.subr.bf16.mxu0 0
  %279 = vmatpush1.bf16.msra.mxu0 %v220
  %280 = vmatprep.subr.bf16.mxu0 0
  %281 = vmatpush1.bf16.msra.mxu0 %v221
  %282 = vmatprep.subr.bf16.mxu0 0
  %283 = vmatpush1.bf16.msra.mxu0 %v222
  %284 = vmatprep.subr.bf16.mxu0 0
  %285 = vmatpush1.bf16.msra.mxu0 0
  %286 = vmatprep.subr.bf16.mxu0 0
  %287 = vmatpush1.bf16.msra.mxu0 0
  %288 = vmatprep.subr.bf16.mxu0 0
  %289 = vmatpush1.bf16.msra.mxu0 0
  %290 = vmatprep.subr.bf16.mxu0 0
  %291 = vmatpush1.bf16.msra.mxu0 0
  %292 = vmatprep.subr.bf16.mxu0 0
  %293 = vmatpush1.bf16.msra.mxu0 0
  %294 = vmatprep.subr.bf16.mxu0 0
  %295 = vmatpush1.bf16.msra.mxu0 0
  %296 = vmatprep.subr.bf16.mxu0 0
  %297 = vmatpush1.bf16.msra.mxu0 0
  %298 = vmatprep.subr.bf16.mxu0 0
  %299 = vmatpush1.bf16.msra.mxu0 0
  %300 = vmatprep.subr.bf16.mxu0 0
  %301 = vmatpush1.bf16.msra.mxu0 0
  %302 = vmatprep.subr.bf16.mxu0 0
  %303 = vmatpush1.bf16.msra.mxu0 0
  %304 = vmatprep.mubr.bf16.mxu0 0
  %305 = vmatmul.mubr.bf16.gmra.mrb[0].mxu0 %v255
  %v306 = vpop.f32.mrb[0].mxu0
  %v307 = vadd.f32 0.0, %v306
  %v308 = vpop.f32.mrb[0].mxu0
  %v309 = vpop.f32.mrb[0].mxu0
  %v310 = vadd.f32 0.0, %v309
  %v311 = vpop.f32.mrb[0].mxu0
  %312 = vmatprep.mubr.bf16.mxu0 0
  %313 = vmatmul.mubr.bf16.gmra.mrb[0].mxu0 %v258
  %v314 = vpop.f32.mrb[0].mxu0
  %v315 = vadd.f32 0.0, %v314
  %v316 = vpop.f32.mrb[0].mxu0
  %v317 = vpop.f32.mrb[0].mxu0
  %v318 = vadd.f32 0.0, %v317
  %v319 = vpop.f32.mrb[0].mxu0
  %320 = vmatprep.mubr.bf16.mxu0 0
  %321 = vmatmul.mubr.bf16.gmra.mrb[0].mxu0 %v261
  %v322 = vpop.f32.mrb[0].mxu0
  %v323 = vadd.f32 0.0, %v322
  %v324 = vpop.f32.mrb[0].mxu0
  %v325 = vpop.f32.mrb[0].mxu0
  %v326 = vadd.f32 0.0, %v325
  %v327 = vpop.f32.mrb[0].mxu0
  %328 = vmatprep.mubr.bf16.mxu0 0
  %329 = vmatmul.mubr.bf16.gmra.mrb[0].mxu0 %v264
  %v330 = vpop.f32.mrb[0].mxu0
  %v331 = vadd.f32 0.0, %v330
  %v332 = vpop.f32.mrb[0].mxu0
  %v333 = vpop.f32.mrb[0].mxu0
  %v334 = vadd.f32 0.0, %v333
  %v335 = vpop.f32.mrb[0].mxu0
  %336 = vmatprep.mubr.bf16.mxu0 0
  %337 = vmatmul.mubr.bf16.gmra.mrb[0].mxu0 %v267
  %v338 = vpop.f32.mrb[0].mxu0
  %v339 = vadd.f32 0.0, %v338
  %v340 = vpop.f32.mrb[0].mxu0
  %v341 = vpop.f32.mrb[0].mxu0
  %v342 = vadd.f32 0.0, %v341
  %v343 = vpop.f32.mrb[0].mxu0
  %344 = vmatprep.mubr.bf16.mxu0 0
  %345 = vmatmul.mubr.bf16.gmra.mrb[0].mxu0 %v270
  %v346 = vpop.f32.mrb[0].mxu0
  %v347 = vadd.f32 0.0, %v346
  %v348 = vpop.f32.mrb[0].mxu0
  %v349 = vpop.f32.mrb[0].mxu0
  %v350 = vadd.f32 0.0, %v349
  %v351 = vpop.f32.mrb[0].mxu0
  %352 = vdwg.mxu0
  %v353 = vadd.f32 %v193, %v307
  %v354 = vadd.f32 %v194, %v310
  %v355 = vadd.f32 %v195, %v315
  %v356 = vadd.f32 %v196, %v318
  %v357 = vadd.f32 %v197, %v323
  %v358 = vadd.f32 %v198, %v326
  %v359 = vadd.f32 %v199, %v331
  %v360 = vadd.f32 %v200, %v334
  %v361 = vadd.f32 %v201, %v339
  %v362 = vadd.f32 %v202, %v342
  %v363 = vadd.f32 %v203, %v347
  %v364 = vadd.f32 %v204, %v350
  %365 = vst.msk [vmem:[#allocation2] sm:$0xff] %vm93, %v353
  %366 = vst.msk [vmem:[#allocation2 + $0x8] sm:$0xff] %vm93, %v354
  %367 = vst.msk [vmem:[#allocation2 + $0x10] sm:$0xff] %vm93, %v355
  %368 = vst.msk [vmem:[#allocation2 + $0x18] sm:$0xff] %vm93, %v356
  %369 = vst.msk [vmem:[#allocation2 + $0x20] sm:$0xff] %vm93, %v357
  %370 = vst.msk [vmem:[#allocation2 + $0x28] sm:$0xff] %vm93, %v358
  %371 = vst.msk [vmem:[#allocation2 + $0x30] sm:$0xff] %vm93, %v359
  %372 = vst.msk [vmem:[#allocation2 + $0x38] sm:$0xff] %vm93, %v360
  %373 = vst.msk [vmem:[#allocation2 + $0x40] sm:$0xff] %vm93, %v361
  %374 = vst.msk [vmem:[#allocation2 + $0x48] sm:$0xff] %vm93, %v362
  %375 = vst.msk [vmem:[#allocation2 + $0x50] sm:$0xff] %vm93, %v363
  %376 = vst.msk [vmem:[#allocation2 + $0x58] sm:$0xff] %vm93, %v364
  // Predicated region
  $region22: #{my_new_gcn_forward.13} parent=0 // pred_check
    %p377 = pneg %p18
  $region23: #{my_new_gcn_forward.13} parent=0 // pred_check_branch
    %379 = sbr.rel (%p377) target = $region25
  $region24: #{my_new_gcn_forward.13} parent=0 // pred_region
    %v380 = vld [vmem:[#allocation2] sm:$0xff]
    %v381 = vld [vmem:[#allocation2 + $0x8] sm:$0xff]
    %v382 = vld [vmem:[#allocation2 + $0x10] sm:$0xff]
    %v383 = vld [vmem:[#allocation2 + $0x18] sm:$0xff]
    %v384 = vld [vmem:[#allocation2 + $0x20] sm:$0xff]
    %v385 = vld [vmem:[#allocation2 + $0x28] sm:$0xff]
    %v386 = vld [vmem:[#allocation2 + $0x30] sm:$0xff]
    %v387 = vld [vmem:[#allocation2 + $0x38] sm:$0xff]
    %v388 = vld [vmem:[#allocation2 + $0x40] sm:$0xff]
    %v389 = vld [vmem:[#allocation2 + $0x48] sm:$0xff]
    %v390 = vld [vmem:[#allocation2 + $0x50] sm:$0xff]
    %v391 = vld [vmem:[#allocation2 + $0x58] sm:$0xff]
    %v392 = vld [vmem:[%s3] sm:$0x1]
    %v394 = vlaneseq
    %v395 = vshrl.u32 %v394, 7
    %v396 = vsub.s32 0, %v395
    %v397 = vrot.slane %v392, %v396
    %v399 = vadd.f32 %v380, %v397
    %v400 = vadd.f32 %v381, %v397
    %v401 = vadd.f32 %v382, %v397
    %v402 = vadd.f32 %v383, %v397
    %v403 = vadd.f32 %v384, %v397
    %v404 = vadd.f32 %v385, %v397
    %v405 = vadd.f32 %v386, %v397
    %v406 = vadd.f32 %v387, %v397
    %v407 = vadd.f32 %v388, %v397
    %v408 = vadd.f32 %v389, %v397
    %v409 = vadd.f32 %v390, %v397
    %v410 = vadd.f32 %v391, %v397
    %v411 = vmax.f32 %v399, 0.0
    %v412 = vmax.f32 %v400, 0.0
    %v413 = vmax.f32 %v401, 0.0
    %v414 = vmax.f32 %v402, 0.0
    %v415 = vmax.f32 %v403, 0.0
    %v416 = vmax.f32 %v404, 0.0
    %v417 = vmax.f32 %v405, 0.0
    %v418 = vmax.f32 %v406, 0.0
    %v419 = vmax.f32 %v407, 0.0
    %v420 = vmax.f32 %v408, 0.0
    %v421 = vmax.f32 %v409, 0.0
    %v422 = vmax.f32 %v410, 0.0
    %v423 = vpack.c.bf16 %v412, %v411
    %v424 = vpack.c.bf16 %v414, %v413
    %v425 = vpack.c.bf16 %v416, %v415
    %v426 = vpack.c.bf16 %v418, %v417
    %v427 = vpack.c.bf16 %v420, %v419
    %v428 = vpack.c.bf16 %v422, %v421
    %v435 = vunpack.c.l.b16 %v423
    %v436 = vunpack.c.h.b16 %v423
    %v437 = vunpack.c.l.b16 %v424
    %v438 = vunpack.c.h.b16 %v424
    %v439 = vunpack.c.l.b16 %v425
    %v440 = vunpack.c.h.b16 %v425
    %v441 = vunpack.c.l.b16 %v426
    %v442 = vunpack.c.h.b16 %v426
    %v443 = vunpack.c.l.b16 %v427
    %v444 = vunpack.c.h.b16 %v427
    %v445 = vunpack.c.l.b16 %v428
    %v446 = vunpack.c.h.b16 %v428
    %v447 = vpack.c.b16 %v435, %v435
    %v448 = vpack.c.b16 %v436, %v436
    %v449 = vpack.c.b16 %v437, %v437
    %v450 = vpack.c.b16 %v438, %v438
    %v451 = vpack.c.b16 %v439, %v439
    %v452 = vpack.c.b16 %v440, %v440
    %v453 = vpack.c.b16 %v441, %v441
    %v454 = vpack.c.b16 %v442, %v442
    %v455 = vpack.c.b16 %v443, %v443
    %v456 = vpack.c.b16 %v444, %v444
    %v457 = vpack.c.b16 %v445, %v445
    %v458 = vpack.c.b16 %v446, %v446
    %vm471 = vcmask 257024
    %472 = vst.msk [vmem:[%s4] sm:$0xf] %vm471, %v447
    %473 = vst.msk [vmem:[%s4 + $0x4] sm:$0xf] %vm471, %v448
    %474 = vst.msk [vmem:[%s4 + $0x8] sm:$0xf] %vm471, %v449
    %475 = vst.msk [vmem:[%s4 + $0xc] sm:$0xf] %vm471, %v450
    %476 = vst.msk [vmem:[%s4 + $0x10] sm:$0xf] %vm471, %v451
    %477 = vst.msk [vmem:[%s4 + $0x14] sm:$0xf] %vm471, %v452
    %478 = vst.msk [vmem:[%s4 + $0x18] sm:$0xf] %vm471, %v453
    %479 = vst.msk [vmem:[%s4 + $0x1c] sm:$0xf] %vm471, %v454
    %480 = vst.msk [vmem:[%s4 + $0x20] sm:$0xf] %vm471, %v455
    %481 = vst.msk [vmem:[%s4 + $0x24] sm:$0xf] %vm471, %v456
    %482 = vst.msk [vmem:[%s4 + $0x28] sm:$0xf] %vm471, %v457
    %483 = vst.msk [vmem:[%s4 + $0x2c] sm:$0xf] %vm471, %v458
  $region25: #{my_new_gcn_forward.13} parent=0 // pred_fallthru
    _
  // Predicated region
  $region26: #{my_new_gcn_forward.13} parent=0 // pred_check
    _
  $region27: #{my_new_gcn_forward.13} parent=0 // pred_check_branch
    %485 = sbr.rel (0) target = $region29
  $region28: #{my_new_gcn_forward.13} parent=0 // pred_region
    _
  $region29: #{my_new_gcn_forward.13} parent=0 // pred_fallthru
    _
  // Predicated region
  $region30: #{my_new_gcn_forward.13} parent=0 // pred_check
    _
  $region31: #{my_new_gcn_forward.13} parent=0 // pred_check_branch
    %487 = sbr.rel (0) target = $region33
  $region32: #{my_new_gcn_forward.13} parent=0 // pred_region
    _
  $region33: #{my_new_gcn_forward.13} parent=0 // pred_fallthru
    _

// kernel: my_new_gcn_forward.11
$region0: #{my_new_gcn_forward.11}
  #allocation0 [shape = 'u32[]', space=smem, size = 0x4, offset = 0x4, fixed_abs, tag = 'smem constant byte address 0x4 - core index']
  #allocation1 [shape = 'u32[144,128]{1,0:T(1,128)}', space=vmem, size = 0x12000, scoped, tag = 'internal scratch']
  #allocation2 [shape = 'f32[64,32]{1,0:T(8,128)}', space=vmem, size = 0x8000, scoped, tag = 'scratch operand']
  %s0 = inlined_call_operand.vmem [shape: bf16[64,64], index: 0, kind: input, shape index: {}]
  %s1 = inlined_call_operand.vmem [shape: bf16[64,32], index: 1, kind: input, shape index: {}]
  %s2 = inlined_call_operand.vmem [shape: bf16[32,32], index: 2, kind: input, shape index: {}]
  %s3 = inlined_call_operand.vmem [shape: f32[1,32], index: 3, kind: input, shape index: {}]
  %s4 = inlined_call_operand.vmem [shape: bf16[64,32], index: 4, kind: output, shape index: {}]
  %s5 = sld [smem:[#allocation0]]
  $region34: #{my_new_gcn_forward.11} parent=0
    _
  %s7 = ssub.s32 1, %s5
  %s8 = scalar_select 0, %s7, %s5
  // Predicated region
  $region2: #{my_new_gcn_forward.11} parent=0 // pred_check
    _
  $region3: #{my_new_gcn_forward.11} parent=0 // pred_check_branch
    %10 = sbr.rel (0) target = $region5
  $region4: #{my_new_gcn_forward.11} parent=0 // pred_region
    _
  $region5: #{my_new_gcn_forward.11} parent=0 // pred_fallthru
    _
  // Predicated region
  $region6: #{my_new_gcn_forward.11} parent=0 // pred_check
    _
  $region7: #{my_new_gcn_forward.11} parent=0 // pred_check_branch
    %12 = sbr.rel (0) target = $region9
  $region8: #{my_new_gcn_forward.11} parent=0 // pred_region
    _
  $region9: #{my_new_gcn_forward.11} parent=0 // pred_fallthru
    _
  // Predicated region
  $region10: #{my_new_gcn_forward.11} parent=0 // pred_check
    _
  $region11: #{my_new_gcn_forward.11} parent=0 // pred_check_branch
    %14 = sbr.rel (0) target = $region13
  $region12: #{my_new_gcn_forward.11} parent=0 // pred_region
    _
  $region13: #{my_new_gcn_forward.11} parent=0 // pred_fallthru
    _
  // Predicated region
  $region14: #{my_new_gcn_forward.11} parent=0 // pred_check
    _
  $region15: #{my_new_gcn_forward.11} parent=0 // pred_check_branch
    %16 = sbr.rel (0) target = $region17
  $region16: #{my_new_gcn_forward.11} parent=0 // pred_region
    _
  $region17: #{my_new_gcn_forward.11} parent=0 // pred_fallthru
    _
  %p18 = scmp.eq.s32.totalorder 0, 0
  // Predicated region
  $region18: #{my_new_gcn_forward.11} parent=0 // pred_check
    %p19 = pneg %p18
  $region19: #{my_new_gcn_forward.11} parent=0 // pred_check_branch
    %21 = sbr.rel (%p19) target = $region21
  $region20: #{my_new_gcn_forward.11} parent=0 // pred_region
    %vm22 = vcmask 261120
    %23 = vst.msk [vmem:[#allocation2] sm:$0xff] %vm22, 0.0
    %24 = vst.msk [vmem:[#allocation2 + $0x8] sm:$0xff] %vm22, 0.0
    %25 = vst.msk [vmem:[#allocation2 + $0x10] sm:$0xff] %vm22, 0.0
    %26 = vst.msk [vmem:[#allocation2 + $0x18] sm:$0xff] %vm22, 0.0
    %27 = vst.msk [vmem:[#allocation2 + $0x20] sm:$0xff] %vm22, 0.0
    %28 = vst.msk [vmem:[#allocation2 + $0x28] sm:$0xff] %vm22, 0.0
    %29 = vst.msk [vmem:[#allocation2 + $0x30] sm:$0xff] %vm22, 0.0
    %30 = vst.msk [vmem:[#allocation2 + $0x38] sm:$0xff] %vm22, 0.0
  $region21: #{my_new_gcn_forward.11} parent=0 // pred_fallthru
    _
  %v31 = vld [vmem:[%s1] sm:$0xf]
  %v32 = vld [vmem:[%s1 + $0x4] sm:$0xf]
  %v33 = vld [vmem:[%s1 + $0x8] sm:$0xf]
  %v34 = vld [vmem:[%s1 + $0xc] sm:$0xf]
  %v35 = vld [vmem:[%s1 + $0x10] sm:$0xf]
  %v36 = vld [vmem:[%s1 + $0x14] sm:$0xf]
  %v37 = vld [vmem:[%s1 + $0x18] sm:$0xf]
  %v38 = vld [vmem:[%s1 + $0x1c] sm:$0xf]
  %v39 = vld [vmem:[%s2] sm:$0xf]
  %v40 = vld [vmem:[%s2 + $0x4] sm:$0xf]
  %v41 = vld [vmem:[%s2 + $0x8] sm:$0xf]
  %v42 = vld [vmem:[%s2 + $0xc] sm:$0xf]
  %v51 = vunpack.c.l.b16 %v31
  %v52 = vunpack.c.l.b16 %v32
  %v53 = vunpack.c.l.b16 %v33
  %v54 = vunpack.c.l.b16 %v34
  %v55 = vunpack.c.l.b16 %v35
  %v56 = vunpack.c.l.b16 %v36
  %v57 = vunpack.c.l.b16 %v37
  %v58 = vunpack.c.l.b16 %v38
  %v59 = vpack.c.b16 %v52, %v51
  %v60 = vpack.c.b16 %v54, %v53
  %v61 = vpack.c.b16 %v56, %v55
  %v62 = vpack.c.b16 %v58, %v57
  %v67 = vunpack.c.l.b16 %v39
  %v68 = vunpack.c.l.b16 %v40
  %v69 = vunpack.c.l.b16 %v41
  %v70 = vunpack.c.l.b16 %v42
  %v71 = vpack.c.b16 %v68, %v67
  %v72 = vpack.c.b16 %v70, %v69
  %vm75 = vcmask 261120
  %v77 = vsel %vm75, %v59, 0
  %v80 = vsel %vm75, %v60, 0
  %v83 = vsel %vm75, %v61, 0
  %v86 = vsel %vm75, %v62, 0
  %88 = vmatprep.subr.bf16.mxu0 0
  %89 = vmatpush1.bf16.msra.mxu0 %v71
  %90 = vmatprep.subr.bf16.mxu0 0
  %91 = vmatpush1.bf16.msra.mxu0 %v72
  %92 = vmatprep.subr.bf16.mxu0 0
  %93 = vmatpush1.bf16.msra.mxu0 0
  %94 = vmatprep.subr.bf16.mxu0 0
  %95 = vmatpush1.bf16.msra.mxu0 0
  %96 = vmatprep.subr.bf16.mxu0 0
  %97 = vmatpush1.bf16.msra.mxu0 0
  %98 = vmatprep.subr.bf16.mxu0 0
  %99 = vmatpush1.bf16.msra.mxu0 0
  %100 = vmatprep.subr.bf16.mxu0 0
  %101 = vmatpush1.bf16.msra.mxu0 0
  %102 = vmatprep.subr.bf16.mxu0 0
  %103 = vmatpush1.bf16.msra.mxu0 0
  %104 = vmatprep.subr.bf16.mxu0 0
  %105 = vmatpush1.bf16.msra.mxu0 0
  %106 = vmatprep.subr.bf16.mxu0 0
  %107 = vmatpush1.bf16.msra.mxu0 0
  %108 = vmatprep.subr.bf16.mxu0 0
  %109 = vmatpush1.bf16.msra.mxu0 0
  %110 = vmatprep.subr.bf16.mxu0 0
  %111 = vmatpush1.bf16.msra.mxu0 0
  %112 = vmatprep.subr.bf16.mxu0 0
  %113 = vmatpush1.bf16.msra.mxu0 0
  %114 = vmatprep.subr.bf16.mxu0 0
  %115 = vmatpush1.bf16.msra.mxu0 0
  %116 = vmatprep.subr.bf16.mxu0 0
  %117 = vmatpush1.bf16.msra.mxu0 0
  %118 = vmatprep.subr.bf16.mxu0 0
  %119 = vmatpush1.bf16.msra.mxu0 0
  %120 = vmatprep.mubr.bf16.mxu0 0
  %121 = vmatmul.mubr.bf16.gmra.mrb[0].mxu0 %v77
  %v122 = vpop.f32.mrb[0].mxu0
  %v123 = vadd.f32 0.0, %v122
  %v124 = vpop.f32.mrb[0].mxu0
  %v125 = vpop.f32.mrb[0].mxu0
  %v126 = vadd.f32 0.0, %v125
  %v127 = vpop.f32.mrb[0].mxu0
  %128 = vmatprep.mubr.bf16.mxu0 0
  %129 = vmatmul.mubr.bf16.gmra.mrb[0].mxu0 %v80
  %v130 = vpop.f32.mrb[0].mxu0
  %v131 = vadd.f32 0.0, %v130
  %v132 = vpop.f32.mrb[0].mxu0
  %v133 = vpop.f32.mrb[0].mxu0
  %v134 = vadd.f32 0.0, %v133
  %v135 = vpop.f32.mrb[0].mxu0
  %136 = vmatprep.mubr.bf16.mxu0 0
  %137 = vmatmul.mubr.bf16.gmra.mrb[0].mxu0 %v83
  %v138 = vpop.f32.mrb[0].mxu0
  %v139 = vadd.f32 0.0, %v138
  %v140 = vpop.f32.mrb[0].mxu0
  %v141 = vpop.f32.mrb[0].mxu0
  %v142 = vadd.f32 0.0, %v141
  %v143 = vpop.f32.mrb[0].mxu0
  %144 = vmatprep.mubr.bf16.mxu0 0
  %145 = vmatmul.mubr.bf16.gmra.mrb[0].mxu0 %v86
  %v146 = vpop.f32.mrb[0].mxu0
  %v147 = vadd.f32 0.0, %v146
  %v148 = vpop.f32.mrb[0].mxu0
  %v149 = vpop.f32.mrb[0].mxu0
  %v150 = vadd.f32 0.0, %v149
  %v151 = vpop.f32.mrb[0].mxu0
  %152 = vdwg.mxu0
  %v153 = vld [vmem:[#allocation2] sm:$0xff]
  %v154 = vld [vmem:[#allocation2 + $0x8] sm:$0xff]
  %v155 = vld [vmem:[#allocation2 + $0x10] sm:$0xff]
  %v156 = vld [vmem:[#allocation2 + $0x18] sm:$0xff]
  %v157 = vld [vmem:[#allocation2 + $0x20] sm:$0xff]
  %v158 = vld [vmem:[#allocation2 + $0x28] sm:$0xff]
  %v159 = vld [vmem:[#allocation2 + $0x30] sm:$0xff]
  %v160 = vld [vmem:[#allocation2 + $0x38] sm:$0xff]
  %v161 = vld [vmem:[%s0] sm:$0xf]
  %v162 = vld [vmem:[%s0 + $0x4] sm:$0xf]
  %v163 = vld [vmem:[%s0 + $0x8] sm:$0xf]
  %v164 = vld [vmem:[%s0 + $0xc] sm:$0xf]
  %v165 = vld [vmem:[%s0 + $0x10] sm:$0xf]
  %v166 = vld [vmem:[%s0 + $0x14] sm:$0xf]
  %v167 = vld [vmem:[%s0 + $0x18] sm:$0xf]
  %v168 = vld [vmem:[%s0 + $0x1c] sm:$0xf]
  %v169 = vpack.c.bf16 %v126, %v123
  %v170 = vpack.c.bf16 %v134, %v131
  %v171 = vpack.c.bf16 %v142, %v139
  %v172 = vpack.c.bf16 %v150, %v147
  %v181 = vunpack.c.l.b16 %v161
  %v182 = vunpack.c.l.b16 %v162
  %v183 = vunpack.c.l.b16 %v163
  %v184 = vunpack.c.l.b16 %v164
  %v185 = vunpack.c.l.b16 %v165
  %v186 = vunpack.c.l.b16 %v166
  %v187 = vunpack.c.l.b16 %v167
  %v188 = vunpack.c.l.b16 %v168
  %v189 = vpack.c.b16 %v182, %v181
  %v190 = vpack.c.b16 %v184, %v183
  %v191 = vpack.c.b16 %v186, %v185
  %v192 = vpack.c.b16 %v188, %v187
  %vm193 = vcmask 523264
  %v195 = vsel %vm193, %v189, 0
  %v198 = vsel %vm193, %v190, 0
  %v201 = vsel %vm193, %v191, 0
  %v204 = vsel %vm193, %v192, 0
  %206 = vmatprep.subr.bf16.mxu0 0
  %207 = vmatpush1.bf16.msra.mxu0 %v169
  %208 = vmatprep.subr.bf16.mxu0 0
  %209 = vmatpush1.bf16.msra.mxu0 %v170
  %210 = vmatprep.subr.bf16.mxu0 0
  %211 = vmatpush1.bf16.msra.mxu0 %v171
  %212 = vmatprep.subr.bf16.mxu0 0
  %213 = vmatpush1.bf16.msra.mxu0 %v172
  %214 = vmatprep.subr.bf16.mxu0 0
  %215 = vmatpush1.bf16.msra.mxu0 0
  %216 = vmatprep.subr.bf16.mxu0 0
  %217 = vmatpush1.bf16.msra.mxu0 0
  %218 = vmatprep.subr.bf16.mxu0 0
  %219 = vmatpush1.bf16.msra.mxu0 0
  %220 = vmatprep.subr.bf16.mxu0 0
  %221 = vmatpush1.bf16.msra.mxu0 0
  %222 = vmatprep.subr.bf16.mxu0 0
  %223 = vmatpush1.bf16.msra.mxu0 0
  %224 = vmatprep.subr.bf16.mxu0 0
  %225 = vmatpush1.bf16.msra.mxu0 0
  %226 = vmatprep.subr.bf16.mxu0 0
  %227 = vmatpush1.bf16.msra.mxu0 0
  %228 = vmatprep.subr.bf16.mxu0 0
  %229 = vmatpush1.bf16.msra.mxu0 0
  %230 = vmatprep.subr.bf16.mxu0 0
  %231 = vmatpush1.bf16.msra.mxu0 0
  %232 = vmatprep.subr.bf16.mxu0 0
  %233 = vmatpush1.bf16.msra.mxu0 0
  %234 = vmatprep.subr.bf16.mxu0 0
  %235 = vmatpush1.bf16.msra.mxu0 0
  %236 = vmatprep.subr.bf16.mxu0 0
  %237 = vmatpush1.bf16.msra.mxu0 0
  %238 = vmatprep.mubr.bf16.mxu0 0
  %239 = vmatmul.mubr.bf16.gmra.mrb[0].mxu0 %v195
  %v240 = vpop.f32.mrb[0].mxu0
  %v241 = vadd.f32 0.0, %v240
  %v242 = vpop.f32.mrb[0].mxu0
  %v243 = vpop.f32.mrb[0].mxu0
  %v244 = vadd.f32 0.0, %v243
  %v245 = vpop.f32.mrb[0].mxu0
  %246 = vmatprep.mubr.bf16.mxu0 0
  %247 = vmatmul.mubr.bf16.gmra.mrb[0].mxu0 %v198
  %v248 = vpop.f32.mrb[0].mxu0
  %v249 = vadd.f32 0.0, %v248
  %v250 = vpop.f32.mrb[0].mxu0
  %v251 = vpop.f32.mrb[0].mxu0
  %v252 = vadd.f32 0.0, %v251
  %v253 = vpop.f32.mrb[0].mxu0
  %254 = vmatprep.mubr.bf16.mxu0 0
  %255 = vmatmul.mubr.bf16.gmra.mrb[0].mxu0 %v201
  %v256 = vpop.f32.mrb[0].mxu0
  %v257 = vadd.f32 0.0, %v256
  %v258 = vpop.f32.mrb[0].mxu0
  %v259 = vpop.f32.mrb[0].mxu0
  %v260 = vadd.f32 0.0, %v259
  %v261 = vpop.f32.mrb[0].mxu0
  %262 = vmatprep.mubr.bf16.mxu0 0
  %263 = vmatmul.mubr.bf16.gmra.mrb[0].mxu0 %v204
  %v264 = vpop.f32.mrb[0].mxu0
  %v265 = vadd.f32 0.0, %v264
  %v266 = vpop.f32.mrb[0].mxu0
  %v267 = vpop.f32.mrb[0].mxu0
  %v268 = vadd.f32 0.0, %v267
  %v269 = vpop.f32.mrb[0].mxu0
  %270 = vdwg.mxu0
  %v271 = vadd.f32 %v153, %v241
  %v272 = vadd.f32 %v154, %v244
  %v273 = vadd.f32 %v155, %v249
  %v274 = vadd.f32 %v156, %v252
  %v275 = vadd.f32 %v157, %v257
  %v276 = vadd.f32 %v158, %v260
  %v277 = vadd.f32 %v159, %v265
  %v278 = vadd.f32 %v160, %v268
  %279 = vst.msk [vmem:[#allocation2] sm:$0xff] %vm75, %v271
  %280 = vst.msk [vmem:[#allocation2 + $0x8] sm:$0xff] %vm75, %v272
  %281 = vst.msk [vmem:[#allocation2 + $0x10] sm:$0xff] %vm75, %v273
  %282 = vst.msk [vmem:[#allocation2 + $0x18] sm:$0xff] %vm75, %v274
  %283 = vst.msk [vmem:[#allocation2 + $0x20] sm:$0xff] %vm75, %v275
  %284 = vst.msk [vmem:[#allocation2 + $0x28] sm:$0xff] %vm75, %v276
  %285 = vst.msk [vmem:[#allocation2 + $0x30] sm:$0xff] %vm75, %v277
  %286 = vst.msk [vmem:[#allocation2 + $0x38] sm:$0xff] %vm75, %v278
  // Predicated region
  $region22: #{my_new_gcn_forward.11} parent=0 // pred_check
    %p287 = pneg %p18
  $region23: #{my_new_gcn_forward.11} parent=0 // pred_check_branch
    %289 = sbr.rel (%p287) target = $region25
  $region24: #{my_new_gcn_forward.11} parent=0 // pred_region
    %v290 = vld [vmem:[#allocation2] sm:$0xff]
    %v291 = vld [vmem:[#allocation2 + $0x8] sm:$0xff]
    %v292 = vld [vmem:[#allocation2 + $0x10] sm:$0xff]
    %v293 = vld [vmem:[#allocation2 + $0x18] sm:$0xff]
    %v294 = vld [vmem:[#allocation2 + $0x20] sm:$0xff]
    %v295 = vld [vmem:[#allocation2 + $0x28] sm:$0xff]
    %v296 = vld [vmem:[#allocation2 + $0x30] sm:$0xff]
    %v297 = vld [vmem:[#allocation2 + $0x38] sm:$0xff]
    %v298 = vld [vmem:[%s3] sm:$0x1]
    %v300 = vlaneseq
    %v301 = vshrl.u32 %v300, 7
    %v302 = vsub.s32 0, %v301
    %v303 = vrot.slane %v298, %v302
    %v305 = vadd.f32 %v290, %v303
    %v306 = vadd.f32 %v291, %v303
    %v307 = vadd.f32 %v292, %v303
    %v308 = vadd.f32 %v293, %v303
    %v309 = vadd.f32 %v294, %v303
    %v310 = vadd.f32 %v295, %v303
    %v311 = vadd.f32 %v296, %v303
    %v312 = vadd.f32 %v297, %v303
    %v313 = vmax.f32 %v305, 0.0
    %v314 = vmax.f32 %v306, 0.0
    %v315 = vmax.f32 %v307, 0.0
    %v316 = vmax.f32 %v308, 0.0
    %v317 = vmax.f32 %v309, 0.0
    %v318 = vmax.f32 %v310, 0.0
    %v319 = vmax.f32 %v311, 0.0
    %v320 = vmax.f32 %v312, 0.0
    %v321 = vpack.c.bf16 %v314, %v313
    %v322 = vpack.c.bf16 %v316, %v315
    %v323 = vpack.c.bf16 %v318, %v317
    %v324 = vpack.c.bf16 %v320, %v319
    %v329 = vunpack.c.l.b16 %v321
    %v330 = vunpack.c.h.b16 %v321
    %v331 = vunpack.c.l.b16 %v322
    %v332 = vunpack.c.h.b16 %v322
    %v333 = vunpack.c.l.b16 %v323
    %v334 = vunpack.c.h.b16 %v323
    %v335 = vunpack.c.l.b16 %v324
    %v336 = vunpack.c.h.b16 %v324
    %v337 = vpack.c.b16 %v329, %v329
    %v338 = vpack.c.b16 %v330, %v330
    %v339 = vpack.c.b16 %v331, %v331
    %v340 = vpack.c.b16 %v332, %v332
    %v341 = vpack.c.b16 %v333, %v333
    %v342 = vpack.c.b16 %v334, %v334
    %v343 = vpack.c.b16 %v335, %v335
    %v344 = vpack.c.b16 %v336, %v336
    %vm353 = vcmask 257024
    %354 = vst.msk [vmem:[%s4] sm:$0xf] %vm353, %v337
    %355 = vst.msk [vmem:[%s4 + $0x4] sm:$0xf] %vm353, %v338
    %356 = vst.msk [vmem:[%s4 + $0x8] sm:$0xf] %vm353, %v339
    %357 = vst.msk [vmem:[%s4 + $0xc] sm:$0xf] %vm353, %v340
    %358 = vst.msk [vmem:[%s4 + $0x10] sm:$0xf] %vm353, %v341
    %359 = vst.msk [vmem:[%s4 + $0x14] sm:$0xf] %vm353, %v342
    %360 = vst.msk [vmem:[%s4 + $0x18] sm:$0xf] %vm353, %v343
    %361 = vst.msk [vmem:[%s4 + $0x1c] sm:$0xf] %vm353, %v344
  $region25: #{my_new_gcn_forward.11} parent=0 // pred_fallthru
    _
  // Predicated region
  $region26: #{my_new_gcn_forward.11} parent=0 // pred_check
    _
  $region27: #{my_new_gcn_forward.11} parent=0 // pred_check_branch
    %363 = sbr.rel (0) target = $region29
  $region28: #{my_new_gcn_forward.11} parent=0 // pred_region
    _
  $region29: #{my_new_gcn_forward.11} parent=0 // pred_fallthru
    _
  // Predicated region
  $region30: #{my_new_gcn_forward.11} parent=0 // pred_check
    _
  $region31: #{my_new_gcn_forward.11} parent=0 // pred_check_branch
    %365 = sbr.rel (0) target = $region33
  $region32: #{my_new_gcn_forward.11} parent=0 // pred_region
    _
  $region33: #{my_new_gcn_forward.11} parent=0 // pred_fallthru
    _

// kernel: my_new_gcn_forward.12
$region0: #{my_new_gcn_forward.12}
  #allocation0 [shape = 'u32[]', space=smem, size = 0x4, offset = 0x4, fixed_abs, tag = 'smem constant byte address 0x4 - core index']
  #allocation1 [shape = 'u32[144,128]{1,0:T(1,128)}', space=vmem, size = 0x12000, scoped, tag = 'internal scratch']
  #allocation2 [shape = 'f32[64,16]{1,0:T(8,128)}', space=vmem, size = 0x8000, scoped, tag = 'scratch operand']
  %s0 = inlined_call_operand.vmem [shape: bf16[64,64], index: 0, kind: input, shape index: {}]
  %s1 = inlined_call_operand.vmem [shape: bf16[64,32], index: 1, kind: input, shape index: {}]
  %s2 = inlined_call_operand.vmem [shape: bf16[32,16], index: 2, kind: input, shape index: {}]
  %s3 = inlined_call_operand.vmem [shape: f32[1,16], index: 3, kind: input, shape index: {}]
  %s4 = inlined_call_operand.vmem [shape: f32[64,16], index: 4, kind: output, shape index: {}]
  %s5 = sld [smem:[#allocation0]]
  $region34: #{my_new_gcn_forward.12} parent=0
    _
  %s7 = ssub.s32 1, %s5
  %s8 = scalar_select 0, %s7, %s5
  // Predicated region
  $region2: #{my_new_gcn_forward.12} parent=0 // pred_check
    _
  $region3: #{my_new_gcn_forward.12} parent=0 // pred_check_branch
    %10 = sbr.rel (0) target = $region5
  $region4: #{my_new_gcn_forward.12} parent=0 // pred_region
    _
  $region5: #{my_new_gcn_forward.12} parent=0 // pred_fallthru
    _
  // Predicated region
  $region6: #{my_new_gcn_forward.12} parent=0 // pred_check
    _
  $region7: #{my_new_gcn_forward.12} parent=0 // pred_check_branch
    %12 = sbr.rel (0) target = $region9
  $region8: #{my_new_gcn_forward.12} parent=0 // pred_region
    _
  $region9: #{my_new_gcn_forward.12} parent=0 // pred_fallthru
    _
  // Predicated region
  $region10: #{my_new_gcn_forward.12} parent=0 // pred_check
    _
  $region11: #{my_new_gcn_forward.12} parent=0 // pred_check_branch
    %14 = sbr.rel (0) target = $region13
  $region12: #{my_new_gcn_forward.12} parent=0 // pred_region
    _
  $region13: #{my_new_gcn_forward.12} parent=0 // pred_fallthru
    _
  // Predicated region
  $region14: #{my_new_gcn_forward.12} parent=0 // pred_check
    _
  $region15: #{my_new_gcn_forward.12} parent=0 // pred_check_branch
    %16 = sbr.rel (0) target = $region17
  $region16: #{my_new_gcn_forward.12} parent=0 // pred_region
    _
  $region17: #{my_new_gcn_forward.12} parent=0 // pred_fallthru
    _
  %p18 = scmp.eq.s32.totalorder 0, 0
  // Predicated region
  $region18: #{my_new_gcn_forward.12} parent=0 // pred_check
    %p19 = pneg %p18
  $region19: #{my_new_gcn_forward.12} parent=0 // pred_check_branch
    %21 = sbr.rel (%p19) target = $region21
  $region20: #{my_new_gcn_forward.12} parent=0 // pred_region
    %vm22 = vcmask 130048
    %23 = vst.msk [vmem:[#allocation2] sm:$0xff] %vm22, 0.0
    %24 = vst.msk [vmem:[#allocation2 + $0x8] sm:$0xff] %vm22, 0.0
    %25 = vst.msk [vmem:[#allocation2 + $0x10] sm:$0xff] %vm22, 0.0
    %26 = vst.msk [vmem:[#allocation2 + $0x18] sm:$0xff] %vm22, 0.0
    %27 = vst.msk [vmem:[#allocation2 + $0x20] sm:$0xff] %vm22, 0.0
    %28 = vst.msk [vmem:[#allocation2 + $0x28] sm:$0xff] %vm22, 0.0
    %29 = vst.msk [vmem:[#allocation2 + $0x30] sm:$0xff] %vm22, 0.0
    %30 = vst.msk [vmem:[#allocation2 + $0x38] sm:$0xff] %vm22, 0.0
  $region21: #{my_new_gcn_forward.12} parent=0 // pred_fallthru
    _
  %v31 = vld [vmem:[%s1] sm:$0xf]
  %v32 = vld [vmem:[%s1 + $0x4] sm:$0xf]
  %v33 = vld [vmem:[%s1 + $0x8] sm:$0xf]
  %v34 = vld [vmem:[%s1 + $0xc] sm:$0xf]
  %v35 = vld [vmem:[%s1 + $0x10] sm:$0xf]
  %v36 = vld [vmem:[%s1 + $0x14] sm:$0xf]
  %v37 = vld [vmem:[%s1 + $0x18] sm:$0xf]
  %v38 = vld [vmem:[%s1 + $0x1c] sm:$0xf]
  %v39 = vld [vmem:[%s2] sm:$0xf]
  %v40 = vld [vmem:[%s2 + $0x4] sm:$0xf]
  %v41 = vld [vmem:[%s2 + $0x8] sm:$0xf]
  %v42 = vld [vmem:[%s2 + $0xc] sm:$0xf]
  %v51 = vunpack.c.l.b16 %v31
  %v52 = vunpack.c.l.b16 %v32
  %v53 = vunpack.c.l.b16 %v33
  %v54 = vunpack.c.l.b16 %v34
  %v55 = vunpack.c.l.b16 %v35
  %v56 = vunpack.c.l.b16 %v36
  %v57 = vunpack.c.l.b16 %v37
  %v58 = vunpack.c.l.b16 %v38
  %v59 = vpack.c.b16 %v52, %v51
  %v60 = vpack.c.b16 %v54, %v53
  %v61 = vpack.c.b16 %v56, %v55
  %v62 = vpack.c.b16 %v58, %v57
  %v67 = vunpack.c.l.b16 %v39
  %v68 = vunpack.c.l.b16 %v40
  %v69 = vunpack.c.l.b16 %v41
  %v70 = vunpack.c.l.b16 %v42
  %v71 = vpack.c.b16 %v68, %v67
  %v72 = vpack.c.b16 %v70, %v69
  %vm75 = vcmask 261120
  %v77 = vsel %vm75, %v59, 0
  %v80 = vsel %vm75, %v60, 0
  %v83 = vsel %vm75, %v61, 0
  %v86 = vsel %vm75, %v62, 0
  %88 = vmatprep.subr.bf16.mxu0 0
  %89 = vmatpush1.bf16.msra.mxu0 %v71
  %90 = vmatprep.subr.bf16.mxu0 0
  %91 = vmatpush1.bf16.msra.mxu0 %v72
  %92 = vmatprep.subr.bf16.mxu0 0
  %93 = vmatpush1.bf16.msra.mxu0 0
  %94 = vmatprep.subr.bf16.mxu0 0
  %95 = vmatpush1.bf16.msra.mxu0 0
  %96 = vmatprep.subr.bf16.mxu0 0
  %97 = vmatpush1.bf16.msra.mxu0 0
  %98 = vmatprep.subr.bf16.mxu0 0
  %99 = vmatpush1.bf16.msra.mxu0 0
  %100 = vmatprep.subr.bf16.mxu0 0
  %101 = vmatpush1.bf16.msra.mxu0 0
  %102 = vmatprep.subr.bf16.mxu0 0
  %103 = vmatpush1.bf16.msra.mxu0 0
  %104 = vmatprep.subr.bf16.mxu0 0
  %105 = vmatpush1.bf16.msra.mxu0 0
  %106 = vmatprep.subr.bf16.mxu0 0
  %107 = vmatpush1.bf16.msra.mxu0 0
  %108 = vmatprep.subr.bf16.mxu0 0
  %109 = vmatpush1.bf16.msra.mxu0 0
  %110 = vmatprep.subr.bf16.mxu0 0
  %111 = vmatpush1.bf16.msra.mxu0 0
  %112 = vmatprep.subr.bf16.mxu0 0
  %113 = vmatpush1.bf16.msra.mxu0 0
  %114 = vmatprep.subr.bf16.mxu0 0
  %115 = vmatpush1.bf16.msra.mxu0 0
  %116 = vmatprep.subr.bf16.mxu0 0
  %117 = vmatpush1.bf16.msra.mxu0 0
  %118 = vmatprep.subr.bf16.mxu0 0
  %119 = vmatpush1.bf16.msra.mxu0 0
  %120 = vmatprep.mubr.bf16.mxu0 0
  %121 = vmatmul.mubr.bf16.gmra.mrb[0].mxu0 %v77
  %v122 = vpop.f32.mrb[0].mxu0
  %v123 = vadd.f32 0.0, %v122
  %v124 = vpop.f32.mrb[0].mxu0
  %v125 = vpop.f32.mrb[0].mxu0
  %v126 = vadd.f32 0.0, %v125
  %v127 = vpop.f32.mrb[0].mxu0
  %128 = vmatprep.mubr.bf16.mxu0 0
  %129 = vmatmul.mubr.bf16.gmra.mrb[0].mxu0 %v80
  %v130 = vpop.f32.mrb[0].mxu0
  %v131 = vadd.f32 0.0, %v130
  %v132 = vpop.f32.mrb[0].mxu0
  %v133 = vpop.f32.mrb[0].mxu0
  %v134 = vadd.f32 0.0, %v133
  %v135 = vpop.f32.mrb[0].mxu0
  %136 = vmatprep.mubr.bf16.mxu0 0
  %137 = vmatmul.mubr.bf16.gmra.mrb[0].mxu0 %v83
  %v138 = vpop.f32.mrb[0].mxu0
  %v139 = vadd.f32 0.0, %v138
  %v140 = vpop.f32.mrb[0].mxu0
  %v141 = vpop.f32.mrb[0].mxu0
  %v142 = vadd.f32 0.0, %v141
  %v143 = vpop.f32.mrb[0].mxu0
  %144 = vmatprep.mubr.bf16.mxu0 0
  %145 = vmatmul.mubr.bf16.gmra.mrb[0].mxu0 %v86
  %v146 = vpop.f32.mrb[0].mxu0
  %v147 = vadd.f32 0.0, %v146
  %v148 = vpop.f32.mrb[0].mxu0
  %v149 = vpop.f32.mrb[0].mxu0
  %v150 = vadd.f32 0.0, %v149
  %v151 = vpop.f32.mrb[0].mxu0
  %152 = vdwg.mxu0
  %v153 = vld [vmem:[#allocation2] sm:$0xff]
  %v154 = vld [vmem:[#allocation2 + $0x8] sm:$0xff]
  %v155 = vld [vmem:[#allocation2 + $0x10] sm:$0xff]
  %v156 = vld [vmem:[#allocation2 + $0x18] sm:$0xff]
  %v157 = vld [vmem:[#allocation2 + $0x20] sm:$0xff]
  %v158 = vld [vmem:[#allocation2 + $0x28] sm:$0xff]
  %v159 = vld [vmem:[#allocation2 + $0x30] sm:$0xff]
  %v160 = vld [vmem:[#allocation2 + $0x38] sm:$0xff]
  %v161 = vld [vmem:[%s0] sm:$0xf]
  %v162 = vld [vmem:[%s0 + $0x4] sm:$0xf]
  %v163 = vld [vmem:[%s0 + $0x8] sm:$0xf]
  %v164 = vld [vmem:[%s0 + $0xc] sm:$0xf]
  %v165 = vld [vmem:[%s0 + $0x10] sm:$0xf]
  %v166 = vld [vmem:[%s0 + $0x14] sm:$0xf]
  %v167 = vld [vmem:[%s0 + $0x18] sm:$0xf]
  %v168 = vld [vmem:[%s0 + $0x1c] sm:$0xf]
  %v169 = vpack.c.bf16 %v126, %v123
  %v170 = vpack.c.bf16 %v134, %v131
  %v171 = vpack.c.bf16 %v142, %v139
  %v172 = vpack.c.bf16 %v150, %v147
  %v181 = vunpack.c.l.b16 %v161
  %v182 = vunpack.c.l.b16 %v162
  %v183 = vunpack.c.l.b16 %v163
  %v184 = vunpack.c.l.b16 %v164
  %v185 = vunpack.c.l.b16 %v165
  %v186 = vunpack.c.l.b16 %v166
  %v187 = vunpack.c.l.b16 %v167
  %v188 = vunpack.c.l.b16 %v168
  %v189 = vpack.c.b16 %v182, %v181
  %v190 = vpack.c.b16 %v184, %v183
  %v191 = vpack.c.b16 %v186, %v185
  %v192 = vpack.c.b16 %v188, %v187
  %vm193 = vcmask 523264
  %v195 = vsel %vm193, %v189, 0
  %v198 = vsel %vm193, %v190, 0
  %v201 = vsel %vm193, %v191, 0
  %v204 = vsel %vm193, %v192, 0
  %206 = vmatprep.subr.bf16.mxu0 0
  %207 = vmatpush1.bf16.msra.mxu0 %v169
  %208 = vmatprep.subr.bf16.mxu0 0
  %209 = vmatpush1.bf16.msra.mxu0 %v170
  %210 = vmatprep.subr.bf16.mxu0 0
  %211 = vmatpush1.bf16.msra.mxu0 %v171
  %212 = vmatprep.subr.bf16.mxu0 0
  %213 = vmatpush1.bf16.msra.mxu0 %v172
  %214 = vmatprep.subr.bf16.mxu0 0
  %215 = vmatpush1.bf16.msra.mxu0 0
  %216 = vmatprep.subr.bf16.mxu0 0
  %217 = vmatpush1.bf16.msra.mxu0 0
  %218 = vmatprep.subr.bf16.mxu0 0
  %219 = vmatpush1.bf16.msra.mxu0 0
  %220 = vmatprep.subr.bf16.mxu0 0
  %221 = vmatpush1.bf16.msra.mxu0 0
  %222 = vmatprep.subr.bf16.mxu0 0
  %223 = vmatpush1.bf16.msra.mxu0 0
  %224 = vmatprep.subr.bf16.mxu0 0
  %225 = vmatpush1.bf16.msra.mxu0 0
  %226 = vmatprep.subr.bf16.mxu0 0
  %227 = vmatpush1.bf16.msra.mxu0 0
  %228 = vmatprep.subr.bf16.mxu0 0
  %229 = vmatpush1.bf16.msra.mxu0 0
  %230 = vmatprep.subr.bf16.mxu0 0
  %231 = vmatpush1.bf16.msra.mxu0 0
  %232 = vmatprep.subr.bf16.mxu0 0
  %233 = vmatpush1.bf16.msra.mxu0 0
  %234 = vmatprep.subr.bf16.mxu0 0
  %235 = vmatpush1.bf16.msra.mxu0 0
  %236 = vmatprep.subr.bf16.mxu0 0
  %237 = vmatpush1.bf16.msra.mxu0 0
  %238 = vmatprep.mubr.bf16.mxu0 0
  %239 = vmatmul.mubr.bf16.gmra.mrb[0].mxu0 %v195
  %v240 = vpop.f32.mrb[0].mxu0
  %v241 = vadd.f32 0.0, %v240
  %v242 = vpop.f32.mrb[0].mxu0
  %v243 = vpop.f32.mrb[0].mxu0
  %v244 = vadd.f32 0.0, %v243
  %v245 = vpop.f32.mrb[0].mxu0
  %246 = vmatprep.mubr.bf16.mxu0 0
  %247 = vmatmul.mubr.bf16.gmra.mrb[0].mxu0 %v198
  %v248 = vpop.f32.mrb[0].mxu0
  %v249 = vadd.f32 0.0, %v248
  %v250 = vpop.f32.mrb[0].mxu0
  %v251 = vpop.f32.mrb[0].mxu0
  %v252 = vadd.f32 0.0, %v251
  %v253 = vpop.f32.mrb[0].mxu0
  %254 = vmatprep.mubr.bf16.mxu0 0
  %255 = vmatmul.mubr.bf16.gmra.mrb[0].mxu0 %v201
  %v256 = vpop.f32.mrb[0].mxu0
  %v257 = vadd.f32 0.0, %v256
  %v258 = vpop.f32.mrb[0].mxu0
  %v259 = vpop.f32.mrb[0].mxu0
  %v260 = vadd.f32 0.0, %v259
  %v261 = vpop.f32.mrb[0].mxu0
  %262 = vmatprep.mubr.bf16.mxu0 0
  %263 = vmatmul.mubr.bf16.gmra.mrb[0].mxu0 %v204
  %v264 = vpop.f32.mrb[0].mxu0
  %v265 = vadd.f32 0.0, %v264
  %v266 = vpop.f32.mrb[0].mxu0
  %v267 = vpop.f32.mrb[0].mxu0
  %v268 = vadd.f32 0.0, %v267
  %v269 = vpop.f32.mrb[0].mxu0
  %270 = vdwg.mxu0
  %v271 = vadd.f32 %v153, %v241
  %v272 = vadd.f32 %v154, %v244
  %v273 = vadd.f32 %v155, %v249
  %v274 = vadd.f32 %v156, %v252
  %v275 = vadd.f32 %v157, %v257
  %v276 = vadd.f32 %v158, %v260
  %v277 = vadd.f32 %v159, %v265
  %v278 = vadd.f32 %v160, %v268
  %vm279 = vcmask 130048
  %280 = vst.msk [vmem:[#allocation2] sm:$0xff] %vm279, %v271
  %281 = vst.msk [vmem:[#allocation2 + $0x8] sm:$0xff] %vm279, %v272
  %282 = vst.msk [vmem:[#allocation2 + $0x10] sm:$0xff] %vm279, %v273
  %283 = vst.msk [vmem:[#allocation2 + $0x18] sm:$0xff] %vm279, %v274
  %284 = vst.msk [vmem:[#allocation2 + $0x20] sm:$0xff] %vm279, %v275
  %285 = vst.msk [vmem:[#allocation2 + $0x28] sm:$0xff] %vm279, %v276
  %286 = vst.msk [vmem:[#allocation2 + $0x30] sm:$0xff] %vm279, %v277
  %287 = vst.msk [vmem:[#allocation2 + $0x38] sm:$0xff] %vm279, %v278
  // Predicated region
  $region22: #{my_new_gcn_forward.12} parent=0 // pred_check
    %p288 = pneg %p18
  $region23: #{my_new_gcn_forward.12} parent=0 // pred_check_branch
    %290 = sbr.rel (%p288) target = $region25
  $region24: #{my_new_gcn_forward.12} parent=0 // pred_region
    %v291 = vld [vmem:[#allocation2] sm:$0xff]
    %v292 = vld [vmem:[#allocation2 + $0x8] sm:$0xff]
    %v293 = vld [vmem:[#allocation2 + $0x10] sm:$0xff]
    %v294 = vld [vmem:[#allocation2 + $0x18] sm:$0xff]
    %v295 = vld [vmem:[#allocation2 + $0x20] sm:$0xff]
    %v296 = vld [vmem:[#allocation2 + $0x28] sm:$0xff]
    %v297 = vld [vmem:[#allocation2 + $0x30] sm:$0xff]
    %v298 = vld [vmem:[#allocation2 + $0x38] sm:$0xff]
    %v299 = vld [vmem:[%s3] sm:$0x1]
    %v301 = vlaneseq
    %v302 = vshrl.u32 %v301, 7
    %v303 = vsub.s32 0, %v302
    %v304 = vrot.slane %v299, %v303
    %v306 = vadd.f32 %v291, %v304
    %v307 = vadd.f32 %v292, %v304
    %v308 = vadd.f32 %v293, %v304
    %v309 = vadd.f32 %v294, %v304
    %v310 = vadd.f32 %v295, %v304
    %v311 = vadd.f32 %v296, %v304
    %v312 = vadd.f32 %v297, %v304
    %v313 = vadd.f32 %v298, %v304
    %314 = vst.msk [vmem:[%s4] sm:$0xff] %vm279, %v306
    %315 = vst.msk [vmem:[%s4 + $0x8] sm:$0xff] %vm279, %v307
    %316 = vst.msk [vmem:[%s4 + $0x10] sm:$0xff] %vm279, %v308
    %317 = vst.msk [vmem:[%s4 + $0x18] sm:$0xff] %vm279, %v309
    %318 = vst.msk [vmem:[%s4 + $0x20] sm:$0xff] %vm279, %v310
    %319 = vst.msk [vmem:[%s4 + $0x28] sm:$0xff] %vm279, %v311
    %320 = vst.msk [vmem:[%s4 + $0x30] sm:$0xff] %vm279, %v312
    %321 = vst.msk [vmem:[%s4 + $0x38] sm:$0xff] %vm279, %v313
  $region25: #{my_new_gcn_forward.12} parent=0 // pred_fallthru
    _
  // Predicated region
  $region26: #{my_new_gcn_forward.12} parent=0 // pred_check
    _
  $region27: #{my_new_gcn_forward.12} parent=0 // pred_check_branch
    %323 = sbr.rel (0) target = $region29
  $region28: #{my_new_gcn_forward.12} parent=0 // pred_region
    _
  $region29: #{my_new_gcn_forward.12} parent=0 // pred_fallthru
    _
  // Predicated region
  $region30: #{my_new_gcn_forward.12} parent=0 // pred_check
    _
  $region31: #{my_new_gcn_forward.12} parent=0 // pred_check_branch
    %325 = sbr.rel (0) target = $region33
  $region32: #{my_new_gcn_forward.12} parent=0 // pred_region
    _
  $region33: #{my_new_gcn_forward.12} parent=0 // pred_fallthru
    _

// kernel: my_new_gcn_forward.17
$region0: #{my_new_gcn_forward.17}
  #allocation0 [shape = 'u32[]', space=smem, size = 0x4, offset = 0x4, fixed_abs, tag = 'smem constant byte address 0x4 - core index']
  #allocation1 [shape = 'u32[144,128]{1,0:T(1,128)}', space=vmem, size = 0x12000, scoped, tag = 'internal scratch']
  #allocation2 [shape = 'f32[1,1]{1,0:T(1,128)S(1)}', space=vmem, size = 0x200, scoped, tag = 'scoped memory for my_new_gcn_forward.17']
  %s0 = inlined_call_operand.vmem [shape: f32[12,101], index: 0, kind: input, shape index: {}]
  %s1 = inlined_call_operand.vmem [shape: f32[101,32], index: 1, kind: input, shape index: {}]
  %s2 = inlined_call_operand.vmem [shape: f32[1,32], index: 2, kind: input, shape index: {}]
  %s3 = inlined_call_operand.vmem [shape: f32[32,16], index: 3, kind: input, shape index: {}]
  %s4 = inlined_call_operand.vmem [shape: f32[1,16], index: 4, kind: input, shape index: {}]
  %s5 = inlined_call_operand.vmem [shape: f32[16,8], index: 5, kind: input, shape index: {}]
  %s6 = inlined_call_operand.vmem [shape: f32[1,8], index: 6, kind: input, shape index: {}]
  %s7 = inlined_call_operand.vmem [shape: f32[1,8], index: 7, kind: input, shape index: {}]
  %s8 = inlined_call_operand.<no memory space> [shape: f32[1,1], index: 8, kind: input, shape index: {}]
  %s9 = inlined_call_operand.vmem [shape: f32[12,1], index: 9, kind: output, shape index: {}]
  %s10 = sld [smem:[#allocation0]]
  $region46: #{my_new_gcn_forward.17} parent=0
    _
  %s12 = ssub.s32 1, %s10
  %s13 = scalar_select 0, %s12, %s10
  %v14 = vstv %s8
  %15 = vst [vmem:[#allocation2] sm:$0x1] %v14
  // Predicated region
  $region2: #{my_new_gcn_forward.17} parent=0 // pred_check
    _
  $region3: #{my_new_gcn_forward.17} parent=0 // pred_check_branch
    %17 = sbr.rel (0) target = $region5
  $region4: #{my_new_gcn_forward.17} parent=0 // pred_region
    _
  $region5: #{my_new_gcn_forward.17} parent=0 // pred_fallthru
    _
  // Predicated region
  $region6: #{my_new_gcn_forward.17} parent=0 // pred_check
    _
  $region7: #{my_new_gcn_forward.17} parent=0 // pred_check_branch
    %19 = sbr.rel (0) target = $region9
  $region8: #{my_new_gcn_forward.17} parent=0 // pred_region
    _
  $region9: #{my_new_gcn_forward.17} parent=0 // pred_fallthru
    _
  // Predicated region
  $region10: #{my_new_gcn_forward.17} parent=0 // pred_check
    _
  $region11: #{my_new_gcn_forward.17} parent=0 // pred_check_branch
    %21 = sbr.rel (0) target = $region13
  $region12: #{my_new_gcn_forward.17} parent=0 // pred_region
    _
  $region13: #{my_new_gcn_forward.17} parent=0 // pred_fallthru
    _
  // Predicated region
  $region14: #{my_new_gcn_forward.17} parent=0 // pred_check
    _
  $region15: #{my_new_gcn_forward.17} parent=0 // pred_check_branch
    %23 = sbr.rel (0) target = $region17
  $region16: #{my_new_gcn_forward.17} parent=0 // pred_region
    _
  $region17: #{my_new_gcn_forward.17} parent=0 // pred_fallthru
    _
  // Predicated region
  $region18: #{my_new_gcn_forward.17} parent=0 // pred_check
    _
  $region19: #{my_new_gcn_forward.17} parent=0 // pred_check_branch
    %25 = sbr.rel (0) target = $region21
  $region20: #{my_new_gcn_forward.17} parent=0 // pred_region
    _
  $region21: #{my_new_gcn_forward.17} parent=0 // pred_fallthru
    _
  // Predicated region
  $region22: #{my_new_gcn_forward.17} parent=0 // pred_check
    _
  $region23: #{my_new_gcn_forward.17} parent=0 // pred_check_branch
    %27 = sbr.rel (0) target = $region25
  $region24: #{my_new_gcn_forward.17} parent=0 // pred_region
    _
  $region25: #{my_new_gcn_forward.17} parent=0 // pred_fallthru
    _
  // Predicated region
  $region26: #{my_new_gcn_forward.17} parent=0 // pred_check
    _
  $region27: #{my_new_gcn_forward.17} parent=0 // pred_check_branch
    %29 = sbr.rel (0) target = $region29
  $region28: #{my_new_gcn_forward.17} parent=0 // pred_region
    _
  $region29: #{my_new_gcn_forward.17} parent=0 // pred_fallthru
    _
  // Predicated region
  $region30: #{my_new_gcn_forward.17} parent=0 // pred_check
    _
  $region31: #{my_new_gcn_forward.17} parent=0 // pred_check_branch
    %31 = sbr.rel (0) target = $region33
  $region32: #{my_new_gcn_forward.17} parent=0 // pred_region
    _
  $region33: #{my_new_gcn_forward.17} parent=0 // pred_fallthru
    _
  // Predicated region
  $region34: #{my_new_gcn_forward.17} parent=0 // pred_check
    _
  $region35: #{my_new_gcn_forward.17} parent=0 // pred_check_branch
    %33 = sbr.rel (0) target = $region37
  $region36: #{my_new_gcn_forward.17} parent=0 // pred_region
    _
  $region37: #{my_new_gcn_forward.17} parent=0 // pred_fallthru
    _
  %v34 = vld [vmem:[%s0] sm:$0xff]
  %v35 = vld [vmem:[%s0 + $0x8] sm:$0xf]
  %v36 = vld [vmem:[%s1] sm:$0xff]
  %v37 = vld [vmem:[%s1 + $0x8] sm:$0xff]
  %v38 = vld [vmem:[%s1 + $0x10] sm:$0xff]
  %v39 = vld [vmem:[%s1 + $0x18] sm:$0xff]
  %v40 = vld [vmem:[%s1 + $0x20] sm:$0xff]
  %v41 = vld [vmem:[%s1 + $0x28] sm:$0xff]
  %v42 = vld [vmem:[%s1 + $0x30] sm:$0xff]
  %v43 = vld [vmem:[%s1 + $0x38] sm:$0xff]
  %v44 = vld [vmem:[%s1 + $0x40] sm:$0xff]
  %v45 = vld [vmem:[%s1 + $0x48] sm:$0xff]
  %v46 = vld [vmem:[%s1 + $0x50] sm:$0xff]
  %v47 = vld [vmem:[%s1 + $0x58] sm:$0xff]
  %v48 = vld [vmem:[%s1 + $0x60] sm:$0x1f]
  %v49 = vld [vmem:[%s2] sm:$0x1]
  %v51 = vlaneseq
  %v52 = vshrl.u32 %v51, 7
  %v53 = vsub.s32 0, %v52
  %v54 = vrot.slane %v49, %v53
  %vm56 = vcmask 826368
  %v58 = vsel %vm56, %v34, 0
  %v61 = vsel %vm56, %v35, 0
  %vm63 = vcmask 1044480
  %v65 = vsel %vm63, %v48, 0
  %67 = vmatprep.subr.mxu0 0.0
  %68 = vmatpush1.msra.mxu0 %v36
  %69 = vmatprep.subr.mxu0 0.0
  %70 = vmatpush1.msra.mxu0 %v37
  %71 = vmatprep.subr.mxu0 0.0
  %72 = vmatpush1.msra.mxu0 %v38
  %73 = vmatprep.subr.mxu0 0.0
  %74 = vmatpush1.msra.mxu0 %v39
  %75 = vmatprep.subr.mxu0 0.0
  %76 = vmatpush1.msra.mxu0 %v40
  %77 = vmatprep.subr.mxu0 0.0
  %78 = vmatpush1.msra.mxu0 %v41
  %79 = vmatprep.subr.mxu0 0.0
  %80 = vmatpush1.msra.mxu0 %v42
  %81 = vmatprep.subr.mxu0 0.0
  %82 = vmatpush1.msra.mxu0 %v43
  %83 = vmatprep.subr.mxu0 0.0
  %84 = vmatpush1.msra.mxu0 %v44
  %85 = vmatprep.subr.mxu0 0.0
  %86 = vmatpush1.msra.mxu0 %v45
  %87 = vmatprep.subr.mxu0 0.0
  %88 = vmatpush1.msra.mxu0 %v46
  %89 = vmatprep.subr.mxu0 0.0
  %90 = vmatpush1.msra.mxu0 %v47
  %91 = vmatprep.subr.mxu0 0.0
  %92 = vmatpush1.msra.mxu0 %v65
  %93 = vmatprep.subr.mxu0 0.0
  %94 = vmatpush1.msra.mxu0 0.0
  %95 = vmatprep.subr.mxu0 0.0
  %96 = vmatpush1.msra.mxu0 0.0
  %97 = vmatprep.subr.mxu0 0.0
  %98 = vmatpush1.msra.mxu0 0.0
  %99 = vmatprep.subr.mxu0 0.0
  %100 = vmatpush1.msra.mxu0 0.0
  %101 = vmatprep.subr.mxu0 0.0
  %102 = vmatpush1.msra.mxu0 0.0
  %103 = vmatprep.subr.mxu0 0.0
  %104 = vmatpush1.msra.mxu0 0.0
  %105 = vmatprep.subr.mxu0 0.0
  %106 = vmatpush1.msra.mxu0 0.0
  %107 = vmatprep.subr.mxu0 0.0
  %108 = vmatpush1.msra.mxu0 0.0
  %109 = vmatprep.subr.mxu0 0.0
  %110 = vmatpush1.msra.mxu0 0.0
  %111 = vmatprep.subr.mxu0 0.0
  %112 = vmatpush1.msra.mxu0 0.0
  %113 = vmatprep.subr.mxu0 0.0
  %114 = vmatpush1.msra.mxu0 0.0
  %115 = vmatprep.subr.mxu0 0.0
  %116 = vmatpush1.msra.mxu0 0.0
  %117 = vmatprep.subr.mxu0 0.0
  %118 = vmatpush1.msra.mxu0 0.0
  %119 = vmatprep.subr.mxu0 0.0
  %120 = vmatpush1.msra.mxu0 0.0
  %121 = vmatprep.subr.mxu0 0.0
  %122 = vmatpush1.msra.mxu0 0.0
  %123 = vmatprep.subr.mxu0 0.0
  %124 = vmatpush1.msra.mxu0 0.0
  %125 = vmatprep.subr.mxu0 0.0
  %126 = vmatpush1.msra.mxu0 0.0
  %127 = vmatprep.subr.mxu0 0.0
  %128 = vmatpush1.msra.mxu0 0.0
  %129 = vmatprep.subr.mxu0 0.0
  %130 = vmatpush1.msra.mxu0 0.0
  %131 = vmatprep.mubr.f32.mxu0 0.0
  %132 = vmatmul.mubr.f32.gmra.mrb[0].mxu0 %v58
  %v133 = vpop.f32.mrb[0].mxu0
  %v134 = vadd.f32 %v54, %v133
  %v135 = vpop.f32.mrb[0].mxu0
  %136 = vmatprep.mubr.f32.mxu0 0.0
  %137 = vmatmul.mubr.f32.gmra.mrb[0].mxu0 %v61
  %v138 = vpop.f32.mrb[0].mxu0
  %v139 = vadd.f32 %v54, %v138
  %v140 = vpop.f32.mrb[0].mxu0
  %141 = vdwg.mxu0
  %v142 = vmax.f32 %v134, 0.0
  %v143 = vmax.f32 %v139, 0.0
  %v144 = vld [vmem:[%s3] sm:$0xff]
  %v145 = vld [vmem:[%s3 + $0x8] sm:$0xff]
  %v146 = vld [vmem:[%s3 + $0x10] sm:$0xff]
  %v147 = vld [vmem:[%s3 + $0x18] sm:$0xff]
  %v148 = vld [vmem:[%s4] sm:$0x1]
  %v150 = vlaneseq
  %v151 = vshrl.u32 %v150, 7
  %v152 = vsub.s32 0, %v151
  %v153 = vrot.slane %v148, %v152
  %vm155 = vcmask 261120
  %v157 = vsel %vm155, %v142, 0
  %v160 = vsel %vm155, %v143, 0
  %162 = vmatprep.subr.mxu0 0.0
  %163 = vmatpush1.msra.mxu0 %v144
  %164 = vmatprep.subr.mxu0 0.0
  %165 = vmatpush1.msra.mxu0 %v145
  %166 = vmatprep.subr.mxu0 0.0
  %167 = vmatpush1.msra.mxu0 %v146
  %168 = vmatprep.subr.mxu0 0.0
  %169 = vmatpush1.msra.mxu0 %v147
  %170 = vmatprep.subr.mxu0 0.0
  %171 = vmatpush1.msra.mxu0 0.0
  %172 = vmatprep.subr.mxu0 0.0
  %173 = vmatpush1.msra.mxu0 0.0
  %174 = vmatprep.subr.mxu0 0.0
  %175 = vmatpush1.msra.mxu0 0.0
  %176 = vmatprep.subr.mxu0 0.0
  %177 = vmatpush1.msra.mxu0 0.0
  %178 = vmatprep.subr.mxu0 0.0
  %179 = vmatpush1.msra.mxu0 0.0
  %180 = vmatprep.subr.mxu0 0.0
  %181 = vmatpush1.msra.mxu0 0.0
  %182 = vmatprep.subr.mxu0 0.0
  %183 = vmatpush1.msra.mxu0 0.0
  %184 = vmatprep.subr.mxu0 0.0
  %185 = vmatpush1.msra.mxu0 0.0
  %186 = vmatprep.subr.mxu0 0.0
  %187 = vmatpush1.msra.mxu0 0.0
  %188 = vmatprep.subr.mxu0 0.0
  %189 = vmatpush1.msra.mxu0 0.0
  %190 = vmatprep.subr.mxu0 0.0
  %191 = vmatpush1.msra.mxu0 0.0
  %192 = vmatprep.subr.mxu0 0.0
  %193 = vmatpush1.msra.mxu0 0.0
  %194 = vmatprep.subr.mxu0 0.0
  %195 = vmatpush1.msra.mxu0 0.0
  %196 = vmatprep.subr.mxu0 0.0
  %197 = vmatpush1.msra.mxu0 0.0
  %198 = vmatprep.subr.mxu0 0.0
  %199 = vmatpush1.msra.mxu0 0.0
  %200 = vmatprep.subr.mxu0 0.0
  %201 = vmatpush1.msra.mxu0 0.0
  %202 = vmatprep.subr.mxu0 0.0
  %203 = vmatpush1.msra.mxu0 0.0
  %204 = vmatprep.subr.mxu0 0.0
  %205 = vmatpush1.msra.mxu0 0.0
  %206 = vmatprep.subr.mxu0 0.0
  %207 = vmatpush1.msra.mxu0 0.0
  %208 = vmatprep.subr.mxu0 0.0
  %209 = vmatpush1.msra.mxu0 0.0
  %210 = vmatprep.subr.mxu0 0.0
  %211 = vmatpush1.msra.mxu0 0.0
  %212 = vmatprep.subr.mxu0 0.0
  %213 = vmatpush1.msra.mxu0 0.0
  %214 = vmatprep.subr.mxu0 0.0
  %215 = vmatpush1.msra.mxu0 0.0
  %216 = vmatprep.subr.mxu0 0.0
  %217 = vmatpush1.msra.mxu0 0.0
  %218 = vmatprep.subr.mxu0 0.0
  %219 = vmatpush1.msra.mxu0 0.0
  %220 = vmatprep.subr.mxu0 0.0
  %221 = vmatpush1.msra.mxu0 0.0
  %222 = vmatprep.subr.mxu0 0.0
  %223 = vmatpush1.msra.mxu0 0.0
  %224 = vmatprep.subr.mxu0 0.0
  %225 = vmatpush1.msra.mxu0 0.0
  %226 = vmatprep.mubr.f32.mxu0 0.0
  %227 = vmatmul.mubr.f32.gmra.mrb[0].mxu0 %v157
  %v228 = vpop.f32.mrb[0].mxu0
  %v229 = vadd.f32 %v153, %v228
  %v230 = vpop.f32.mrb[0].mxu0
  %231 = vmatprep.mubr.f32.mxu0 0.0
  %232 = vmatmul.mubr.f32.gmra.mrb[0].mxu0 %v160
  %v233 = vpop.f32.mrb[0].mxu0
  %v234 = vadd.f32 %v153, %v233
  %v235 = vpop.f32.mrb[0].mxu0
  %236 = vdwg.mxu0
  %v237 = vmax.f32 %v229, 0.0
  %v238 = vmax.f32 %v234, 0.0
  %v239 = vld [vmem:[%s5] sm:$0xff]
  %v240 = vld [vmem:[%s5 + $0x8] sm:$0xff]
  %v241 = vld [vmem:[%s6] sm:$0x1]
  %v243 = vlaneseq
  %v244 = vshrl.u32 %v243, 7
  %v245 = vsub.s32 0, %v244
  %v246 = vrot.slane %v241, %v245
  %vm248 = vcmask 130048
  %v250 = vsel %vm248, %v237, 0
  %v253 = vsel %vm248, %v238, 0
  %255 = vmatprep.subr.mxu0 0.0
  %256 = vmatpush1.msra.mxu0 %v239
  %257 = vmatprep.subr.mxu0 0.0
  %258 = vmatpush1.msra.mxu0 %v240
  %259 = vmatprep.subr.mxu0 0.0
  %260 = vmatpush1.msra.mxu0 0.0
  %261 = vmatprep.subr.mxu0 0.0
  %262 = vmatpush1.msra.mxu0 0.0
  %263 = vmatprep.subr.mxu0 0.0
  %264 = vmatpush1.msra.mxu0 0.0
  %265 = vmatprep.subr.mxu0 0.0
  %266 = vmatpush1.msra.mxu0 0.0
  %267 = vmatprep.subr.mxu0 0.0
  %268 = vmatpush1.msra.mxu0 0.0
  %269 = vmatprep.subr.mxu0 0.0
  %270 = vmatpush1.msra.mxu0 0.0
  %271 = vmatprep.subr.mxu0 0.0
  %272 = vmatpush1.msra.mxu0 0.0
  %273 = vmatprep.subr.mxu0 0.0
  %274 = vmatpush1.msra.mxu0 0.0
  %275 = vmatprep.subr.mxu0 0.0
  %276 = vmatpush1.msra.mxu0 0.0
  %277 = vmatprep.subr.mxu0 0.0
  %278 = vmatpush1.msra.mxu0 0.0
  %279 = vmatprep.subr.mxu0 0.0
  %280 = vmatpush1.msra.mxu0 0.0
  %281 = vmatprep.subr.mxu0 0.0
  %282 = vmatpush1.msra.mxu0 0.0
  %283 = vmatprep.subr.mxu0 0.0
  %284 = vmatpush1.msra.mxu0 0.0
  %285 = vmatprep.subr.mxu0 0.0
  %286 = vmatpush1.msra.mxu0 0.0
  %287 = vmatprep.subr.mxu0 0.0
  %288 = vmatpush1.msra.mxu0 0.0
  %289 = vmatprep.subr.mxu0 0.0
  %290 = vmatpush1.msra.mxu0 0.0
  %291 = vmatprep.subr.mxu0 0.0
  %292 = vmatpush1.msra.mxu0 0.0
  %293 = vmatprep.subr.mxu0 0.0
  %294 = vmatpush1.msra.mxu0 0.0
  %295 = vmatprep.subr.mxu0 0.0
  %296 = vmatpush1.msra.mxu0 0.0
  %297 = vmatprep.subr.mxu0 0.0
  %298 = vmatpush1.msra.mxu0 0.0
  %299 = vmatprep.subr.mxu0 0.0
  %300 = vmatpush1.msra.mxu0 0.0
  %301 = vmatprep.subr.mxu0 0.0
  %302 = vmatpush1.msra.mxu0 0.0
  %303 = vmatprep.subr.mxu0 0.0
  %304 = vmatpush1.msra.mxu0 0.0
  %305 = vmatprep.subr.mxu0 0.0
  %306 = vmatpush1.msra.mxu0 0.0
  %307 = vmatprep.subr.mxu0 0.0
  %308 = vmatpush1.msra.mxu0 0.0
  %309 = vmatprep.subr.mxu0 0.0
  %310 = vmatpush1.msra.mxu0 0.0
  %311 = vmatprep.subr.mxu0 0.0
  %312 = vmatpush1.msra.mxu0 0.0
  %313 = vmatprep.subr.mxu0 0.0
  %314 = vmatpush1.msra.mxu0 0.0
  %315 = vmatprep.subr.mxu0 0.0
  %316 = vmatpush1.msra.mxu0 0.0
  %317 = vmatprep.subr.mxu0 0.0
  %318 = vmatpush1.msra.mxu0 0.0
  %319 = vmatprep.mubr.f32.mxu0 0.0
  %320 = vmatmul.mubr.f32.gmra.mrb[0].mxu0 %v250
  %v321 = vpop.f32.mrb[0].mxu0
  %v322 = vadd.f32 %v246, %v321
  %v323 = vpop.f32.mrb[0].mxu0
  %324 = vmatprep.mubr.f32.mxu0 0.0
  %325 = vmatmul.mubr.f32.gmra.mrb[0].mxu0 %v253
  %v326 = vpop.f32.mrb[0].mxu0
  %v327 = vadd.f32 %v246, %v326
  %v328 = vpop.f32.mrb[0].mxu0
  %329 = vdwg.mxu0
  %v330 = vmax.f32 %v322, 0.0
  %v331 = vmax.f32 %v327, 0.0
  %v332 = vld [vmem:[%s7] sm:$0x1]
  %v334 = vlaneseq
  %v335 = vshrl.u32 %v334, 7
  %v336 = vsub.s32 0, %v335
  %v337 = vrot.slane %v332, %v336
  %v339 = vmul.f32 %v330, %v337
  %v340 = vmul.f32 %v331, %v337
  %vm341 = vcmask 64512
  %v342 = vsel %vm341, %v339, 0.0
  %343 = vadd.xlane.f32.xlu0 %v342
  %v344 = vpop.xlane.xlu0 %343
  %vm345 = vcmask 60416
  %v346 = vsel %vm345, %v340, 0.0
  %347 = vadd.xlane.f32.xlu0 %v346
  %v348 = vpop.xlane.xlu0 %347
  %v349 = vld [vmem:[#allocation2] sm:$0x1]
  %v351 = vlaneseq
  %v352 = vshrl.u32 %v351, 7
  %v353 = vsub.s32 0, %v352
  %v354 = vrot.slane %v349, %v353
  %v356 = vadd.f32 %v344, %v354
  %v357 = vadd.f32 %v348, %v354
  %vm358 = vcmask 7168
  %359 = vst.msk [vmem:[%s9] sm:$0xff] %vm358, %v356
  %vm360 = vcmask 3072
  %361 = vst.msk [vmem:[%s9 + $0x8] sm:$0xf] %vm360, %v357
  // Predicated region
  $region38: #{my_new_gcn_forward.17} parent=0 // pred_check
    _
  $region39: #{my_new_gcn_forward.17} parent=0 // pred_check_branch
    %363 = sbr.rel (0) target = $region41
  $region40: #{my_new_gcn_forward.17} parent=0 // pred_region
    _
  $region41: #{my_new_gcn_forward.17} parent=0 // pred_fallthru
    _
  // Predicated region
  $region42: #{my_new_gcn_forward.17} parent=0 // pred_check
    _
  $region43: #{my_new_gcn_forward.17} parent=0 // pred_check_branch
    %365 = sbr.rel (0) target = $region45
  $region44: #{my_new_gcn_forward.17} parent=0 // pred_region
    _
  $region45: #{my_new_gcn_forward.17} parent=0 // pred_fallthru
    _

</llo_original>
